<compile_context>
chip_gen: v7x
topology: tpu7x:2x2x1
jax: 0.10.0
libtpu: 0.0.40
codegen_flags: <defaults>
</compile_context>

<pallas_src>
import jax
import jax.numpy as jnp
from jax.experimental import pallas as pl
from jax.experimental.pallas import tpu as pltpu


# --------------------------------------------------------------------------- #
# Kernel
# --------------------------------------------------------------------------- #
def _qnet_kernel(x_ref, w1_ref, b1_ref, w2_ref, b2_ref, w3_ref, b3_ref, o_ref):
    # x / weights are bf16 in VMEM; every matmul accumulates in f32 on the MXU.
    x = x_ref[...]
    h1 = jnp.dot(x, w1_ref[...], preferred_element_type=jnp.float32) + b1_ref[...]
    h1 = jnp.maximum(h1, 0.0).astype(jnp.bfloat16)
    h2 = jnp.dot(h1, w2_ref[...], preferred_element_type=jnp.float32) + b2_ref[...]
    h2 = jnp.maximum(h2, 0.0).astype(jnp.bfloat16)
    o_ref[...] = jnp.dot(h2, w3_ref[...], preferred_element_type=jnp.float32) + b3_ref[...]


# --------------------------------------------------------------------------- #
# Wrapper
# --------------------------------------------------------------------------- #
def _round_up(n, m):
    return ((n + m - 1) // m) * m


def _pad_to(arr, shape):
    pads = [(0, t - s) for s, t in zip(arr.shape, shape)]
    return jnp.pad(arr, pads)


def qnetwork_forward(x, params, *, block_batch=128):
    """x: (B, obs_dim) float32 (any leading obs dims are flattened).

    params: dict of w1,b1,w2,b2,w3,b3 (f32).
    Returns (B, n_actions) float32 Q-values (bf16 operands, f32 accumulation).
    """
    if x.ndim > 2:  # MLP flattens the observation, mirror that here.
        x = x.reshape(x.shape[0], -1)
    B, obs_dim = x.shape
    hid = params["w1"].shape[1]
    n_actions = params["w3"].shape[1]

    # Lane-aligned (multiple-of-128) padded dims; zero padding is exact here.
    obs_p = _round_up(obs_dim, 128)
    hid_p = _round_up(hid, 128)        # 770 -> 896
    act_p = _round_up(n_actions, 128)  # lane-dense output stores

    # Batch: sublane-align, then tile by block_batch when the batch is large.
    B_p = _round_up(B, 8)
    if B_p > block_batch:
        B_p = _round_up(B_p, block_batch)
        tm = block_batch
    else:
        tm = B_p
    grid = (B_p // tm,)

    # Pad + cast once in the wrapper (weights -> bf16 halves HBM traffic).
    x_p = _pad_to(x, (B_p, obs_p)).astype(jnp.bfloat16)
    w1 = _pad_to(params["w1"], (obs_p, hid_p)).astype(jnp.bfloat16)
    w2 = _pad_to(params["w2"], (hid_p, hid_p)).astype(jnp.bfloat16)
    w3 = _pad_to(params["w3"], (hid_p, act_p)).astype(jnp.bfloat16)
    b1 = _pad_to(params["b1"], (1, hid_p)).astype(jnp.float32)
    b2 = _pad_to(params["b2"], (1, hid_p)).astype(jnp.float32)
    b3 = _pad_to(params["b3"], (1, act_p)).astype(jnp.float32)

    def resident(arr):
        # Whole-array block; same block index every grid step -> DMA'd once,
        # stays VMEM-resident across batch tiles.
        nd = arr.ndim
        return pl.BlockSpec(arr.shape, lambda i, _nd=nd: (0,) * _nd)

    out = pl.pallas_call(
        _qnet_kernel,
        out_shape=jax.ShapeDtypeStruct((B_p, act_p), jnp.float32),
        grid=grid,
        in_specs=[
            pl.BlockSpec((tm, obs_p), lambda i: (i, 0)),   # x: tiled on batch
            resident(w1), resident(b1),
            resident(w2), resident(b2),
            resident(w3), resident(b3),
        ],
        out_specs=pl.BlockSpec((tm, act_p), lambda i: (i, 0)),
        compiler_params=pltpu.CompilerParams(
            dimension_semantics=("parallel",),   # v7x: split batch across 2 TCs
        ),
    )(x_p, w1, b1, w2, b2, w3, b3)

    # Strip batch / action padding.
    return out[:B, :n_actions]


# --------------------------------------------------------------------------- #
# Synthetic params + reference
# --------------------------------------------------------------------------- #
def init_params(key, obs_dim, n_actions, hidden=(770, 770)):
    """Deterministic synthetic parameters (Kaiming-uniform-ish scale)."""
    dims = (obs_dim,) + tuple(hidden) + (n_actions,)
    params = {}
    keys = jax.random.split(key, len(dims) - 1)
    for i, (fan_in, fan_out) in enumerate(zip(dims[:-1], dims[1:]), start=1):
        kw, kb = jax.random.split(keys[i - 1])
        bound = 1.0 / jnp.sqrt(fan_in)
        params[f"w{i}"] = jax.random.uniform(
            kw, (fan_in, fan_out), jnp.float32, -bound, bound)
        params[f"b{i}"] = jax.random.uniform(
            kb, (1, fan_out), jnp.float32, -bound, bound)
    return params


def _reference_forward(x, p):
    # Same mixed precision as the kernel: bf16 operands, f32 accumulate.
    bf = jnp.bfloat16
    h1 = jnp.dot(x.astype(bf), p["w1"].astype(bf),
                 preferred_element_type=jnp.float32) + p["b1"]
    h1 = jnp.maximum(h1, 0.0)
    h2 = jnp.dot(h1.astype(bf), p["w2"].astype(bf),
                 preferred_element_type=jnp.float32) + p["b2"]
    h2 = jnp.maximum(h2, 0.0)
    return jnp.dot(h2.astype(bf), p["w3"].astype(bf),
                   preferred_element_type=jnp.float32) + p["b3"]


if __name__ == "__main__":
    key = jax.random.PRNGKey(0)
    k_param, k_x = jax.random.split(key)

    batch, obs_dim, n_actions = 8, 8, 4   # small synthetic env shapes
    params = init_params(k_param, obs_dim, n_actions)
    x = jax.random.normal(k_x, (batch, obs_dim), jnp.float32)

    out = qnetwork_forward(x, params)
    out = jax.block_until_ready(out)

    ref = _reference_forward(x, params)
    assert out.shape == (batch, n_actions)
    assert jnp.allclose(out, ref, atol=1e-2, rtol=1e-2), \
        f"max abs err {jnp.max(jnp.abs(out - ref))}"

    print("KERNEL_OK")
</pallas_src>

<mosaic_0001>
module attributes {stable_mosaic.version = 11 : i64} {
  func.func @_qnet_kernel(%arg0: i32, %arg1: memref<8x128xbf16, #tpu.memory_space<vmem>>, %arg2: memref<128x896xbf16, #tpu.memory_space<vmem>>, %arg3: memref<1x896xf32, #tpu.memory_space<vmem>>, %arg4: memref<896x896xbf16, #tpu.memory_space<vmem>>, %arg5: memref<1x896xf32, #tpu.memory_space<vmem>>, %arg6: memref<896x128xbf16, #tpu.memory_space<vmem>>, %arg7: memref<1x128xf32, #tpu.memory_space<vmem>>, %arg8: memref<8x128xf32, #tpu.memory_space<vmem>>) attributes {dimension_semantics = [#tpu.dimension_semantics<parallel>], iteration_bounds = array<i64: 1>, scalar_prefetch = 0 : i64, scratch_operands = 0 : i64, tpu.core_type = #tpu.core_type<tc>, window_params = [{transform_indices = @transform_0, window_bounds = array<i64: 8, 128>}, {pipeline_mode = #tpu.pipeline_mode<synchronous>, transform_indices = @transform_1, window_bounds = array<i64: 128, 896>}, {pipeline_mode = #tpu.pipeline_mode<synchronous>, transform_indices = @transform_2, window_bounds = array<i64: 1, 896>}, {pipeline_mode = #tpu.pipeline_mode<synchronous>, transform_indices = @transform_3, window_bounds = array<i64: 896, 896>}, {pipeline_mode = #tpu.pipeline_mode<synchronous>, transform_indices = @transform_4, window_bounds = array<i64: 1, 896>}, {pipeline_mode = #tpu.pipeline_mode<synchronous>, transform_indices = @transform_5, window_bounds = array<i64: 896, 128>}, {pipeline_mode = #tpu.pipeline_mode<synchronous>, transform_indices = @transform_6, window_bounds = array<i64: 1, 128>}, {transform_indices = @transform_7, window_bounds = array<i64: 8, 128>}]} {
    %c0 = arith.constant 0 : index
    %c0_0 = arith.constant 0 : index
    %0 = vector.load %arg1[%c0, %c0_0] : memref<8x128xbf16, #tpu.memory_space<vmem>>, vector<8x128xbf16>
    %c0_1 = arith.constant 0 : index
    %c0_2 = arith.constant 0 : index
    %1 = vector.load %arg2[%c0_1, %c0_2] : memref<128x896xbf16, #tpu.memory_space<vmem>>, vector<128x896xbf16>
    %cst = arith.constant dense<0.000000e+00> : vector<8x896xf32>
    %2 = tpu.matmul %0, %1, %cst {dimension_numbers = #tpu.dot_dimension_numbers<[1], [0], [0], [1], [0, 0, 1, 1], [], []>} : vector<8x128xbf16>, vector<128x896xbf16>, vector<8x896xf32> -> vector<8x896xf32>
    %c0_3 = arith.constant 0 : index
    %c0_4 = arith.constant 0 : index
    %3 = vector.load %arg3[%c0_3, %c0_4] : memref<1x896xf32, #tpu.memory_space<vmem>>, vector<1x896xf32>
    %4 = vector.broadcast %3 : vector<1x896xf32> to vector<8x896xf32>
    %5 = arith.addf %2, %4 : vector<8x896xf32>
    %cst_5 = arith.constant 0.000000e+00 : f32
    %6 = vector.broadcast %cst_5 : f32 to vector<8x896xf32>
    %7 = arith.maximumf %5, %6 : vector<8x896xf32>
    %8 = arith.truncf %7 : vector<8x896xf32> to vector<8x896xbf16>
    %c0_6 = arith.constant 0 : index
    %c0_7 = arith.constant 0 : index
    %9 = vector.load %arg4[%c0_6, %c0_7] : memref<896x896xbf16, #tpu.memory_space<vmem>>, vector<896x896xbf16>
    %cst_8 = arith.constant dense<0.000000e+00> : vector<8x896xf32>
    %10 = tpu.matmul %8, %9, %cst_8 {dimension_numbers = #tpu.dot_dimension_numbers<[1], [0], [0], [1], [0, 0, 1, 1], [], []>} : vector<8x896xbf16>, vector<896x896xbf16>, vector<8x896xf32> -> vector<8x896xf32>
    %c0_9 = arith.constant 0 : index
    %c0_10 = arith.constant 0 : index
    %11 = vector.load %arg5[%c0_9, %c0_10] : memref<1x896xf32, #tpu.memory_space<vmem>>, vector<1x896xf32>
    %12 = vector.broadcast %11 : vector<1x896xf32> to vector<8x896xf32>
    %13 = arith.addf %10, %12 : vector<8x896xf32>
    %cst_11 = arith.constant 0.000000e+00 : f32
    %14 = vector.broadcast %cst_11 : f32 to vector<8x896xf32>
    %15 = arith.maximumf %13, %14 : vector<8x896xf32>
    %16 = arith.truncf %15 : vector<8x896xf32> to vector<8x896xbf16>
    %c0_12 = arith.constant 0 : index
    %c0_13 = arith.constant 0 : index
    %17 = vector.load %arg6[%c0_12, %c0_13] : memref<896x128xbf16, #tpu.memory_space<vmem>>, vector<896x128xbf16>
    %cst_14 = arith.constant dense<0.000000e+00> : vector<8x128xf32>
    %18 = tpu.matmul %16, %17, %cst_14 {dimension_numbers = #tpu.dot_dimension_numbers<[1], [0], [0], [1], [0, 0, 1, 1], [], []>} : vector<8x896xbf16>, vector<896x128xbf16>, vector<8x128xf32> -> vector<8x128xf32>
    %c0_15 = arith.constant 0 : index
    %c0_16 = arith.constant 0 : index
    %19 = vector.load %arg7[%c0_15, %c0_16] : memref<1x128xf32, #tpu.memory_space<vmem>>, vector<1x128xf32>
    %20 = vector.broadcast %19 : vector<1x128xf32> to vector<8x128xf32>
    %21 = arith.addf %18, %20 : vector<8x128xf32>
    %c0_17 = arith.constant 0 : index
    %c0_18 = arith.constant 0 : index
    %22 = vector.load %arg8[%c0_17, %c0_18] : memref<8x128xf32, #tpu.memory_space<vmem>>, vector<8x128xf32>
    tpu.vector_store %arg8[%c0_17, %c0_18], %21 {strides = array<i32>} : memref<8x128xf32, #tpu.memory_space<vmem>>, vector<8x128xf32>,
    return
  }
  func.func @transform_0(%arg0: i32) -> (i32, i32) {
    %c0_i32 = arith.constant 0 : i32
    %c0_i32_0 = arith.constant 0 : i32
    return %arg0, %c0_i32 : i32, i32
  }
  func.func @transform_1(%arg0: i32) -> (i32, i32) {
    %c0_i32 = arith.constant 0 : i32
    %c0_i32_0 = arith.constant 0 : i32
    %c0_i32_1 = arith.constant 0 : i32
    return %c0_i32, %c0_i32_0 : i32, i32
  }
  func.func @transform_2(%arg0: i32) -> (i32, i32) {
    %c0_i32 = arith.constant 0 : i32
    %c0_i32_0 = arith.constant 0 : i32
    %c0_i32_1 = arith.constant 0 : i32
    return %c0_i32, %c0_i32_0 : i32, i32
  }
  func.func @transform_3(%arg0: i32) -> (i32, i32) {
    %c0_i32 = arith.constant 0 : i32
    %c0_i32_0 = arith.constant 0 : i32
    %c0_i32_1 = arith.constant 0 : i32
    return %c0_i32, %c0_i32_0 : i32, i32
  }
  func.func @transform_4(%arg0: i32) -> (i32, i32) {
    %c0_i32 = arith.constant 0 : i32
    %c0_i32_0 = arith.constant 0 : i32
    %c0_i32_1 = arith.constant 0 : i32
    return %c0_i32, %c0_i32_0 : i32, i32
  }
  func.func @transform_5(%arg0: i32) -> (i32, i32) {
    %c0_i32 = arith.constant 0 : i32
    %c0_i32_0 = arith.constant 0 : i32
    %c0_i32_1 = arith.constant 0 : i32
    return %c0_i32, %c0_i32_0 : i32, i32
  }
  func.func @transform_6(%arg0: i32) -> (i32, i32) {
    %c0_i32 = arith.constant 0 : i32
    %c0_i32_0 = arith.constant 0 : i32
    %c0_i32_1 = arith.constant 0 : i32
    return %c0_i32, %c0_i32_0 : i32, i32
  }
  func.func @transform_7(%arg0: i32) -> (i32, i32) {
    %c0_i32 = arith.constant 0 : i32
    %c0_i32_0 = arith.constant 0 : i32
    return %arg0, %c0_i32 : i32, i32
  }
}

</mosaic_0001>

<llo_original>
// kernel: tpu_custom_call.1
$region0: #{tpu_custom_call.1}
  #allocation0 [shape = 'u32[]', space=smem, size = 0x4, offset = 0x4, fixed_abs, tag = 'smem constant byte address 0x4 - core index']
  #allocation1 [shape = 'u32[144,128]{1,0:T(1,128)}', space=vmem, size = 0x12000, scoped, tag = 'internal scratch']
  %s0 = inlined_call_operand.hbm [shape: bf16[8,128], index: 0, kind: input, shape index: {}]
  %s1 = inlined_call_operand.hbm [shape: bf16[128,896], index: 1, kind: input, shape index: {}]
  %s2 = inlined_call_operand.hbm [shape: f32[1,896], index: 2, kind: input, shape index: {}]
  %s3 = inlined_call_operand.hbm [shape: bf16[896,896], index: 3, kind: input, shape index: {}]
  %s4 = inlined_call_operand.hbm [shape: f32[1,896], index: 4, kind: input, shape index: {}]
  %s5 = inlined_call_operand.hbm [shape: bf16[896,128], index: 5, kind: input, shape index: {}]
  %s6 = inlined_call_operand.hbm [shape: f32[1,128], index: 6, kind: input, shape index: {}]
  %s7 = inlined_call_operand.hbm [shape: f32[8,128], index: 7, kind: output, shape index: {}]
  %s8 = sld [smem:[#allocation0]]
  $region66: #{tpu_custom_call.1} parent=0
    _
  %s10 = ssub.s32 1, %s8
  %s11 = scalar_select 0, %s10, %s8
  $region1: #{tpu_custom_call.1} parent=0
    #allocation2 [shape = 'u8[2048]{0}', space=vmem, size = 0x800, scoped, tag = 'input window, operand 0, single buffered']
    #allocation3 [shape = 's32[1]{0}', space=sflag, size = 0x4, scoped, tag = 'scoped memory for tpu_custom_call.1']
    #allocation4 [shape = 's32[1]{0}', space=sflag, size = 0x4, scoped, tag = 'scoped memory for tpu_custom_call.1']
    #allocation5 [shape = 'u8[229376]{0}', space=vmem, size = 0x38000, scoped, tag = 'input window, operand 1, single buffered']
    #allocation6 [shape = 's32[1]{0}', space=sflag, size = 0x4, scoped, tag = 'scoped memory for tpu_custom_call.1']
    #allocation7 [shape = 'u8[3584]{0}', space=vmem, size = 0x1000, scoped, tag = 'input window, operand 2, single buffered']
    #allocation8 [shape = 'u8[1605632]{0}', space=vmem, size = 0x188000, scoped, tag = 'input window, operand 3, single buffered']
    #allocation9 [shape = 's32[1]{0}', space=sflag, size = 0x4, scoped, tag = 'scoped memory for tpu_custom_call.1']
    #allocation10 [shape = 'u8[3584]{0}', space=vmem, size = 0x1000, scoped, tag = 'input window, operand 4, single buffered']
    #allocation11 [shape = 'u8[229376]{0}', space=vmem, size = 0x38000, scoped, tag = 'input window, operand 5, single buffered']
    #allocation12 [shape = 's32[1]{0}', space=sflag, size = 0x4, scoped, tag = 'scoped memory for tpu_custom_call.1']
    #allocation13 [shape = 'u8[512]{0}', space=vmem, size = 0x400, scoped, tag = 'input window, operand 6, single buffered']
    #allocation14 [shape = 'u8[4096]{0}', space=vmem, size = 0x1000, scoped, tag = 'output window, operand 0, single buffered']
    %12 = vsyncpa [#allocation3], 0
    %13 = vsyncpa [#allocation6], 0
    %14 = vsyncpa [#allocation9], 0
    %15 = vsyncpa [#allocation12], 0
    %16 = vsyncpa [#allocation4], 0
    // Predicated region
    $region2: #{tpu_custom_call.1} parent=1 // pred_check
      _
    $region3: #{tpu_custom_call.1} parent=1 // pred_check_branch
      %18 = sbr.rel (0) target = $region5
    $region4: #{tpu_custom_call.1} parent=1 // pred_region
      %s20 = ssub.s32 64, 64
      %21 = vsyncadd [#allocation3], %s20
      %s23 = sshll.u32 [#allocation2], 4
      %s24 = int_to_ptr.vmem [resolvable:$true] %s23
      %26 = dma.hbm_to_vmem [thread:$0]  %s0, 64, %s24, [#allocation3]
    $region5: #{tpu_custom_call.1} parent=1 // pred_fallthru
      _
    // Predicated region
    $region6: #{tpu_custom_call.1} parent=1 // pred_check
      _
    $region7: #{tpu_custom_call.1} parent=1 // pred_check_branch
      %28 = sbr.rel (0) target = $region9
    $region8: #{tpu_custom_call.1} parent=1 // pred_region
      %s30 = ssub.s32 7168, 7168
      %31 = vsyncadd [#allocation6], %s30
      %s32 = sshll.u32 [#allocation5], 4
      %s33 = int_to_ptr.vmem [resolvable:$true] %s32
      %38 = dma.hbm_to_vmem [thread:$0]  %s1, 7168, %s33, [#allocation6], 448, 448, 28
    $region9: #{tpu_custom_call.1} parent=1 // pred_fallthru
      _
    // Predicated region
    $region10: #{tpu_custom_call.1} parent=1 // pred_check
      _
    $region11: #{tpu_custom_call.1} parent=1 // pred_check_branch
      %40 = sbr.rel (0) target = $region13
    $region12: #{tpu_custom_call.1} parent=1 // pred_region
      %s42 = ssub.s32 112, 112
      %43 = vsyncadd [#allocation6], %s42
      %s45 = sshll.u32 [#allocation7], 4
      %s46 = int_to_ptr.vmem [resolvable:$true] %s45
      %48 = dma.hbm_to_vmem [thread:$0]  %s2, 112, %s46, [#allocation6]
    $region13: #{tpu_custom_call.1} parent=1 // pred_fallthru
      _
    // Predicated region
    $region14: #{tpu_custom_call.1} parent=1 // pred_check
      _
    $region15: #{tpu_custom_call.1} parent=1 // pred_check_branch
      %50 = sbr.rel (0) target = $region17
    $region16: #{tpu_custom_call.1} parent=1 // pred_region
      %s52 = ssub.s32 50176, 50176
      %53 = vsyncadd [#allocation9], %s52
      %s54 = sshll.u32 [#allocation8], 4
      %s55 = int_to_ptr.vmem [resolvable:$true] %s54
      %60 = dma.hbm_to_vmem [thread:$0]  %s3, 50176, %s55, [#allocation9], 448, 448, 28
    $region17: #{tpu_custom_call.1} parent=1 // pred_fallthru
      _
    // Predicated region
    $region18: #{tpu_custom_call.1} parent=1 // pred_check
      _
    $region19: #{tpu_custom_call.1} parent=1 // pred_check_branch
      %62 = sbr.rel (0) target = $region21
    $region20: #{tpu_custom_call.1} parent=1 // pred_region
      %s64 = ssub.s32 112, 112
      %65 = vsyncadd [#allocation9], %s64
      %s67 = sshll.u32 [#allocation10], 4
      %s68 = int_to_ptr.vmem [resolvable:$true] %s67
      %70 = dma.hbm_to_vmem [thread:$0]  %s4, 112, %s68, [#allocation9]
    $region21: #{tpu_custom_call.1} parent=1 // pred_fallthru
      _
    // Predicated region
    $region22: #{tpu_custom_call.1} parent=1 // pred_check
      _
    $region23: #{tpu_custom_call.1} parent=1 // pred_check_branch
      %72 = sbr.rel (0) target = $region25
    $region24: #{tpu_custom_call.1} parent=1 // pred_region
      %s74 = ssub.s32 7168, 7168
      %75 = vsyncadd [#allocation12], %s74
      %s76 = sshll.u32 [#allocation11], 4
      %s77 = int_to_ptr.vmem [resolvable:$true] %s76
      %82 = dma.hbm_to_vmem [thread:$0]  %s5, 7168, %s77, [#allocation12], 64, 64, 4
    $region25: #{tpu_custom_call.1} parent=1 // pred_fallthru
      _
    // Predicated region
    $region26: #{tpu_custom_call.1} parent=1 // pred_check
      _
    $region27: #{tpu_custom_call.1} parent=1 // pred_check_branch
      %84 = sbr.rel (0) target = $region29
    $region28: #{tpu_custom_call.1} parent=1 // pred_region
      %s86 = ssub.s32 16, 16
      %87 = vsyncadd [#allocation12], %s86
      %s89 = sshll.u32 [#allocation13], 4
      %s90 = int_to_ptr.vmem [resolvable:$true] %s89
      %92 = dma.hbm_to_vmem [thread:$0]  %s6, 16, %s90, [#allocation12]
    $region29: #{tpu_custom_call.1} parent=1 // pred_fallthru
      _
    // Predicated region
    $region30: #{tpu_custom_call.1} parent=1 // pred_check
      _
    $region31: #{tpu_custom_call.1} parent=1 // pred_check_branch
      %94 = sbr.rel (0) target = $region33
    $region32: #{tpu_custom_call.1} parent=1 // pred_region
      %95 = dma.done [#allocation3], 64
    $region33: #{tpu_custom_call.1} parent=1 // pred_fallthru
      _
    // Predicated region
    $region34: #{tpu_custom_call.1} parent=1 // pred_check
      _
    $region35: #{tpu_custom_call.1} parent=1 // pred_check_branch
      %97 = sbr.rel (0) target = $region37
    $region36: #{tpu_custom_call.1} parent=1 // pred_region
      %98 = dma.done [#allocation6], 7168
    $region37: #{tpu_custom_call.1} parent=1 // pred_fallthru
      _
    // Predicated region
    $region38: #{tpu_custom_call.1} parent=1 // pred_check
      _
    $region39: #{tpu_custom_call.1} parent=1 // pred_check_branch
      %100 = sbr.rel (0) target = $region41
    $region40: #{tpu_custom_call.1} parent=1 // pred_region
      %101 = dma.done [#allocation6], 112
    $region41: #{tpu_custom_call.1} parent=1 // pred_fallthru
      _
    // Predicated region
    $region42: #{tpu_custom_call.1} parent=1 // pred_check
      _
    $region43: #{tpu_custom_call.1} parent=1 // pred_check_branch
      %103 = sbr.rel (0) target = $region45
    $region44: #{tpu_custom_call.1} parent=1 // pred_region
      %104 = dma.done [#allocation9], 50176
    $region45: #{tpu_custom_call.1} parent=1 // pred_fallthru
      _
    // Predicated region
    $region46: #{tpu_custom_call.1} parent=1 // pred_check
      _
    $region47: #{tpu_custom_call.1} parent=1 // pred_check_branch
      %106 = sbr.rel (0) target = $region49
    $region48: #{tpu_custom_call.1} parent=1 // pred_region
      %107 = dma.done [#allocation9], 112
    $region49: #{tpu_custom_call.1} parent=1 // pred_fallthru
      _
    // Predicated region
    $region50: #{tpu_custom_call.1} parent=1 // pred_check
      _
    $region51: #{tpu_custom_call.1} parent=1 // pred_check_branch
      %109 = sbr.rel (0) target = $region53
    $region52: #{tpu_custom_call.1} parent=1 // pred_region
      %110 = dma.done [#allocation12], 7168
    $region53: #{tpu_custom_call.1} parent=1 // pred_fallthru
      _
    // Predicated region
    $region54: #{tpu_custom_call.1} parent=1 // pred_check
      _
    $region55: #{tpu_custom_call.1} parent=1 // pred_check_branch
      %112 = sbr.rel (0) target = $region57
    $region56: #{tpu_custom_call.1} parent=1 // pred_region
      %113 = dma.done [#allocation12], 16
    $region57: #{tpu_custom_call.1} parent=1 // pred_fallthru
      _
    %v115 = vld [vmem:[#allocation2] sm:$0xf]
    %v116 = vld [vmem:[#allocation5] sm:$0xff]
    %v117 = vld [vmem:[#allocation5 + $0x8] sm:$0xff]
    %v118 = vld [vmem:[#allocation5 + $0x10] sm:$0xff]
    %v119 = vld [vmem:[#allocation5 + $0x18] sm:$0xf]
    %v120 = vld [vmem:[#allocation5 + $0x1c] sm:$0xff]
    %v121 = vld [vmem:[#allocation5 + $0x24] sm:$0xff]
    %v122 = vld [vmem:[#allocation5 + $0x2c] sm:$0xff]
    %v123 = vld [vmem:[#allocation5 + $0x34] sm:$0xf]
    %v124 = vld [vmem:[#allocation5 + $0x38] sm:$0xff]
    %v125 = vld [vmem:[#allocation5 + $0x40] sm:$0xff]
    %v126 = vld [vmem:[#allocation5 + $0x48] sm:$0xff]
    %v127 = vld [vmem:[#allocation5 + $0x50] sm:$0xf]
    %v128 = vld [vmem:[#allocation5 + $0x54] sm:$0xff]
    %v129 = vld [vmem:[#allocation5 + $0x5c] sm:$0xff]
    %v130 = vld [vmem:[#allocation5 + $0x64] sm:$0xff]
    %v131 = vld [vmem:[#allocation5 + $0x6c] sm:$0xf]
    %v132 = vld [vmem:[#allocation5 + $0x70] sm:$0xff]
    %v133 = vld [vmem:[#allocation5 + $0x78] sm:$0xff]
    %v134 = vld [vmem:[#allocation5 + $0x80] sm:$0xff]
    %v135 = vld [vmem:[#allocation5 + $0x88] sm:$0xf]
    %v136 = vld [vmem:[#allocation5 + $0x8c] sm:$0xff]
    %v137 = vld [vmem:[#allocation5 + $0x94] sm:$0xff]
    %v138 = vld [vmem:[#allocation5 + $0x9c] sm:$0xff]
    %v139 = vld [vmem:[#allocation5 + $0xa4] sm:$0xf]
    %v140 = vld [vmem:[#allocation5 + $0xa8] sm:$0xff]
    %v141 = vld [vmem:[#allocation5 + $0xb0] sm:$0xff]
    %v142 = vld [vmem:[#allocation5 + $0xb8] sm:$0xff]
    %v143 = vld [vmem:[#allocation5 + $0xc0] sm:$0xf]
    %v144 = vld [vmem:[#allocation5 + $0xc4] sm:$0xff]
    %v145 = vld [vmem:[#allocation5 + $0xcc] sm:$0xff]
    %v146 = vld [vmem:[#allocation5 + $0xd4] sm:$0xff]
    %v147 = vld [vmem:[#allocation5 + $0xdc] sm:$0xf]
    %v148 = vld [vmem:[#allocation5 + $0xe0] sm:$0xff]
    %v149 = vld [vmem:[#allocation5 + $0xe8] sm:$0xff]
    %v150 = vld [vmem:[#allocation5 + $0xf0] sm:$0xff]
    %v151 = vld [vmem:[#allocation5 + $0xf8] sm:$0xf]
    %v152 = vld [vmem:[#allocation5 + $0xfc] sm:$0xff]
    %v153 = vld [vmem:[#allocation5 + $0x104] sm:$0xff]
    %v154 = vld [vmem:[#allocation5 + $0x10c] sm:$0xff]
    %v155 = vld [vmem:[#allocation5 + $0x114] sm:$0xf]
    %v156 = vld [vmem:[#allocation5 + $0x118] sm:$0xff]
    %v157 = vld [vmem:[#allocation5 + $0x120] sm:$0xff]
    %v158 = vld [vmem:[#allocation5 + $0x128] sm:$0xff]
    %v159 = vld [vmem:[#allocation5 + $0x130] sm:$0xf]
    %v160 = vld [vmem:[#allocation5 + $0x134] sm:$0xff]
    %v161 = vld [vmem:[#allocation5 + $0x13c] sm:$0xff]
    %v162 = vld [vmem:[#allocation5 + $0x144] sm:$0xff]
    %v163 = vld [vmem:[#allocation5 + $0x14c] sm:$0xf]
    %v164 = vld [vmem:[#allocation5 + $0x150] sm:$0xff]
    %v165 = vld [vmem:[#allocation5 + $0x158] sm:$0xff]
    %v166 = vld [vmem:[#allocation5 + $0x160] sm:$0xff]
    %v167 = vld [vmem:[#allocation5 + $0x168] sm:$0xf]
    %v168 = vld [vmem:[#allocation5 + $0x16c] sm:$0xff]
    %v169 = vld [vmem:[#allocation5 + $0x174] sm:$0xff]
    %v170 = vld [vmem:[#allocation5 + $0x17c] sm:$0xff]
    %v171 = vld [vmem:[#allocation5 + $0x184] sm:$0xf]
    %v172 = vld [vmem:[#allocation5 + $0x188] sm:$0xff]
    %v173 = vld [vmem:[#allocation5 + $0x190] sm:$0xff]
    %v174 = vld [vmem:[#allocation5 + $0x198] sm:$0xff]
    %v175 = vld [vmem:[#allocation5 + $0x1a0] sm:$0xf]
    %v176 = vld [vmem:[#allocation5 + $0x1a4] sm:$0xff]
    %v177 = vld [vmem:[#allocation5 + $0x1ac] sm:$0xff]
    %v178 = vld [vmem:[#allocation5 + $0x1b4] sm:$0xff]
    %v179 = vld [vmem:[#allocation5 + $0x1bc] sm:$0xf]
    %v180 = vld [vmem:[#allocation7] sm:$0xff]
    %v182 = vlaneseq
    %v183 = vshrl.u32 %v182, 7
    %v184 = vsub.s32 0, %v183
    %v185 = vrot.slane %v180, %v184
    %v186 = vlaneseq
    %v187 = vshrl.u32 %v186, 7
    %v188 = vsub.s32 1, %v187
    %v189 = vrot.slane %v180, %v188
    %v190 = vlaneseq
    %v191 = vshrl.u32 %v190, 7
    %v192 = vsub.s32 2, %v191
    %v193 = vrot.slane %v180, %v192
    %v194 = vlaneseq
    %v195 = vshrl.u32 %v194, 7
    %v196 = vsub.s32 3, %v195
    %v197 = vrot.slane %v180, %v196
    %v198 = vlaneseq
    %v199 = vshrl.u32 %v198, 7
    %v200 = vsub.s32 4, %v199
    %v201 = vrot.slane %v180, %v200
    %v202 = vlaneseq
    %v203 = vshrl.u32 %v202, 7
    %v204 = vsub.s32 5, %v203
    %v205 = vrot.slane %v180, %v204
    %v206 = vlaneseq
    %v207 = vshrl.u32 %v206, 7
    %v208 = vsub.s32 6, %v207
    %v209 = vrot.slane %v180, %v208
    %v281 = vunpack.c.l.b16 %v116
    %v282 = vunpack.c.h.b16 %v116
    %v283 = vunpack.c.l.b16 %v117
    %v284 = vunpack.c.h.b16 %v117
    %v285 = vunpack.c.l.b16 %v118
    %v286 = vunpack.c.h.b16 %v118
    %v287 = vunpack.c.l.b16 %v119
    %v288 = vunpack.c.l.b16 %v120
    %v289 = vunpack.c.h.b16 %v120
    %v290 = vunpack.c.l.b16 %v121
    %v291 = vunpack.c.h.b16 %v121
    %v292 = vunpack.c.l.b16 %v122
    %v293 = vunpack.c.h.b16 %v122
    %v294 = vunpack.c.l.b16 %v123
    %v295 = vunpack.c.l.b16 %v124
    %v296 = vunpack.c.h.b16 %v124
    %v297 = vunpack.c.l.b16 %v125
    %v298 = vunpack.c.h.b16 %v125
    %v299 = vunpack.c.l.b16 %v126
    %v300 = vunpack.c.h.b16 %v126
    %v301 = vunpack.c.l.b16 %v127
    %v302 = vunpack.c.l.b16 %v128
    %v303 = vunpack.c.h.b16 %v128
    %v304 = vunpack.c.l.b16 %v129
    %v305 = vunpack.c.h.b16 %v129
    %v306 = vunpack.c.l.b16 %v130
    %v307 = vunpack.c.h.b16 %v130
    %v308 = vunpack.c.l.b16 %v131
    %v309 = vunpack.c.l.b16 %v132
    %v310 = vunpack.c.h.b16 %v132
    %v311 = vunpack.c.l.b16 %v133
    %v312 = vunpack.c.h.b16 %v133
    %v313 = vunpack.c.l.b16 %v134
    %v314 = vunpack.c.h.b16 %v134
    %v315 = vunpack.c.l.b16 %v135
    %v316 = vunpack.c.l.b16 %v136
    %v317 = vunpack.c.h.b16 %v136
    %v318 = vunpack.c.l.b16 %v137
    %v319 = vunpack.c.h.b16 %v137
    %v320 = vunpack.c.l.b16 %v138
    %v321 = vunpack.c.h.b16 %v138
    %v322 = vunpack.c.l.b16 %v139
    %v323 = vunpack.c.l.b16 %v140
    %v324 = vunpack.c.h.b16 %v140
    %v325 = vunpack.c.l.b16 %v141
    %v326 = vunpack.c.h.b16 %v141
    %v327 = vunpack.c.l.b16 %v142
    %v328 = vunpack.c.h.b16 %v142
    %v329 = vunpack.c.l.b16 %v143
    %v330 = vunpack.c.l.b16 %v144
    %v331 = vunpack.c.h.b16 %v144
    %v332 = vunpack.c.l.b16 %v145
    %v333 = vunpack.c.h.b16 %v145
    %v334 = vunpack.c.l.b16 %v146
    %v335 = vunpack.c.h.b16 %v146
    %v336 = vunpack.c.l.b16 %v147
    %v337 = vunpack.c.l.b16 %v148
    %v338 = vunpack.c.h.b16 %v148
    %v339 = vunpack.c.l.b16 %v149
    %v340 = vunpack.c.h.b16 %v149
    %v341 = vunpack.c.l.b16 %v150
    %v342 = vunpack.c.h.b16 %v150
    %v343 = vunpack.c.l.b16 %v151
    %v344 = vunpack.c.l.b16 %v152
    %v345 = vunpack.c.h.b16 %v152
    %v346 = vunpack.c.l.b16 %v153
    %v347 = vunpack.c.h.b16 %v153
    %v348 = vunpack.c.l.b16 %v154
    %v349 = vunpack.c.h.b16 %v154
    %v350 = vunpack.c.l.b16 %v155
    %v351 = vunpack.c.l.b16 %v156
    %v352 = vunpack.c.h.b16 %v156
    %v353 = vunpack.c.l.b16 %v157
    %v354 = vunpack.c.h.b16 %v157
    %v355 = vunpack.c.l.b16 %v158
    %v356 = vunpack.c.h.b16 %v158
    %v357 = vunpack.c.l.b16 %v159
    %v358 = vunpack.c.l.b16 %v160
    %v359 = vunpack.c.h.b16 %v160
    %v360 = vunpack.c.l.b16 %v161
    %v361 = vunpack.c.h.b16 %v161
    %v362 = vunpack.c.l.b16 %v162
    %v363 = vunpack.c.h.b16 %v162
    %v364 = vunpack.c.l.b16 %v163
    %v365 = vunpack.c.l.b16 %v164
    %v366 = vunpack.c.h.b16 %v164
    %v367 = vunpack.c.l.b16 %v165
    %v368 = vunpack.c.h.b16 %v165
    %v369 = vunpack.c.l.b16 %v166
    %v370 = vunpack.c.h.b16 %v166
    %v371 = vunpack.c.l.b16 %v167
    %v372 = vunpack.c.l.b16 %v168
    %v373 = vunpack.c.h.b16 %v168
    %v374 = vunpack.c.l.b16 %v169
    %v375 = vunpack.c.h.b16 %v169
    %v376 = vunpack.c.l.b16 %v170
    %v377 = vunpack.c.h.b16 %v170
    %v378 = vunpack.c.l.b16 %v171
    %v379 = vunpack.c.l.b16 %v172
    %v380 = vunpack.c.h.b16 %v172
    %v381 = vunpack.c.l.b16 %v173
    %v382 = vunpack.c.h.b16 %v173
    %v383 = vunpack.c.l.b16 %v174
    %v384 = vunpack.c.h.b16 %v174
    %v385 = vunpack.c.l.b16 %v175
    %v386 = vunpack.c.l.b16 %v176
    %v387 = vunpack.c.h.b16 %v176
    %v388 = vunpack.c.l.b16 %v177
    %v389 = vunpack.c.h.b16 %v177
    %v390 = vunpack.c.l.b16 %v178
    %v391 = vunpack.c.h.b16 %v178
    %v392 = vunpack.c.l.b16 %v179
    %v393 = vpack.c.b16 %v288, %v281
    %v394 = vpack.c.b16 %v289, %v282
    %v395 = vpack.c.b16 %v290, %v283
    %v396 = vpack.c.b16 %v291, %v284
    %v397 = vpack.c.b16 %v292, %v285
    %v398 = vpack.c.b16 %v293, %v286
    %v399 = vpack.c.b16 %v294, %v287
    %v400 = vpack.c.b16 %v302, %v295
    %v401 = vpack.c.b16 %v303, %v296
    %v402 = vpack.c.b16 %v304, %v297
    %v403 = vpack.c.b16 %v305, %v298
    %v404 = vpack.c.b16 %v306, %v299
    %v405 = vpack.c.b16 %v307, %v300
    %v406 = vpack.c.b16 %v308, %v301
    %v407 = vpack.c.b16 %v316, %v309
    %v408 = vpack.c.b16 %v317, %v310
    %v409 = vpack.c.b16 %v318, %v311
    %v410 = vpack.c.b16 %v319, %v312
    %v411 = vpack.c.b16 %v320, %v313
    %v412 = vpack.c.b16 %v321, %v314
    %v413 = vpack.c.b16 %v322, %v315
    %v414 = vpack.c.b16 %v330, %v323
    %v415 = vpack.c.b16 %v331, %v324
    %v416 = vpack.c.b16 %v332, %v325
    %v417 = vpack.c.b16 %v333, %v326
    %v418 = vpack.c.b16 %v334, %v327
    %v419 = vpack.c.b16 %v335, %v328
    %v420 = vpack.c.b16 %v336, %v329
    %v421 = vpack.c.b16 %v344, %v337
    %v422 = vpack.c.b16 %v345, %v338
    %v423 = vpack.c.b16 %v346, %v339
    %v424 = vpack.c.b16 %v347, %v340
    %v425 = vpack.c.b16 %v348, %v341
    %v426 = vpack.c.b16 %v349, %v342
    %v427 = vpack.c.b16 %v350, %v343
    %v428 = vpack.c.b16 %v358, %v351
    %v429 = vpack.c.b16 %v359, %v352
    %v430 = vpack.c.b16 %v360, %v353
    %v431 = vpack.c.b16 %v361, %v354
    %v432 = vpack.c.b16 %v362, %v355
    %v433 = vpack.c.b16 %v363, %v356
    %v434 = vpack.c.b16 %v364, %v357
    %v435 = vpack.c.b16 %v372, %v365
    %v436 = vpack.c.b16 %v373, %v366
    %v437 = vpack.c.b16 %v374, %v367
    %v438 = vpack.c.b16 %v375, %v368
    %v439 = vpack.c.b16 %v376, %v369
    %v440 = vpack.c.b16 %v377, %v370
    %v441 = vpack.c.b16 %v378, %v371
    %v442 = vpack.c.b16 %v386, %v379
    %v443 = vpack.c.b16 %v387, %v380
    %v444 = vpack.c.b16 %v388, %v381
    %v445 = vpack.c.b16 %v389, %v382
    %v446 = vpack.c.b16 %v390, %v383
    %v447 = vpack.c.b16 %v391, %v384
    %v448 = vpack.c.b16 %v392, %v385
    %505 = vmatprep.subr.bf16.mxu0 %v394
    %506 = vmatpush1.bf16.msra.mxu0 %v393
    %507 = vmatprep.subr.bf16.mxu0 %v401
    %508 = vmatpush1.bf16.msra.mxu0 %v400
    %509 = vmatprep.subr.bf16.mxu0 %v408
    %510 = vmatpush1.bf16.msra.mxu0 %v407
    %511 = vmatprep.subr.bf16.mxu0 %v415
    %512 = vmatpush1.bf16.msra.mxu0 %v414
    %513 = vmatprep.subr.bf16.mxu0 %v422
    %514 = vmatpush1.bf16.msra.mxu0 %v421
    %515 = vmatprep.subr.bf16.mxu0 %v429
    %516 = vmatpush1.bf16.msra.mxu0 %v428
    %517 = vmatprep.subr.bf16.mxu0 %v436
    %518 = vmatpush1.bf16.msra.mxu0 %v435
    %519 = vmatprep.subr.bf16.mxu0 %v443
    %520 = vmatpush1.bf16.msra.mxu0 %v442
    %521 = vmatprep.subr.bf16.mxu0 0
    %522 = vmatpush1.bf16.msra.mxu0 0
    %523 = vmatprep.subr.bf16.mxu0 0
    %524 = vmatpush1.bf16.msra.mxu0 0
    %525 = vmatprep.subr.bf16.mxu0 0
    %526 = vmatpush1.bf16.msra.mxu0 0
    %527 = vmatprep.subr.bf16.mxu0 0
    %528 = vmatpush1.bf16.msra.mxu0 0
    %529 = vmatprep.subr.bf16.mxu0 0
    %530 = vmatpush1.bf16.msra.mxu0 0
    %531 = vmatprep.subr.bf16.mxu0 0
    %532 = vmatpush1.bf16.msra.mxu0 0
    %533 = vmatprep.subr.bf16.mxu0 0
    %534 = vmatpush1.bf16.msra.mxu0 0
    %535 = vmatprep.subr.bf16.mxu0 0
    %536 = vmatpush1.bf16.msra.mxu0 0
    %537 = vmatprep.mubr.bf16.mxu0 0
    %538 = vmatmul.mubr.bf16.gmra.mrb[0].mxu0 %v115
    %v539 = vpop.f32.mrb[0].mxu0
    %v540 = vadd.f32 %v185, %v539
    %v541 = vpop.f32.mrb[0].mxu0
    %v542 = vadd.f32 %v189, %v541
    %v543 = vpop.f32.mrb[0].mxu0
    %v544 = vpop.f32.mrb[0].mxu0
    %545 = vdwg.mxu0
    %546 = vmatprep.subr.bf16.mxu0 %v396
    %547 = vmatpush1.bf16.msra.mxu0 %v395
    %548 = vmatprep.subr.bf16.mxu0 %v403
    %549 = vmatpush1.bf16.msra.mxu0 %v402
    %550 = vmatprep.subr.bf16.mxu0 %v410
    %551 = vmatpush1.bf16.msra.mxu0 %v409
    %552 = vmatprep.subr.bf16.mxu0 %v417
    %553 = vmatpush1.bf16.msra.mxu0 %v416
    %554 = vmatprep.subr.bf16.mxu0 %v424
    %555 = vmatpush1.bf16.msra.mxu0 %v423
    %556 = vmatprep.subr.bf16.mxu0 %v431
    %557 = vmatpush1.bf16.msra.mxu0 %v430
    %558 = vmatprep.subr.bf16.mxu0 %v438
    %559 = vmatpush1.bf16.msra.mxu0 %v437
    %560 = vmatprep.subr.bf16.mxu0 %v445
    %561 = vmatpush1.bf16.msra.mxu0 %v444
    %562 = vmatprep.subr.bf16.mxu0 0
    %563 = vmatpush1.bf16.msra.mxu0 0
    %564 = vmatprep.subr.bf16.mxu0 0
    %565 = vmatpush1.bf16.msra.mxu0 0
    %566 = vmatprep.subr.bf16.mxu0 0
    %567 = vmatpush1.bf16.msra.mxu0 0
    %568 = vmatprep.subr.bf16.mxu0 0
    %569 = vmatpush1.bf16.msra.mxu0 0
    %570 = vmatprep.subr.bf16.mxu0 0
    %571 = vmatpush1.bf16.msra.mxu0 0
    %572 = vmatprep.subr.bf16.mxu0 0
    %573 = vmatpush1.bf16.msra.mxu0 0
    %574 = vmatprep.subr.bf16.mxu0 0
    %575 = vmatpush1.bf16.msra.mxu0 0
    %576 = vmatprep.subr.bf16.mxu0 0
    %577 = vmatpush1.bf16.msra.mxu0 0
    %578 = vmatprep.mubr.bf16.mxu0 0
    %579 = vmatmul.mubr.bf16.gmra.mrb[0].mxu0 %v115
    %v580 = vpop.f32.mrb[0].mxu0
    %v581 = vadd.f32 %v193, %v580
    %v582 = vpop.f32.mrb[0].mxu0
    %v583 = vadd.f32 %v197, %v582
    %v584 = vpop.f32.mrb[0].mxu0
    %v585 = vpop.f32.mrb[0].mxu0
    %586 = vdwg.mxu0
    %587 = vmatprep.subr.bf16.mxu0 %v398
    %588 = vmatpush1.bf16.msra.mxu0 %v397
    %589 = vmatprep.subr.bf16.mxu0 %v405
    %590 = vmatpush1.bf16.msra.mxu0 %v404
    %591 = vmatprep.subr.bf16.mxu0 %v412
    %592 = vmatpush1.bf16.msra.mxu0 %v411
    %593 = vmatprep.subr.bf16.mxu0 %v419
    %594 = vmatpush1.bf16.msra.mxu0 %v418
    %595 = vmatprep.subr.bf16.mxu0 %v426
    %596 = vmatpush1.bf16.msra.mxu0 %v425
    %597 = vmatprep.subr.bf16.mxu0 %v433
    %598 = vmatpush1.bf16.msra.mxu0 %v432
    %599 = vmatprep.subr.bf16.mxu0 %v440
    %600 = vmatpush1.bf16.msra.mxu0 %v439
    %601 = vmatprep.subr.bf16.mxu0 %v447
    %602 = vmatpush1.bf16.msra.mxu0 %v446
    %603 = vmatprep.subr.bf16.mxu0 0
    %604 = vmatpush1.bf16.msra.mxu0 0
    %605 = vmatprep.subr.bf16.mxu0 0
    %606 = vmatpush1.bf16.msra.mxu0 0
    %607 = vmatprep.subr.bf16.mxu0 0
    %608 = vmatpush1.bf16.msra.mxu0 0
    %609 = vmatprep.subr.bf16.mxu0 0
    %610 = vmatpush1.bf16.msra.mxu0 0
    %611 = vmatprep.subr.bf16.mxu0 0
    %612 = vmatpush1.bf16.msra.mxu0 0
    %613 = vmatprep.subr.bf16.mxu0 0
    %614 = vmatpush1.bf16.msra.mxu0 0
    %615 = vmatprep.subr.bf16.mxu0 0
    %616 = vmatpush1.bf16.msra.mxu0 0
    %617 = vmatprep.subr.bf16.mxu0 0
    %618 = vmatpush1.bf16.msra.mxu0 0
    %619 = vmatprep.mubr.bf16.mxu0 0
    %620 = vmatmul.mubr.bf16.gmra.mrb[0].mxu0 %v115
    %v621 = vpop.f32.mrb[0].mxu0
    %v622 = vadd.f32 %v201, %v621
    %v623 = vpop.f32.mrb[0].mxu0
    %v624 = vadd.f32 %v205, %v623
    %v625 = vpop.f32.mrb[0].mxu0
    %v626 = vpop.f32.mrb[0].mxu0
    %627 = vdwg.mxu0
    %628 = vmatprep.subr.bf16.mxu0 0
    %629 = vmatpush1.bf16.msra.mxu0 %v399
    %630 = vmatprep.subr.bf16.mxu0 0
    %631 = vmatpush1.bf16.msra.mxu0 %v406
    %632 = vmatprep.subr.bf16.mxu0 0
    %633 = vmatpush1.bf16.msra.mxu0 %v413
    %634 = vmatprep.subr.bf16.mxu0 0
    %635 = vmatpush1.bf16.msra.mxu0 %v420
    %636 = vmatprep.subr.bf16.mxu0 0
    %637 = vmatpush1.bf16.msra.mxu0 %v427
    %638 = vmatprep.subr.bf16.mxu0 0
    %639 = vmatpush1.bf16.msra.mxu0 %v434
    %640 = vmatprep.subr.bf16.mxu0 0
    %641 = vmatpush1.bf16.msra.mxu0 %v441
    %642 = vmatprep.subr.bf16.mxu0 0
    %643 = vmatpush1.bf16.msra.mxu0 %v448
    %644 = vmatprep.subr.bf16.mxu0 0
    %645 = vmatpush1.bf16.msra.mxu0 0
    %646 = vmatprep.subr.bf16.mxu0 0
    %647 = vmatpush1.bf16.msra.mxu0 0
    %648 = vmatprep.subr.bf16.mxu0 0
    %649 = vmatpush1.bf16.msra.mxu0 0
    %650 = vmatprep.subr.bf16.mxu0 0
    %651 = vmatpush1.bf16.msra.mxu0 0
    %652 = vmatprep.subr.bf16.mxu0 0
    %653 = vmatpush1.bf16.msra.mxu0 0
    %654 = vmatprep.subr.bf16.mxu0 0
    %655 = vmatpush1.bf16.msra.mxu0 0
    %656 = vmatprep.subr.bf16.mxu0 0
    %657 = vmatpush1.bf16.msra.mxu0 0
    %658 = vmatprep.subr.bf16.mxu0 0
    %659 = vmatpush1.bf16.msra.mxu0 0
    %660 = vmatprep.mubr.bf16.mxu0 0
    %661 = vmatmul.mubr.bf16.gmra.mrb[0].mxu0 %v115
    %v662 = vpop.f32.mrb[0].mxu0
    %v663 = vadd.f32 %v209, %v662
    %v664 = vpop.f32.mrb[0].mxu0
    %v665 = vpop.f32.mrb[0].mxu0
    %v666 = vpop.f32.mrb[0].mxu0
    %667 = vdwg.mxu0
    %v668 = vmax.f32 %v540, 0.0
    %v669 = vmax.f32 %v542, 0.0
    %v670 = vmax.f32 %v581, 0.0
    %v671 = vmax.f32 %v583, 0.0
    %v672 = vmax.f32 %v622, 0.0
    %v673 = vmax.f32 %v624, 0.0
    %v674 = vmax.f32 %v663, 0.0
    %v675 = vpack.c.bf16 %v668, %v668
    %v676 = vpack.c.bf16 %v669, %v669
    %v677 = vpack.c.bf16 %v670, %v670
    %v678 = vpack.c.bf16 %v671, %v671
    %v679 = vpack.c.bf16 %v672, %v672
    %v680 = vpack.c.bf16 %v673, %v673
    %v681 = vpack.c.bf16 %v674, %v674
    %v682 = vld [vmem:[#allocation8] sm:$0xff]
    %v683 = vld [vmem:[#allocation8 + $0x8] sm:$0xff]
    %v684 = vld [vmem:[#allocation8 + $0x10] sm:$0xff]
    %v685 = vld [vmem:[#allocation8 + $0x18] sm:$0xf]
    %v686 = vld [vmem:[#allocation8 + $0x1c] sm:$0xff]
    %v687 = vld [vmem:[#allocation8 + $0x24] sm:$0xff]
    %v688 = vld [vmem:[#allocation8 + $0x2c] sm:$0xff]
    %v689 = vld [vmem:[#allocation8 + $0x34] sm:$0xf]
    %v690 = vld [vmem:[#allocation8 + $0x38] sm:$0xff]
    %v691 = vld [vmem:[#allocation8 + $0x40] sm:$0xff]
    %v692 = vld [vmem:[#allocation8 + $0x48] sm:$0xff]
    %v693 = vld [vmem:[#allocation8 + $0x50] sm:$0xf]
    %v694 = vld [vmem:[#allocation8 + $0x54] sm:$0xff]
    %v695 = vld [vmem:[#allocation8 + $0x5c] sm:$0xff]
    %v696 = vld [vmem:[#allocation8 + $0x64] sm:$0xff]
    %v697 = vld [vmem:[#allocation8 + $0x6c] sm:$0xf]
    %v698 = vld [vmem:[#allocation8 + $0x70] sm:$0xff]
    %v699 = vld [vmem:[#allocation8 + $0x78] sm:$0xff]
    %v700 = vld [vmem:[#allocation8 + $0x80] sm:$0xff]
    %v701 = vld [vmem:[#allocation8 + $0x88] sm:$0xf]
    %v702 = vld [vmem:[#allocation8 + $0x8c] sm:$0xff]
    %v703 = vld [vmem:[#allocation8 + $0x94] sm:$0xff]
    %v704 = vld [vmem:[#allocation8 + $0x9c] sm:$0xff]
    %v705 = vld [vmem:[#allocation8 + $0xa4] sm:$0xf]
    %v706 = vld [vmem:[#allocation8 + $0xa8] sm:$0xff]
    %v707 = vld [vmem:[#allocation8 + $0xb0] sm:$0xff]
    %v708 = vld [vmem:[#allocation8 + $0xb8] sm:$0xff]
    %v709 = vld [vmem:[#allocation8 + $0xc0] sm:$0xf]
    %v710 = vld [vmem:[#allocation8 + $0xc4] sm:$0xff]
    %v711 = vld [vmem:[#allocation8 + $0xcc] sm:$0xff]
    %v712 = vld [vmem:[#allocation8 + $0xd4] sm:$0xff]
    %v713 = vld [vmem:[#allocation8 + $0xdc] sm:$0xf]
    %v714 = vld [vmem:[#allocation8 + $0xe0] sm:$0xff]
    %v715 = vld [vmem:[#allocation8 + $0xe8] sm:$0xff]
    %v716 = vld [vmem:[#allocation8 + $0xf0] sm:$0xff]
    %v717 = vld [vmem:[#allocation8 + $0xf8] sm:$0xf]
    %v718 = vld [vmem:[#allocation8 + $0xfc] sm:$0xff]
    %v719 = vld [vmem:[#allocation8 + $0x104] sm:$0xff]
    %v720 = vld [vmem:[#allocation8 + $0x10c] sm:$0xff]
    %v721 = vld [vmem:[#allocation8 + $0x114] sm:$0xf]
    %v722 = vld [vmem:[#allocation8 + $0x118] sm:$0xff]
    %v723 = vld [vmem:[#allocation8 + $0x120] sm:$0xff]
    %v724 = vld [vmem:[#allocation8 + $0x128] sm:$0xff]
    %v725 = vld [vmem:[#allocation8 + $0x130] sm:$0xf]
    %v726 = vld [vmem:[#allocation8 + $0x134] sm:$0xff]
    %v727 = vld [vmem:[#allocation8 + $0x13c] sm:$0xff]
    %v728 = vld [vmem:[#allocation8 + $0x144] sm:$0xff]
    %v729 = vld [vmem:[#allocation8 + $0x14c] sm:$0xf]
    %v730 = vld [vmem:[#allocation8 + $0x150] sm:$0xff]
    %v731 = vld [vmem:[#allocation8 + $0x158] sm:$0xff]
    %v732 = vld [vmem:[#allocation8 + $0x160] sm:$0xff]
    %v733 = vld [vmem:[#allocation8 + $0x168] sm:$0xf]
    %v734 = vld [vmem:[#allocation8 + $0x16c] sm:$0xff]
    %v735 = vld [vmem:[#allocation8 + $0x174] sm:$0xff]
    %v736 = vld [vmem:[#allocation8 + $0x17c] sm:$0xff]
    %v737 = vld [vmem:[#allocation8 + $0x184] sm:$0xf]
    %v738 = vld [vmem:[#allocation8 + $0x188] sm:$0xff]
    %v739 = vld [vmem:[#allocation8 + $0x190] sm:$0xff]
    %v740 = vld [vmem:[#allocation8 + $0x198] sm:$0xff]
    %v741 = vld [vmem:[#allocation8 + $0x1a0] sm:$0xf]
    %v742 = vld [vmem:[#allocation8 + $0x1a4] sm:$0xff]
    %v743 = vld [vmem:[#allocation8 + $0x1ac] sm:$0xff]
    %v744 = vld [vmem:[#allocation8 + $0x1b4] sm:$0xff]
    %v745 = vld [vmem:[#allocation8 + $0x1bc] sm:$0xf]
    %v746 = vld [vmem:[#allocation8 + $0x1c0] sm:$0xff]
    %v747 = vld [vmem:[#allocation8 + $0x1c8] sm:$0xff]
    %v748 = vld [vmem:[#allocation8 + $0x1d0] sm:$0xff]
    %v749 = vld [vmem:[#allocation8 + $0x1d8] sm:$0xf]
    %v750 = vld [vmem:[#allocation8 + $0x1dc] sm:$0xff]
    %v751 = vld [vmem:[#allocation8 + $0x1e4] sm:$0xff]
    %v752 = vld [vmem:[#allocation8 + $0x1ec] sm:$0xff]
    %v753 = vld [vmem:[#allocation8 + $0x1f4] sm:$0xf]
    %v754 = vld [vmem:[#allocation8 + $0x1f8] sm:$0xff]
    %v755 = vld [vmem:[#allocation8 + $0x200] sm:$0xff]
    %v756 = vld [vmem:[#allocation8 + $0x208] sm:$0xff]
    %v757 = vld [vmem:[#allocation8 + $0x210] sm:$0xf]
    %v758 = vld [vmem:[#allocation8 + $0x214] sm:$0xff]
    %v759 = vld [vmem:[#allocation8 + $0x21c] sm:$0xff]
    %v760 = vld [vmem:[#allocation8 + $0x224] sm:$0xff]
    %v761 = vld [vmem:[#allocation8 + $0x22c] sm:$0xf]
    %v762 = vld [vmem:[#allocation8 + $0x230] sm:$0xff]
    %v763 = vld [vmem:[#allocation8 + $0x238] sm:$0xff]
    %v764 = vld [vmem:[#allocation8 + $0x240] sm:$0xff]
    %v765 = vld [vmem:[#allocation8 + $0x248] sm:$0xf]
    %v766 = vld [vmem:[#allocation8 + $0x24c] sm:$0xff]
    %v767 = vld [vmem:[#allocation8 + $0x254] sm:$0xff]
    %v768 = vld [vmem:[#allocation8 + $0x25c] sm:$0xff]
    %v769 = vld [vmem:[#allocation8 + $0x264] sm:$0xf]
    %v770 = vld [vmem:[#allocation8 + $0x268] sm:$0xff]
    %v771 = vld [vmem:[#allocation8 + $0x270] sm:$0xff]
    %v772 = vld [vmem:[#allocation8 + $0x278] sm:$0xff]
    %v773 = vld [vmem:[#allocation8 + $0x280] sm:$0xf]
    %v774 = vld [vmem:[#allocation8 + $0x284] sm:$0xff]
    %v775 = vld [vmem:[#allocation8 + $0x28c] sm:$0xff]
    %v776 = vld [vmem:[#allocation8 + $0x294] sm:$0xff]
    %v777 = vld [vmem:[#allocation8 + $0x29c] sm:$0xf]
    %v778 = vld [vmem:[#allocation8 + $0x2a0] sm:$0xff]
    %v779 = vld [vmem:[#allocation8 + $0x2a8] sm:$0xff]
    %v780 = vld [vmem:[#allocation8 + $0x2b0] sm:$0xff]
    %v781 = vld [vmem:[#allocation8 + $0x2b8] sm:$0xf]
    %v782 = vld [vmem:[#allocation8 + $0x2bc] sm:$0xff]
    %v783 = vld [vmem:[#allocation8 + $0x2c4] sm:$0xff]
    %v784 = vld [vmem:[#allocation8 + $0x2cc] sm:$0xff]
    %v785 = vld [vmem:[#allocation8 + $0x2d4] sm:$0xf]
    %v786 = vld [vmem:[#allocation8 + $0x2d8] sm:$0xff]
    %v787 = vld [vmem:[#allocation8 + $0x2e0] sm:$0xff]
    %v788 = vld [vmem:[#allocation8 + $0x2e8] sm:$0xff]
    %v789 = vld [vmem:[#allocation8 + $0x2f0] sm:$0xf]
    %v790 = vld [vmem:[#allocation8 + $0x2f4] sm:$0xff]
    %v791 = vld [vmem:[#allocation8 + $0x2fc] sm:$0xff]
    %v792 = vld [vmem:[#allocation8 + $0x304] sm:$0xff]
    %v793 = vld [vmem:[#allocation8 + $0x30c] sm:$0xf]
    %v794 = vld [vmem:[#allocation8 + $0x310] sm:$0xff]
    %v795 = vld [vmem:[#allocation8 + $0x318] sm:$0xff]
    %v796 = vld [vmem:[#allocation8 + $0x320] sm:$0xff]
    %v797 = vld [vmem:[#allocation8 + $0x328] sm:$0xf]
    %v798 = vld [vmem:[#allocation8 + $0x32c] sm:$0xff]
    %v799 = vld [vmem:[#allocation8 + $0x334] sm:$0xff]
    %v800 = vld [vmem:[#allocation8 + $0x33c] sm:$0xff]
    %v801 = vld [vmem:[#allocation8 + $0x344] sm:$0xf]
    %v802 = vld [vmem:[#allocation8 + $0x348] sm:$0xff]
    %v803 = vld [vmem:[#allocation8 + $0x350] sm:$0xff]
    %v804 = vld [vmem:[#allocation8 + $0x358] sm:$0xff]
    %v805 = vld [vmem:[#allocation8 + $0x360] sm:$0xf]
    %v806 = vld [vmem:[#allocation8 + $0x364] sm:$0xff]
    %v807 = vld [vmem:[#allocation8 + $0x36c] sm:$0xff]
    %v808 = vld [vmem:[#allocation8 + $0x374] sm:$0xff]
    %v809 = vld [vmem:[#allocation8 + $0x37c] sm:$0xf]
    %v810 = vld [vmem:[#allocation8 + $0x380] sm:$0xff]
    %v811 = vld [vmem:[#allocation8 + $0x388] sm:$0xff]
    %v812 = vld [vmem:[#allocation8 + $0x390] sm:$0xff]
    %v813 = vld [vmem:[#allocation8 + $0x398] sm:$0xf]
    %v814 = vld [vmem:[#allocation8 + $0x39c] sm:$0xff]
    %v815 = vld [vmem:[#allocation8 + $0x3a4] sm:$0xff]
    %v816 = vld [vmem:[#allocation8 + $0x3ac] sm:$0xff]
    %v817 = vld [vmem:[#allocation8 + $0x3b4] sm:$0xf]
    %v818 = vld [vmem:[#allocation8 + $0x3b8] sm:$0xff]
    %v819 = vld [vmem:[#allocation8 + $0x3c0] sm:$0xff]
    %v820 = vld [vmem:[#allocation8 + $0x3c8] sm:$0xff]
    %v821 = vld [vmem:[#allocation8 + $0x3d0] sm:$0xf]
    %v822 = vld [vmem:[#allocation8 + $0x3d4] sm:$0xff]
    %v823 = vld [vmem:[#allocation8 + $0x3dc] sm:$0xff]
    %v824 = vld [vmem:[#allocation8 + $0x3e4] sm:$0xff]
    %v825 = vld [vmem:[#allocation8 + $0x3ec] sm:$0xf]
    %v826 = vld [vmem:[#allocation8 + $0x3f0] sm:$0xff]
    %v827 = vld [vmem:[#allocation8 + $0x3f8] sm:$0xff]
    %v828 = vld [vmem:[#allocation8 + $0x400] sm:$0xff]
    %v829 = vld [vmem:[#allocation8 + $0x408] sm:$0xf]
    %v830 = vld [vmem:[#allocation8 + $0x40c] sm:$0xff]
    %v831 = vld [vmem:[#allocation8 + $0x414] sm:$0xff]
    %v832 = vld [vmem:[#allocation8 + $0x41c] sm:$0xff]
    %v833 = vld [vmem:[#allocation8 + $0x424] sm:$0xf]
    %v834 = vld [vmem:[#allocation8 + $0x428] sm:$0xff]
    %v835 = vld [vmem:[#allocation8 + $0x430] sm:$0xff]
    %v836 = vld [vmem:[#allocation8 + $0x438] sm:$0xff]
    %v837 = vld [vmem:[#allocation8 + $0x440] sm:$0xf]
    %v838 = vld [vmem:[#allocation8 + $0x444] sm:$0xff]
    %v839 = vld [vmem:[#allocation8 + $0x44c] sm:$0xff]
    %v840 = vld [vmem:[#allocation8 + $0x454] sm:$0xff]
    %v841 = vld [vmem:[#allocation8 + $0x45c] sm:$0xf]
    %v842 = vld [vmem:[#allocation8 + $0x460] sm:$0xff]
    %v843 = vld [vmem:[#allocation8 + $0x468] sm:$0xff]
    %v844 = vld [vmem:[#allocation8 + $0x470] sm:$0xff]
    %v845 = vld [vmem:[#allocation8 + $0x478] sm:$0xf]
    %v846 = vld [vmem:[#allocation8 + $0x47c] sm:$0xff]
    %v847 = vld [vmem:[#allocation8 + $0x484] sm:$0xff]
    %v848 = vld [vmem:[#allocation8 + $0x48c] sm:$0xff]
    %v849 = vld [vmem:[#allocation8 + $0x494] sm:$0xf]
    %v850 = vld [vmem:[#allocation8 + $0x498] sm:$0xff]
    %v851 = vld [vmem:[#allocation8 + $0x4a0] sm:$0xff]
    %v852 = vld [vmem:[#allocation8 + $0x4a8] sm:$0xff]
    %v853 = vld [vmem:[#allocation8 + $0x4b0] sm:$0xf]
    %v854 = vld [vmem:[#allocation8 + $0x4b4] sm:$0xff]
    %v855 = vld [vmem:[#allocation8 + $0x4bc] sm:$0xff]
    %v856 = vld [vmem:[#allocation8 + $0x4c4] sm:$0xff]
    %v857 = vld [vmem:[#allocation8 + $0x4cc] sm:$0xf]
    %v858 = vld [vmem:[#allocation8 + $0x4d0] sm:$0xff]
    %v859 = vld [vmem:[#allocation8 + $0x4d8] sm:$0xff]
    %v860 = vld [vmem:[#allocation8 + $0x4e0] sm:$0xff]
    %v861 = vld [vmem:[#allocation8 + $0x4e8] sm:$0xf]
    %v862 = vld [vmem:[#allocation8 + $0x4ec] sm:$0xff]
    %v863 = vld [vmem:[#allocation8 + $0x4f4] sm:$0xff]
    %v864 = vld [vmem:[#allocation8 + $0x4fc] sm:$0xff]
    %v865 = vld [vmem:[#allocation8 + $0x504] sm:$0xf]
    %v866 = vld [vmem:[#allocation8 + $0x508] sm:$0xff]
    %v867 = vld [vmem:[#allocation8 + $0x510] sm:$0xff]
    %v868 = vld [vmem:[#allocation8 + $0x518] sm:$0xff]
    %v869 = vld [vmem:[#allocation8 + $0x520] sm:$0xf]
    %v870 = vld [vmem:[#allocation8 + $0x524] sm:$0xff]
    %v871 = vld [vmem:[#allocation8 + $0x52c] sm:$0xff]
    %v872 = vld [vmem:[#allocation8 + $0x534] sm:$0xff]
    %v873 = vld [vmem:[#allocation8 + $0x53c] sm:$0xf]
    %v874 = vld [vmem:[#allocation8 + $0x540] sm:$0xff]
    %v875 = vld [vmem:[#allocation8 + $0x548] sm:$0xff]
    %v876 = vld [vmem:[#allocation8 + $0x550] sm:$0xff]
    %v877 = vld [vmem:[#allocation8 + $0x558] sm:$0xf]
    %v878 = vld [vmem:[#allocation8 + $0x55c] sm:$0xff]
    %v879 = vld [vmem:[#allocation8 + $0x564] sm:$0xff]
    %v880 = vld [vmem:[#allocation8 + $0x56c] sm:$0xff]
    %v881 = vld [vmem:[#allocation8 + $0x574] sm:$0xf]
    %v882 = vld [vmem:[#allocation8 + $0x578] sm:$0xff]
    %v883 = vld [vmem:[#allocation8 + $0x580] sm:$0xff]
    %v884 = vld [vmem:[#allocation8 + $0x588] sm:$0xff]
    %v885 = vld [vmem:[#allocation8 + $0x590] sm:$0xf]
    %v886 = vld [vmem:[#allocation8 + $0x594] sm:$0xff]
    %v887 = vld [vmem:[#allocation8 + $0x59c] sm:$0xff]
    %v888 = vld [vmem:[#allocation8 + $0x5a4] sm:$0xff]
    %v889 = vld [vmem:[#allocation8 + $0x5ac] sm:$0xf]
    %v890 = vld [vmem:[#allocation8 + $0x5b0] sm:$0xff]
    %v891 = vld [vmem:[#allocation8 + $0x5b8] sm:$0xff]
    %v892 = vld [vmem:[#allocation8 + $0x5c0] sm:$0xff]
    %v893 = vld [vmem:[#allocation8 + $0x5c8] sm:$0xf]
    %v894 = vld [vmem:[#allocation8 + $0x5cc] sm:$0xff]
    %v895 = vld [vmem:[#allocation8 + $0x5d4] sm:$0xff]
    %v896 = vld [vmem:[#allocation8 + $0x5dc] sm:$0xff]
    %v897 = vld [vmem:[#allocation8 + $0x5e4] sm:$0xf]
    %v898 = vld [vmem:[#allocation8 + $0x5e8] sm:$0xff]
    %v899 = vld [vmem:[#allocation8 + $0x5f0] sm:$0xff]
    %v900 = vld [vmem:[#allocation8 + $0x5f8] sm:$0xff]
    %v901 = vld [vmem:[#allocation8 + $0x600] sm:$0xf]
    %v902 = vld [vmem:[#allocation8 + $0x604] sm:$0xff]
    %v903 = vld [vmem:[#allocation8 + $0x60c] sm:$0xff]
    %v904 = vld [vmem:[#allocation8 + $0x614] sm:$0xff]
    %v905 = vld [vmem:[#allocation8 + $0x61c] sm:$0xf]
    %v906 = vld [vmem:[#allocation8 + $0x620] sm:$0xff]
    %v907 = vld [vmem:[#allocation8 + $0x628] sm:$0xff]
    %v908 = vld [vmem:[#allocation8 + $0x630] sm:$0xff]
    %v909 = vld [vmem:[#allocation8 + $0x638] sm:$0xf]
    %v910 = vld [vmem:[#allocation8 + $0x63c] sm:$0xff]
    %v911 = vld [vmem:[#allocation8 + $0x644] sm:$0xff]
    %v912 = vld [vmem:[#allocation8 + $0x64c] sm:$0xff]
    %v913 = vld [vmem:[#allocation8 + $0x654] sm:$0xf]
    %v914 = vld [vmem:[#allocation8 + $0x658] sm:$0xff]
    %v915 = vld [vmem:[#allocation8 + $0x660] sm:$0xff]
    %v916 = vld [vmem:[#allocation8 + $0x668] sm:$0xff]
    %v917 = vld [vmem:[#allocation8 + $0x670] sm:$0xf]
    %v918 = vld [vmem:[#allocation8 + $0x674] sm:$0xff]
    %v919 = vld [vmem:[#allocation8 + $0x67c] sm:$0xff]
    %v920 = vld [vmem:[#allocation8 + $0x684] sm:$0xff]
    %v921 = vld [vmem:[#allocation8 + $0x68c] sm:$0xf]
    %v922 = vld [vmem:[#allocation8 + $0x690] sm:$0xff]
    %v923 = vld [vmem:[#allocation8 + $0x698] sm:$0xff]
    %v924 = vld [vmem:[#allocation8 + $0x6a0] sm:$0xff]
    %v925 = vld [vmem:[#allocation8 + $0x6a8] sm:$0xf]
    %v926 = vld [vmem:[#allocation8 + $0x6ac] sm:$0xff]
    %v927 = vld [vmem:[#allocation8 + $0x6b4] sm:$0xff]
    %v928 = vld [vmem:[#allocation8 + $0x6bc] sm:$0xff]
    %v929 = vld [vmem:[#allocation8 + $0x6c4] sm:$0xf]
    %v930 = vld [vmem:[#allocation8 + $0x6c8] sm:$0xff]
    %v931 = vld [vmem:[#allocation8 + $0x6d0] sm:$0xff]
    %v932 = vld [vmem:[#allocation8 + $0x6d8] sm:$0xff]
    %v933 = vld [vmem:[#allocation8 + $0x6e0] sm:$0xf]
    %v934 = vld [vmem:[#allocation8 + $0x6e4] sm:$0xff]
    %v935 = vld [vmem:[#allocation8 + $0x6ec] sm:$0xff]
    %v936 = vld [vmem:[#allocation8 + $0x6f4] sm:$0xff]
    %v937 = vld [vmem:[#allocation8 + $0x6fc] sm:$0xf]
    %v938 = vld [vmem:[#allocation8 + $0x700] sm:$0xff]
    %v939 = vld [vmem:[#allocation8 + $0x708] sm:$0xff]
    %v940 = vld [vmem:[#allocation8 + $0x710] sm:$0xff]
    %v941 = vld [vmem:[#allocation8 + $0x718] sm:$0xf]
    %v942 = vld [vmem:[#allocation8 + $0x71c] sm:$0xff]
    %v943 = vld [vmem:[#allocation8 + $0x724] sm:$0xff]
    %v944 = vld [vmem:[#allocation8 + $0x72c] sm:$0xff]
    %v945 = vld [vmem:[#allocation8 + $0x734] sm:$0xf]
    %v946 = vld [vmem:[#allocation8 + $0x738] sm:$0xff]
    %v947 = vld [vmem:[#allocation8 + $0x740] sm:$0xff]
    %v948 = vld [vmem:[#allocation8 + $0x748] sm:$0xff]
    %v949 = vld [vmem:[#allocation8 + $0x750] sm:$0xf]
    %v950 = vld [vmem:[#allocation8 + $0x754] sm:$0xff]
    %v951 = vld [vmem:[#allocation8 + $0x75c] sm:$0xff]
    %v952 = vld [vmem:[#allocation8 + $0x764] sm:$0xff]
    %v953 = vld [vmem:[#allocation8 + $0x76c] sm:$0xf]
    %v954 = vld [vmem:[#allocation8 + $0x770] sm:$0xff]
    %v955 = vld [vmem:[#allocation8 + $0x778] sm:$0xff]
    %v956 = vld [vmem:[#allocation8 + $0x780] sm:$0xff]
    %v957 = vld [vmem:[#allocation8 + $0x788] sm:$0xf]
    %v958 = vld [vmem:[#allocation8 + $0x78c] sm:$0xff]
    %v959 = vld [vmem:[#allocation8 + $0x794] sm:$0xff]
    %v960 = vld [vmem:[#allocation8 + $0x79c] sm:$0xff]
    %v961 = vld [vmem:[#allocation8 + $0x7a4] sm:$0xf]
    %v962 = vld [vmem:[#allocation8 + $0x7a8] sm:$0xff]
    %v963 = vld [vmem:[#allocation8 + $0x7b0] sm:$0xff]
    %v964 = vld [vmem:[#allocation8 + $0x7b8] sm:$0xff]
    %v965 = vld [vmem:[#allocation8 + $0x7c0] sm:$0xf]
    %v966 = vld [vmem:[#allocation8 + $0x7c4] sm:$0xff]
    %v967 = vld [vmem:[#allocation8 + $0x7cc] sm:$0xff]
    %v968 = vld [vmem:[#allocation8 + $0x7d4] sm:$0xff]
    %v969 = vld [vmem:[#allocation8 + $0x7dc] sm:$0xf]
    %v970 = vld [vmem:[#allocation8 + $0x7e0] sm:$0xff]
    %v971 = vld [vmem:[#allocation8 + $0x7e8] sm:$0xff]
    %v972 = vld [vmem:[#allocation8 + $0x7f0] sm:$0xff]
    %v973 = vld [vmem:[#allocation8 + $0x7f8] sm:$0xf]
    %v974 = vld [vmem:[#allocation8 + $0x7fc] sm:$0xff]
    %v975 = vld [vmem:[#allocation8 + $0x804] sm:$0xff]
    %v976 = vld [vmem:[#allocation8 + $0x80c] sm:$0xff]
    %v977 = vld [vmem:[#allocation8 + $0x814] sm:$0xf]
    %v978 = vld [vmem:[#allocation8 + $0x818] sm:$0xff]
    %v979 = vld [vmem:[#allocation8 + $0x820] sm:$0xff]
    %v980 = vld [vmem:[#allocation8 + $0x828] sm:$0xff]
    %v981 = vld [vmem:[#allocation8 + $0x830] sm:$0xf]
    %v982 = vld [vmem:[#allocation8 + $0x834] sm:$0xff]
    %v983 = vld [vmem:[#allocation8 + $0x83c] sm:$0xff]
    %v984 = vld [vmem:[#allocation8 + $0x844] sm:$0xff]
    %v985 = vld [vmem:[#allocation8 + $0x84c] sm:$0xf]
    %v986 = vld [vmem:[#allocation8 + $0x850] sm:$0xff]
    %v987 = vld [vmem:[#allocation8 + $0x858] sm:$0xff]
    %v988 = vld [vmem:[#allocation8 + $0x860] sm:$0xff]
    %v989 = vld [vmem:[#allocation8 + $0x868] sm:$0xf]
    %v990 = vld [vmem:[#allocation8 + $0x86c] sm:$0xff]
    %v991 = vld [vmem:[#allocation8 + $0x874] sm:$0xff]
    %v992 = vld [vmem:[#allocation8 + $0x87c] sm:$0xff]
    %v993 = vld [vmem:[#allocation8 + $0x884] sm:$0xf]
    %v994 = vld [vmem:[#allocation8 + $0x888] sm:$0xff]
    %v995 = vld [vmem:[#allocation8 + $0x890] sm:$0xff]
    %v996 = vld [vmem:[#allocation8 + $0x898] sm:$0xff]
    %v997 = vld [vmem:[#allocation8 + $0x8a0] sm:$0xf]
    %v998 = vld [vmem:[#allocation8 + $0x8a4] sm:$0xff]
    %v999 = vld [vmem:[#allocation8 + $0x8ac] sm:$0xff]
    %v1000 = vld [vmem:[#allocation8 + $0x8b4] sm:$0xff]
    %v1001 = vld [vmem:[#allocation8 + $0x8bc] sm:$0xf]
    %v1002 = vld [vmem:[#allocation8 + $0x8c0] sm:$0xff]
    %v1003 = vld [vmem:[#allocation8 + $0x8c8] sm:$0xff]
    %v1004 = vld [vmem:[#allocation8 + $0x8d0] sm:$0xff]
    %v1005 = vld [vmem:[#allocation8 + $0x8d8] sm:$0xf]
    %v1006 = vld [vmem:[#allocation8 + $0x8dc] sm:$0xff]
    %v1007 = vld [vmem:[#allocation8 + $0x8e4] sm:$0xff]
    %v1008 = vld [vmem:[#allocation8 + $0x8ec] sm:$0xff]
    %v1009 = vld [vmem:[#allocation8 + $0x8f4] sm:$0xf]
    %v1010 = vld [vmem:[#allocation8 + $0x8f8] sm:$0xff]
    %v1011 = vld [vmem:[#allocation8 + $0x900] sm:$0xff]
    %v1012 = vld [vmem:[#allocation8 + $0x908] sm:$0xff]
    %v1013 = vld [vmem:[#allocation8 + $0x910] sm:$0xf]
    %v1014 = vld [vmem:[#allocation8 + $0x914] sm:$0xff]
    %v1015 = vld [vmem:[#allocation8 + $0x91c] sm:$0xff]
    %v1016 = vld [vmem:[#allocation8 + $0x924] sm:$0xff]
    %v1017 = vld [vmem:[#allocation8 + $0x92c] sm:$0xf]
    %v1018 = vld [vmem:[#allocation8 + $0x930] sm:$0xff]
    %v1019 = vld [vmem:[#allocation8 + $0x938] sm:$0xff]
    %v1020 = vld [vmem:[#allocation8 + $0x940] sm:$0xff]
    %v1021 = vld [vmem:[#allocation8 + $0x948] sm:$0xf]
    %v1022 = vld [vmem:[#allocation8 + $0x94c] sm:$0xff]
    %v1023 = vld [vmem:[#allocation8 + $0x954] sm:$0xff]
    %v1024 = vld [vmem:[#allocation8 + $0x95c] sm:$0xff]
    %v1025 = vld [vmem:[#allocation8 + $0x964] sm:$0xf]
    %v1026 = vld [vmem:[#allocation8 + $0x968] sm:$0xff]
    %v1027 = vld [vmem:[#allocation8 + $0x970] sm:$0xff]
    %v1028 = vld [vmem:[#allocation8 + $0x978] sm:$0xff]
    %v1029 = vld [vmem:[#allocation8 + $0x980] sm:$0xf]
    %v1030 = vld [vmem:[#allocation8 + $0x984] sm:$0xff]
    %v1031 = vld [vmem:[#allocation8 + $0x98c] sm:$0xff]
    %v1032 = vld [vmem:[#allocation8 + $0x994] sm:$0xff]
    %v1033 = vld [vmem:[#allocation8 + $0x99c] sm:$0xf]
    %v1034 = vld [vmem:[#allocation8 + $0x9a0] sm:$0xff]
    %v1035 = vld [vmem:[#allocation8 + $0x9a8] sm:$0xff]
    %v1036 = vld [vmem:[#allocation8 + $0x9b0] sm:$0xff]
    %v1037 = vld [vmem:[#allocation8 + $0x9b8] sm:$0xf]
    %v1038 = vld [vmem:[#allocation8 + $0x9bc] sm:$0xff]
    %v1039 = vld [vmem:[#allocation8 + $0x9c4] sm:$0xff]
    %v1040 = vld [vmem:[#allocation8 + $0x9cc] sm:$0xff]
    %v1041 = vld [vmem:[#allocation8 + $0x9d4] sm:$0xf]
    %v1042 = vld [vmem:[#allocation8 + $0x9d8] sm:$0xff]
    %v1043 = vld [vmem:[#allocation8 + $0x9e0] sm:$0xff]
    %v1044 = vld [vmem:[#allocation8 + $0x9e8] sm:$0xff]
    %v1045 = vld [vmem:[#allocation8 + $0x9f0] sm:$0xf]
    %v1046 = vld [vmem:[#allocation8 + $0x9f4] sm:$0xff]
    %v1047 = vld [vmem:[#allocation8 + $0x9fc] sm:$0xff]
    %v1048 = vld [vmem:[#allocation8 + $0xa04] sm:$0xff]
    %v1049 = vld [vmem:[#allocation8 + $0xa0c] sm:$0xf]
    %v1050 = vld [vmem:[#allocation8 + $0xa10] sm:$0xff]
    %v1051 = vld [vmem:[#allocation8 + $0xa18] sm:$0xff]
    %v1052 = vld [vmem:[#allocation8 + $0xa20] sm:$0xff]
    %v1053 = vld [vmem:[#allocation8 + $0xa28] sm:$0xf]
    %v1054 = vld [vmem:[#allocation8 + $0xa2c] sm:$0xff]
    %v1055 = vld [vmem:[#allocation8 + $0xa34] sm:$0xff]
    %v1056 = vld [vmem:[#allocation8 + $0xa3c] sm:$0xff]
    %v1057 = vld [vmem:[#allocation8 + $0xa44] sm:$0xf]
    %v1058 = vld [vmem:[#allocation8 + $0xa48] sm:$0xff]
    %v1059 = vld [vmem:[#allocation8 + $0xa50] sm:$0xff]
    %v1060 = vld [vmem:[#allocation8 + $0xa58] sm:$0xff]
    %v1061 = vld [vmem:[#allocation8 + $0xa60] sm:$0xf]
    %v1062 = vld [vmem:[#allocation8 + $0xa64] sm:$0xff]
    %v1063 = vld [vmem:[#allocation8 + $0xa6c] sm:$0xff]
    %v1064 = vld [vmem:[#allocation8 + $0xa74] sm:$0xff]
    %v1065 = vld [vmem:[#allocation8 + $0xa7c] sm:$0xf]
    %v1066 = vld [vmem:[#allocation8 + $0xa80] sm:$0xff]
    %v1067 = vld [vmem:[#allocation8 + $0xa88] sm:$0xff]
    %v1068 = vld [vmem:[#allocation8 + $0xa90] sm:$0xff]
    %v1069 = vld [vmem:[#allocation8 + $0xa98] sm:$0xf]
    %v1070 = vld [vmem:[#allocation8 + $0xa9c] sm:$0xff]
    %v1071 = vld [vmem:[#allocation8 + $0xaa4] sm:$0xff]
    %v1072 = vld [vmem:[#allocation8 + $0xaac] sm:$0xff]
    %v1073 = vld [vmem:[#allocation8 + $0xab4] sm:$0xf]
    %v1074 = vld [vmem:[#allocation8 + $0xab8] sm:$0xff]
    %v1075 = vld [vmem:[#allocation8 + $0xac0] sm:$0xff]
    %v1076 = vld [vmem:[#allocation8 + $0xac8] sm:$0xff]
    %v1077 = vld [vmem:[#allocation8 + $0xad0] sm:$0xf]
    %v1078 = vld [vmem:[#allocation8 + $0xad4] sm:$0xff]
    %v1079 = vld [vmem:[#allocation8 + $0xadc] sm:$0xff]
    %v1080 = vld [vmem:[#allocation8 + $0xae4] sm:$0xff]
    %v1081 = vld [vmem:[#allocation8 + $0xaec] sm:$0xf]
    %v1082 = vld [vmem:[#allocation8 + $0xaf0] sm:$0xff]
    %v1083 = vld [vmem:[#allocation8 + $0xaf8] sm:$0xff]
    %v1084 = vld [vmem:[#allocation8 + $0xb00] sm:$0xff]
    %v1085 = vld [vmem:[#allocation8 + $0xb08] sm:$0xf]
    %v1086 = vld [vmem:[#allocation8 + $0xb0c] sm:$0xff]
    %v1087 = vld [vmem:[#allocation8 + $0xb14] sm:$0xff]
    %v1088 = vld [vmem:[#allocation8 + $0xb1c] sm:$0xff]
    %v1089 = vld [vmem:[#allocation8 + $0xb24] sm:$0xf]
    %v1090 = vld [vmem:[#allocation8 + $0xb28] sm:$0xff]
    %v1091 = vld [vmem:[#allocation8 + $0xb30] sm:$0xff]
    %v1092 = vld [vmem:[#allocation8 + $0xb38] sm:$0xff]
    %v1093 = vld [vmem:[#allocation8 + $0xb40] sm:$0xf]
    %v1094 = vld [vmem:[#allocation8 + $0xb44] sm:$0xff]
    %v1095 = vld [vmem:[#allocation8 + $0xb4c] sm:$0xff]
    %v1096 = vld [vmem:[#allocation8 + $0xb54] sm:$0xff]
    %v1097 = vld [vmem:[#allocation8 + $0xb5c] sm:$0xf]
    %v1098 = vld [vmem:[#allocation8 + $0xb60] sm:$0xff]
    %v1099 = vld [vmem:[#allocation8 + $0xb68] sm:$0xff]
    %v1100 = vld [vmem:[#allocation8 + $0xb70] sm:$0xff]
    %v1101 = vld [vmem:[#allocation8 + $0xb78] sm:$0xf]
    %v1102 = vld [vmem:[#allocation8 + $0xb7c] sm:$0xff]
    %v1103 = vld [vmem:[#allocation8 + $0xb84] sm:$0xff]
    %v1104 = vld [vmem:[#allocation8 + $0xb8c] sm:$0xff]
    %v1105 = vld [vmem:[#allocation8 + $0xb94] sm:$0xf]
    %v1106 = vld [vmem:[#allocation8 + $0xb98] sm:$0xff]
    %v1107 = vld [vmem:[#allocation8 + $0xba0] sm:$0xff]
    %v1108 = vld [vmem:[#allocation8 + $0xba8] sm:$0xff]
    %v1109 = vld [vmem:[#allocation8 + $0xbb0] sm:$0xf]
    %v1110 = vld [vmem:[#allocation8 + $0xbb4] sm:$0xff]
    %v1111 = vld [vmem:[#allocation8 + $0xbbc] sm:$0xff]
    %v1112 = vld [vmem:[#allocation8 + $0xbc4] sm:$0xff]
    %v1113 = vld [vmem:[#allocation8 + $0xbcc] sm:$0xf]
    %v1114 = vld [vmem:[#allocation8 + $0xbd0] sm:$0xff]
    %v1115 = vld [vmem:[#allocation8 + $0xbd8] sm:$0xff]
    %v1116 = vld [vmem:[#allocation8 + $0xbe0] sm:$0xff]
    %v1117 = vld [vmem:[#allocation8 + $0xbe8] sm:$0xf]
    %v1118 = vld [vmem:[#allocation8 + $0xbec] sm:$0xff]
    %v1119 = vld [vmem:[#allocation8 + $0xbf4] sm:$0xff]
    %v1120 = vld [vmem:[#allocation8 + $0xbfc] sm:$0xff]
    %v1121 = vld [vmem:[#allocation8 + $0xc04] sm:$0xf]
    %v1122 = vld [vmem:[#allocation8 + $0xc08] sm:$0xff]
    %v1123 = vld [vmem:[#allocation8 + $0xc10] sm:$0xff]
    %v1124 = vld [vmem:[#allocation8 + $0xc18] sm:$0xff]
    %v1125 = vld [vmem:[#allocation8 + $0xc20] sm:$0xf]
    %v1126 = vld [vmem:[#allocation8 + $0xc24] sm:$0xff]
    %v1127 = vld [vmem:[#allocation8 + $0xc2c] sm:$0xff]
    %v1128 = vld [vmem:[#allocation8 + $0xc34] sm:$0xff]
    %v1129 = vld [vmem:[#allocation8 + $0xc3c] sm:$0xf]
    %v1130 = vld [vmem:[#allocation10] sm:$0xff]
    %v1132 = vlaneseq
    %v1133 = vshrl.u32 %v1132, 7
    %v1134 = vsub.s32 0, %v1133
    %v1135 = vrot.slane %v1130, %v1134
    %v1136 = vlaneseq
    %v1137 = vshrl.u32 %v1136, 7
    %v1138 = vsub.s32 1, %v1137
    %v1139 = vrot.slane %v1130, %v1138
    %v1140 = vlaneseq
    %v1141 = vshrl.u32 %v1140, 7
    %v1142 = vsub.s32 2, %v1141
    %v1143 = vrot.slane %v1130, %v1142
    %v1144 = vlaneseq
    %v1145 = vshrl.u32 %v1144, 7
    %v1146 = vsub.s32 3, %v1145
    %v1147 = vrot.slane %v1130, %v1146
    %v1148 = vlaneseq
    %v1149 = vshrl.u32 %v1148, 7
    %v1150 = vsub.s32 4, %v1149
    %v1151 = vrot.slane %v1130, %v1150
    %v1152 = vlaneseq
    %v1153 = vshrl.u32 %v1152, 7
    %v1154 = vsub.s32 5, %v1153
    %v1155 = vrot.slane %v1130, %v1154
    %v1156 = vlaneseq
    %v1157 = vshrl.u32 %v1156, 7
    %v1158 = vsub.s32 6, %v1157
    %v1159 = vrot.slane %v1130, %v1158
    %v1615 = vunpack.c.l.b16 %v682
    %v1616 = vunpack.c.h.b16 %v682
    %v1617 = vunpack.c.l.b16 %v683
    %v1618 = vunpack.c.h.b16 %v683
    %v1619 = vunpack.c.l.b16 %v684
    %v1620 = vunpack.c.h.b16 %v684
    %v1621 = vunpack.c.l.b16 %v685
    %v1622 = vunpack.c.l.b16 %v686
    %v1623 = vunpack.c.h.b16 %v686
    %v1624 = vunpack.c.l.b16 %v687
    %v1625 = vunpack.c.h.b16 %v687
    %v1626 = vunpack.c.l.b16 %v688
    %v1627 = vunpack.c.h.b16 %v688
    %v1628 = vunpack.c.l.b16 %v689
    %v1629 = vunpack.c.l.b16 %v690
    %v1630 = vunpack.c.h.b16 %v690
    %v1631 = vunpack.c.l.b16 %v691
    %v1632 = vunpack.c.h.b16 %v691
    %v1633 = vunpack.c.l.b16 %v692
    %v1634 = vunpack.c.h.b16 %v692
    %v1635 = vunpack.c.l.b16 %v693
    %v1636 = vunpack.c.l.b16 %v694
    %v1637 = vunpack.c.h.b16 %v694
    %v1638 = vunpack.c.l.b16 %v695
    %v1639 = vunpack.c.h.b16 %v695
    %v1640 = vunpack.c.l.b16 %v696
    %v1641 = vunpack.c.h.b16 %v696
    %v1642 = vunpack.c.l.b16 %v697
    %v1643 = vunpack.c.l.b16 %v698
    %v1644 = vunpack.c.h.b16 %v698
    %v1645 = vunpack.c.l.b16 %v699
    %v1646 = vunpack.c.h.b16 %v699
    %v1647 = vunpack.c.l.b16 %v700
    %v1648 = vunpack.c.h.b16 %v700
    %v1649 = vunpack.c.l.b16 %v701
    %v1650 = vunpack.c.l.b16 %v702
    %v1651 = vunpack.c.h.b16 %v702
    %v1652 = vunpack.c.l.b16 %v703
    %v1653 = vunpack.c.h.b16 %v703
    %v1654 = vunpack.c.l.b16 %v704
    %v1655 = vunpack.c.h.b16 %v704
    %v1656 = vunpack.c.l.b16 %v705
    %v1657 = vunpack.c.l.b16 %v706
    %v1658 = vunpack.c.h.b16 %v706
    %v1659 = vunpack.c.l.b16 %v707
    %v1660 = vunpack.c.h.b16 %v707
    %v1661 = vunpack.c.l.b16 %v708
    %v1662 = vunpack.c.h.b16 %v708
    %v1663 = vunpack.c.l.b16 %v709
    %v1664 = vunpack.c.l.b16 %v710
    %v1665 = vunpack.c.h.b16 %v710
    %v1666 = vunpack.c.l.b16 %v711
    %v1667 = vunpack.c.h.b16 %v711
    %v1668 = vunpack.c.l.b16 %v712
    %v1669 = vunpack.c.h.b16 %v712
    %v1670 = vunpack.c.l.b16 %v713
    %v1671 = vunpack.c.l.b16 %v714
    %v1672 = vunpack.c.h.b16 %v714
    %v1673 = vunpack.c.l.b16 %v715
    %v1674 = vunpack.c.h.b16 %v715
    %v1675 = vunpack.c.l.b16 %v716
    %v1676 = vunpack.c.h.b16 %v716
    %v1677 = vunpack.c.l.b16 %v717
    %v1678 = vunpack.c.l.b16 %v718
    %v1679 = vunpack.c.h.b16 %v718
    %v1680 = vunpack.c.l.b16 %v719
    %v1681 = vunpack.c.h.b16 %v719
    %v1682 = vunpack.c.l.b16 %v720
    %v1683 = vunpack.c.h.b16 %v720
    %v1684 = vunpack.c.l.b16 %v721
    %v1685 = vunpack.c.l.b16 %v722
    %v1686 = vunpack.c.h.b16 %v722
    %v1687 = vunpack.c.l.b16 %v723
    %v1688 = vunpack.c.h.b16 %v723
    %v1689 = vunpack.c.l.b16 %v724
    %v1690 = vunpack.c.h.b16 %v724
    %v1691 = vunpack.c.l.b16 %v725
    %v1692 = vunpack.c.l.b16 %v726
    %v1693 = vunpack.c.h.b16 %v726
    %v1694 = vunpack.c.l.b16 %v727
    %v1695 = vunpack.c.h.b16 %v727
    %v1696 = vunpack.c.l.b16 %v728
    %v1697 = vunpack.c.h.b16 %v728
    %v1698 = vunpack.c.l.b16 %v729
    %v1699 = vunpack.c.l.b16 %v730
    %v1700 = vunpack.c.h.b16 %v730
    %v1701 = vunpack.c.l.b16 %v731
    %v1702 = vunpack.c.h.b16 %v731
    %v1703 = vunpack.c.l.b16 %v732
    %v1704 = vunpack.c.h.b16 %v732
    %v1705 = vunpack.c.l.b16 %v733
    %v1706 = vunpack.c.l.b16 %v734
    %v1707 = vunpack.c.h.b16 %v734
    %v1708 = vunpack.c.l.b16 %v735
    %v1709 = vunpack.c.h.b16 %v735
    %v1710 = vunpack.c.l.b16 %v736
    %v1711 = vunpack.c.h.b16 %v736
    %v1712 = vunpack.c.l.b16 %v737
    %v1713 = vunpack.c.l.b16 %v738
    %v1714 = vunpack.c.h.b16 %v738
    %v1715 = vunpack.c.l.b16 %v739
    %v1716 = vunpack.c.h.b16 %v739
    %v1717 = vunpack.c.l.b16 %v740
    %v1718 = vunpack.c.h.b16 %v740
    %v1719 = vunpack.c.l.b16 %v741
    %v1720 = vunpack.c.l.b16 %v742
    %v1721 = vunpack.c.h.b16 %v742
    %v1722 = vunpack.c.l.b16 %v743
    %v1723 = vunpack.c.h.b16 %v743
    %v1724 = vunpack.c.l.b16 %v744
    %v1725 = vunpack.c.h.b16 %v744
    %v1726 = vunpack.c.l.b16 %v745
    %v1727 = vunpack.c.l.b16 %v746
    %v1728 = vunpack.c.h.b16 %v746
    %v1729 = vunpack.c.l.b16 %v747
    %v1730 = vunpack.c.h.b16 %v747
    %v1731 = vunpack.c.l.b16 %v748
    %v1732 = vunpack.c.h.b16 %v748
    %v1733 = vunpack.c.l.b16 %v749
    %v1734 = vunpack.c.l.b16 %v750
    %v1735 = vunpack.c.h.b16 %v750
    %v1736 = vunpack.c.l.b16 %v751
    %v1737 = vunpack.c.h.b16 %v751
    %v1738 = vunpack.c.l.b16 %v752
    %v1739 = vunpack.c.h.b16 %v752
    %v1740 = vunpack.c.l.b16 %v753
    %v1741 = vunpack.c.l.b16 %v754
    %v1742 = vunpack.c.h.b16 %v754
    %v1743 = vunpack.c.l.b16 %v755
    %v1744 = vunpack.c.h.b16 %v755
    %v1745 = vunpack.c.l.b16 %v756
    %v1746 = vunpack.c.h.b16 %v756
    %v1747 = vunpack.c.l.b16 %v757
    %v1748 = vunpack.c.l.b16 %v758
    %v1749 = vunpack.c.h.b16 %v758
    %v1750 = vunpack.c.l.b16 %v759
    %v1751 = vunpack.c.h.b16 %v759
    %v1752 = vunpack.c.l.b16 %v760
    %v1753 = vunpack.c.h.b16 %v760
    %v1754 = vunpack.c.l.b16 %v761
    %v1755 = vunpack.c.l.b16 %v762
    %v1756 = vunpack.c.h.b16 %v762
    %v1757 = vunpack.c.l.b16 %v763
    %v1758 = vunpack.c.h.b16 %v763
    %v1759 = vunpack.c.l.b16 %v764
    %v1760 = vunpack.c.h.b16 %v764
    %v1761 = vunpack.c.l.b16 %v765
    %v1762 = vunpack.c.l.b16 %v766
    %v1763 = vunpack.c.h.b16 %v766
    %v1764 = vunpack.c.l.b16 %v767
    %v1765 = vunpack.c.h.b16 %v767
    %v1766 = vunpack.c.l.b16 %v768
    %v1767 = vunpack.c.h.b16 %v768
    %v1768 = vunpack.c.l.b16 %v769
    %v1769 = vunpack.c.l.b16 %v770
    %v1770 = vunpack.c.h.b16 %v770
    %v1771 = vunpack.c.l.b16 %v771
    %v1772 = vunpack.c.h.b16 %v771
    %v1773 = vunpack.c.l.b16 %v772
    %v1774 = vunpack.c.h.b16 %v772
    %v1775 = vunpack.c.l.b16 %v773
    %v1776 = vunpack.c.l.b16 %v774
    %v1777 = vunpack.c.h.b16 %v774
    %v1778 = vunpack.c.l.b16 %v775
    %v1779 = vunpack.c.h.b16 %v775
    %v1780 = vunpack.c.l.b16 %v776
    %v1781 = vunpack.c.h.b16 %v776
    %v1782 = vunpack.c.l.b16 %v777
    %v1783 = vunpack.c.l.b16 %v778
    %v1784 = vunpack.c.h.b16 %v778
    %v1785 = vunpack.c.l.b16 %v779
    %v1786 = vunpack.c.h.b16 %v779
    %v1787 = vunpack.c.l.b16 %v780
    %v1788 = vunpack.c.h.b16 %v780
    %v1789 = vunpack.c.l.b16 %v781
    %v1790 = vunpack.c.l.b16 %v782
    %v1791 = vunpack.c.h.b16 %v782
    %v1792 = vunpack.c.l.b16 %v783
    %v1793 = vunpack.c.h.b16 %v783
    %v1794 = vunpack.c.l.b16 %v784
    %v1795 = vunpack.c.h.b16 %v784
    %v1796 = vunpack.c.l.b16 %v785
    %v1797 = vunpack.c.l.b16 %v786
    %v1798 = vunpack.c.h.b16 %v786
    %v1799 = vunpack.c.l.b16 %v787
    %v1800 = vunpack.c.h.b16 %v787
    %v1801 = vunpack.c.l.b16 %v788
    %v1802 = vunpack.c.h.b16 %v788
    %v1803 = vunpack.c.l.b16 %v789
    %v1804 = vunpack.c.l.b16 %v790
    %v1805 = vunpack.c.h.b16 %v790
    %v1806 = vunpack.c.l.b16 %v791
    %v1807 = vunpack.c.h.b16 %v791
    %v1808 = vunpack.c.l.b16 %v792
    %v1809 = vunpack.c.h.b16 %v792
    %v1810 = vunpack.c.l.b16 %v793
    %v1811 = vunpack.c.l.b16 %v794
    %v1812 = vunpack.c.h.b16 %v794
    %v1813 = vunpack.c.l.b16 %v795
    %v1814 = vunpack.c.h.b16 %v795
    %v1815 = vunpack.c.l.b16 %v796
    %v1816 = vunpack.c.h.b16 %v796
    %v1817 = vunpack.c.l.b16 %v797
    %v1818 = vunpack.c.l.b16 %v798
    %v1819 = vunpack.c.h.b16 %v798
    %v1820 = vunpack.c.l.b16 %v799
    %v1821 = vunpack.c.h.b16 %v799
    %v1822 = vunpack.c.l.b16 %v800
    %v1823 = vunpack.c.h.b16 %v800
    %v1824 = vunpack.c.l.b16 %v801
    %v1825 = vunpack.c.l.b16 %v802
    %v1826 = vunpack.c.h.b16 %v802
    %v1827 = vunpack.c.l.b16 %v803
    %v1828 = vunpack.c.h.b16 %v803
    %v1829 = vunpack.c.l.b16 %v804
    %v1830 = vunpack.c.h.b16 %v804
    %v1831 = vunpack.c.l.b16 %v805
    %v1832 = vunpack.c.l.b16 %v806
    %v1833 = vunpack.c.h.b16 %v806
    %v1834 = vunpack.c.l.b16 %v807
    %v1835 = vunpack.c.h.b16 %v807
    %v1836 = vunpack.c.l.b16 %v808
    %v1837 = vunpack.c.h.b16 %v808
    %v1838 = vunpack.c.l.b16 %v809
    %v1839 = vunpack.c.l.b16 %v810
    %v1840 = vunpack.c.h.b16 %v810
    %v1841 = vunpack.c.l.b16 %v811
    %v1842 = vunpack.c.h.b16 %v811
    %v1843 = vunpack.c.l.b16 %v812
    %v1844 = vunpack.c.h.b16 %v812
    %v1845 = vunpack.c.l.b16 %v813
    %v1846 = vunpack.c.l.b16 %v814
    %v1847 = vunpack.c.h.b16 %v814
    %v1848 = vunpack.c.l.b16 %v815
    %v1849 = vunpack.c.h.b16 %v815
    %v1850 = vunpack.c.l.b16 %v816
    %v1851 = vunpack.c.h.b16 %v816
    %v1852 = vunpack.c.l.b16 %v817
    %v1853 = vunpack.c.l.b16 %v818
    %v1854 = vunpack.c.h.b16 %v818
    %v1855 = vunpack.c.l.b16 %v819
    %v1856 = vunpack.c.h.b16 %v819
    %v1857 = vunpack.c.l.b16 %v820
    %v1858 = vunpack.c.h.b16 %v820
    %v1859 = vunpack.c.l.b16 %v821
    %v1860 = vunpack.c.l.b16 %v822
    %v1861 = vunpack.c.h.b16 %v822
    %v1862 = vunpack.c.l.b16 %v823
    %v1863 = vunpack.c.h.b16 %v823
    %v1864 = vunpack.c.l.b16 %v824
    %v1865 = vunpack.c.h.b16 %v824
    %v1866 = vunpack.c.l.b16 %v825
    %v1867 = vunpack.c.l.b16 %v826
    %v1868 = vunpack.c.h.b16 %v826
    %v1869 = vunpack.c.l.b16 %v827
    %v1870 = vunpack.c.h.b16 %v827
    %v1871 = vunpack.c.l.b16 %v828
    %v1872 = vunpack.c.h.b16 %v828
    %v1873 = vunpack.c.l.b16 %v829
    %v1874 = vunpack.c.l.b16 %v830
    %v1875 = vunpack.c.h.b16 %v830
    %v1876 = vunpack.c.l.b16 %v831
    %v1877 = vunpack.c.h.b16 %v831
    %v1878 = vunpack.c.l.b16 %v832
    %v1879 = vunpack.c.h.b16 %v832
    %v1880 = vunpack.c.l.b16 %v833
    %v1881 = vunpack.c.l.b16 %v834
    %v1882 = vunpack.c.h.b16 %v834
    %v1883 = vunpack.c.l.b16 %v835
    %v1884 = vunpack.c.h.b16 %v835
    %v1885 = vunpack.c.l.b16 %v836
    %v1886 = vunpack.c.h.b16 %v836
    %v1887 = vunpack.c.l.b16 %v837
    %v1888 = vunpack.c.l.b16 %v838
    %v1889 = vunpack.c.h.b16 %v838
    %v1890 = vunpack.c.l.b16 %v839
    %v1891 = vunpack.c.h.b16 %v839
    %v1892 = vunpack.c.l.b16 %v840
    %v1893 = vunpack.c.h.b16 %v840
    %v1894 = vunpack.c.l.b16 %v841
    %v1895 = vunpack.c.l.b16 %v842
    %v1896 = vunpack.c.h.b16 %v842
    %v1897 = vunpack.c.l.b16 %v843
    %v1898 = vunpack.c.h.b16 %v843
    %v1899 = vunpack.c.l.b16 %v844
    %v1900 = vunpack.c.h.b16 %v844
    %v1901 = vunpack.c.l.b16 %v845
    %v1902 = vunpack.c.l.b16 %v846
    %v1903 = vunpack.c.h.b16 %v846
    %v1904 = vunpack.c.l.b16 %v847
    %v1905 = vunpack.c.h.b16 %v847
    %v1906 = vunpack.c.l.b16 %v848
    %v1907 = vunpack.c.h.b16 %v848
    %v1908 = vunpack.c.l.b16 %v849
    %v1909 = vunpack.c.l.b16 %v850
    %v1910 = vunpack.c.h.b16 %v850
    %v1911 = vunpack.c.l.b16 %v851
    %v1912 = vunpack.c.h.b16 %v851
    %v1913 = vunpack.c.l.b16 %v852
    %v1914 = vunpack.c.h.b16 %v852
    %v1915 = vunpack.c.l.b16 %v853
    %v1916 = vunpack.c.l.b16 %v854
    %v1917 = vunpack.c.h.b16 %v854
    %v1918 = vunpack.c.l.b16 %v855
    %v1919 = vunpack.c.h.b16 %v855
    %v1920 = vunpack.c.l.b16 %v856
    %v1921 = vunpack.c.h.b16 %v856
    %v1922 = vunpack.c.l.b16 %v857
    %v1923 = vunpack.c.l.b16 %v858
    %v1924 = vunpack.c.h.b16 %v858
    %v1925 = vunpack.c.l.b16 %v859
    %v1926 = vunpack.c.h.b16 %v859
    %v1927 = vunpack.c.l.b16 %v860
    %v1928 = vunpack.c.h.b16 %v860
    %v1929 = vunpack.c.l.b16 %v861
    %v1930 = vunpack.c.l.b16 %v862
    %v1931 = vunpack.c.h.b16 %v862
    %v1932 = vunpack.c.l.b16 %v863
    %v1933 = vunpack.c.h.b16 %v863
    %v1934 = vunpack.c.l.b16 %v864
    %v1935 = vunpack.c.h.b16 %v864
    %v1936 = vunpack.c.l.b16 %v865
    %v1937 = vunpack.c.l.b16 %v866
    %v1938 = vunpack.c.h.b16 %v866
    %v1939 = vunpack.c.l.b16 %v867
    %v1940 = vunpack.c.h.b16 %v867
    %v1941 = vunpack.c.l.b16 %v868
    %v1942 = vunpack.c.h.b16 %v868
    %v1943 = vunpack.c.l.b16 %v869
    %v1944 = vunpack.c.l.b16 %v870
    %v1945 = vunpack.c.h.b16 %v870
    %v1946 = vunpack.c.l.b16 %v871
    %v1947 = vunpack.c.h.b16 %v871
    %v1948 = vunpack.c.l.b16 %v872
    %v1949 = vunpack.c.h.b16 %v872
    %v1950 = vunpack.c.l.b16 %v873
    %v1951 = vunpack.c.l.b16 %v874
    %v1952 = vunpack.c.h.b16 %v874
    %v1953 = vunpack.c.l.b16 %v875
    %v1954 = vunpack.c.h.b16 %v875
    %v1955 = vunpack.c.l.b16 %v876
    %v1956 = vunpack.c.h.b16 %v876
    %v1957 = vunpack.c.l.b16 %v877
    %v1958 = vunpack.c.l.b16 %v878
    %v1959 = vunpack.c.h.b16 %v878
    %v1960 = vunpack.c.l.b16 %v879
    %v1961 = vunpack.c.h.b16 %v879
    %v1962 = vunpack.c.l.b16 %v880
    %v1963 = vunpack.c.h.b16 %v880
    %v1964 = vunpack.c.l.b16 %v881
    %v1965 = vunpack.c.l.b16 %v882
    %v1966 = vunpack.c.h.b16 %v882
    %v1967 = vunpack.c.l.b16 %v883
    %v1968 = vunpack.c.h.b16 %v883
    %v1969 = vunpack.c.l.b16 %v884
    %v1970 = vunpack.c.h.b16 %v884
    %v1971 = vunpack.c.l.b16 %v885
    %v1972 = vunpack.c.l.b16 %v886
    %v1973 = vunpack.c.h.b16 %v886
    %v1974 = vunpack.c.l.b16 %v887
    %v1975 = vunpack.c.h.b16 %v887
    %v1976 = vunpack.c.l.b16 %v888
    %v1977 = vunpack.c.h.b16 %v888
    %v1978 = vunpack.c.l.b16 %v889
    %v1979 = vunpack.c.l.b16 %v890
    %v1980 = vunpack.c.h.b16 %v890
    %v1981 = vunpack.c.l.b16 %v891
    %v1982 = vunpack.c.h.b16 %v891
    %v1983 = vunpack.c.l.b16 %v892
    %v1984 = vunpack.c.h.b16 %v892
    %v1985 = vunpack.c.l.b16 %v893
    %v1986 = vunpack.c.l.b16 %v894
    %v1987 = vunpack.c.h.b16 %v894
    %v1988 = vunpack.c.l.b16 %v895
    %v1989 = vunpack.c.h.b16 %v895
    %v1990 = vunpack.c.l.b16 %v896
    %v1991 = vunpack.c.h.b16 %v896
    %v1992 = vunpack.c.l.b16 %v897
    %v1993 = vunpack.c.l.b16 %v898
    %v1994 = vunpack.c.h.b16 %v898
    %v1995 = vunpack.c.l.b16 %v899
    %v1996 = vunpack.c.h.b16 %v899
    %v1997 = vunpack.c.l.b16 %v900
    %v1998 = vunpack.c.h.b16 %v900
    %v1999 = vunpack.c.l.b16 %v901
    %v2000 = vunpack.c.l.b16 %v902
    %v2001 = vunpack.c.h.b16 %v902
    %v2002 = vunpack.c.l.b16 %v903
    %v2003 = vunpack.c.h.b16 %v903
    %v2004 = vunpack.c.l.b16 %v904
    %v2005 = vunpack.c.h.b16 %v904
    %v2006 = vunpack.c.l.b16 %v905
    %v2007 = vunpack.c.l.b16 %v906
    %v2008 = vunpack.c.h.b16 %v906
    %v2009 = vunpack.c.l.b16 %v907
    %v2010 = vunpack.c.h.b16 %v907
    %v2011 = vunpack.c.l.b16 %v908
    %v2012 = vunpack.c.h.b16 %v908
    %v2013 = vunpack.c.l.b16 %v909
    %v2014 = vunpack.c.l.b16 %v910
    %v2015 = vunpack.c.h.b16 %v910
    %v2016 = vunpack.c.l.b16 %v911
    %v2017 = vunpack.c.h.b16 %v911
    %v2018 = vunpack.c.l.b16 %v912
    %v2019 = vunpack.c.h.b16 %v912
    %v2020 = vunpack.c.l.b16 %v913
    %v2021 = vunpack.c.l.b16 %v914
    %v2022 = vunpack.c.h.b16 %v914
    %v2023 = vunpack.c.l.b16 %v915
    %v2024 = vunpack.c.h.b16 %v915
    %v2025 = vunpack.c.l.b16 %v916
    %v2026 = vunpack.c.h.b16 %v916
    %v2027 = vunpack.c.l.b16 %v917
    %v2028 = vunpack.c.l.b16 %v918
    %v2029 = vunpack.c.h.b16 %v918
    %v2030 = vunpack.c.l.b16 %v919
    %v2031 = vunpack.c.h.b16 %v919
    %v2032 = vunpack.c.l.b16 %v920
    %v2033 = vunpack.c.h.b16 %v920
    %v2034 = vunpack.c.l.b16 %v921
    %v2035 = vunpack.c.l.b16 %v922
    %v2036 = vunpack.c.h.b16 %v922
    %v2037 = vunpack.c.l.b16 %v923
    %v2038 = vunpack.c.h.b16 %v923
    %v2039 = vunpack.c.l.b16 %v924
    %v2040 = vunpack.c.h.b16 %v924
    %v2041 = vunpack.c.l.b16 %v925
    %v2042 = vunpack.c.l.b16 %v926
    %v2043 = vunpack.c.h.b16 %v926
    %v2044 = vunpack.c.l.b16 %v927
    %v2045 = vunpack.c.h.b16 %v927
    %v2046 = vunpack.c.l.b16 %v928
    %v2047 = vunpack.c.h.b16 %v928
    %v2048 = vunpack.c.l.b16 %v929
    %v2049 = vunpack.c.l.b16 %v930
    %v2050 = vunpack.c.h.b16 %v930
    %v2051 = vunpack.c.l.b16 %v931
    %v2052 = vunpack.c.h.b16 %v931
    %v2053 = vunpack.c.l.b16 %v932
    %v2054 = vunpack.c.h.b16 %v932
    %v2055 = vunpack.c.l.b16 %v933
    %v2056 = vunpack.c.l.b16 %v934
    %v2057 = vunpack.c.h.b16 %v934
    %v2058 = vunpack.c.l.b16 %v935
    %v2059 = vunpack.c.h.b16 %v935
    %v2060 = vunpack.c.l.b16 %v936
    %v2061 = vunpack.c.h.b16 %v936
    %v2062 = vunpack.c.l.b16 %v937
    %v2063 = vunpack.c.l.b16 %v938
    %v2064 = vunpack.c.h.b16 %v938
    %v2065 = vunpack.c.l.b16 %v939
    %v2066 = vunpack.c.h.b16 %v939
    %v2067 = vunpack.c.l.b16 %v940
    %v2068 = vunpack.c.h.b16 %v940
    %v2069 = vunpack.c.l.b16 %v941
    %v2070 = vunpack.c.l.b16 %v942
    %v2071 = vunpack.c.h.b16 %v942
    %v2072 = vunpack.c.l.b16 %v943
    %v2073 = vunpack.c.h.b16 %v943
    %v2074 = vunpack.c.l.b16 %v944
    %v2075 = vunpack.c.h.b16 %v944
    %v2076 = vunpack.c.l.b16 %v945
    %v2077 = vunpack.c.l.b16 %v946
    %v2078 = vunpack.c.h.b16 %v946
    %v2079 = vunpack.c.l.b16 %v947
    %v2080 = vunpack.c.h.b16 %v947
    %v2081 = vunpack.c.l.b16 %v948
    %v2082 = vunpack.c.h.b16 %v948
    %v2083 = vunpack.c.l.b16 %v949
    %v2084 = vunpack.c.l.b16 %v950
    %v2085 = vunpack.c.h.b16 %v950
    %v2086 = vunpack.c.l.b16 %v951
    %v2087 = vunpack.c.h.b16 %v951
    %v2088 = vunpack.c.l.b16 %v952
    %v2089 = vunpack.c.h.b16 %v952
    %v2090 = vunpack.c.l.b16 %v953
    %v2091 = vunpack.c.l.b16 %v954
    %v2092 = vunpack.c.h.b16 %v954
    %v2093 = vunpack.c.l.b16 %v955
    %v2094 = vunpack.c.h.b16 %v955
    %v2095 = vunpack.c.l.b16 %v956
    %v2096 = vunpack.c.h.b16 %v956
    %v2097 = vunpack.c.l.b16 %v957
    %v2098 = vunpack.c.l.b16 %v958
    %v2099 = vunpack.c.h.b16 %v958
    %v2100 = vunpack.c.l.b16 %v959
    %v2101 = vunpack.c.h.b16 %v959
    %v2102 = vunpack.c.l.b16 %v960
    %v2103 = vunpack.c.h.b16 %v960
    %v2104 = vunpack.c.l.b16 %v961
    %v2105 = vunpack.c.l.b16 %v962
    %v2106 = vunpack.c.h.b16 %v962
    %v2107 = vunpack.c.l.b16 %v963
    %v2108 = vunpack.c.h.b16 %v963
    %v2109 = vunpack.c.l.b16 %v964
    %v2110 = vunpack.c.h.b16 %v964
    %v2111 = vunpack.c.l.b16 %v965
    %v2112 = vunpack.c.l.b16 %v966
    %v2113 = vunpack.c.h.b16 %v966
    %v2114 = vunpack.c.l.b16 %v967
    %v2115 = vunpack.c.h.b16 %v967
    %v2116 = vunpack.c.l.b16 %v968
    %v2117 = vunpack.c.h.b16 %v968
    %v2118 = vunpack.c.l.b16 %v969
    %v2119 = vunpack.c.l.b16 %v970
    %v2120 = vunpack.c.h.b16 %v970
    %v2121 = vunpack.c.l.b16 %v971
    %v2122 = vunpack.c.h.b16 %v971
    %v2123 = vunpack.c.l.b16 %v972
    %v2124 = vunpack.c.h.b16 %v972
    %v2125 = vunpack.c.l.b16 %v973
    %v2126 = vunpack.c.l.b16 %v974
    %v2127 = vunpack.c.h.b16 %v974
    %v2128 = vunpack.c.l.b16 %v975
    %v2129 = vunpack.c.h.b16 %v975
    %v2130 = vunpack.c.l.b16 %v976
    %v2131 = vunpack.c.h.b16 %v976
    %v2132 = vunpack.c.l.b16 %v977
    %v2133 = vunpack.c.l.b16 %v978
    %v2134 = vunpack.c.h.b16 %v978
    %v2135 = vunpack.c.l.b16 %v979
    %v2136 = vunpack.c.h.b16 %v979
    %v2137 = vunpack.c.l.b16 %v980
    %v2138 = vunpack.c.h.b16 %v980
    %v2139 = vunpack.c.l.b16 %v981
    %v2140 = vunpack.c.l.b16 %v982
    %v2141 = vunpack.c.h.b16 %v982
    %v2142 = vunpack.c.l.b16 %v983
    %v2143 = vunpack.c.h.b16 %v983
    %v2144 = vunpack.c.l.b16 %v984
    %v2145 = vunpack.c.h.b16 %v984
    %v2146 = vunpack.c.l.b16 %v985
    %v2147 = vunpack.c.l.b16 %v986
    %v2148 = vunpack.c.h.b16 %v986
    %v2149 = vunpack.c.l.b16 %v987
    %v2150 = vunpack.c.h.b16 %v987
    %v2151 = vunpack.c.l.b16 %v988
    %v2152 = vunpack.c.h.b16 %v988
    %v2153 = vunpack.c.l.b16 %v989
    %v2154 = vunpack.c.l.b16 %v990
    %v2155 = vunpack.c.h.b16 %v990
    %v2156 = vunpack.c.l.b16 %v991
    %v2157 = vunpack.c.h.b16 %v991
    %v2158 = vunpack.c.l.b16 %v992
    %v2159 = vunpack.c.h.b16 %v992
    %v2160 = vunpack.c.l.b16 %v993
    %v2161 = vunpack.c.l.b16 %v994
    %v2162 = vunpack.c.h.b16 %v994
    %v2163 = vunpack.c.l.b16 %v995
    %v2164 = vunpack.c.h.b16 %v995
    %v2165 = vunpack.c.l.b16 %v996
    %v2166 = vunpack.c.h.b16 %v996
    %v2167 = vunpack.c.l.b16 %v997
    %v2168 = vunpack.c.l.b16 %v998
    %v2169 = vunpack.c.h.b16 %v998
    %v2170 = vunpack.c.l.b16 %v999
    %v2171 = vunpack.c.h.b16 %v999
    %v2172 = vunpack.c.l.b16 %v1000
    %v2173 = vunpack.c.h.b16 %v1000
    %v2174 = vunpack.c.l.b16 %v1001
    %v2175 = vunpack.c.l.b16 %v1002
    %v2176 = vunpack.c.h.b16 %v1002
    %v2177 = vunpack.c.l.b16 %v1003
    %v2178 = vunpack.c.h.b16 %v1003
    %v2179 = vunpack.c.l.b16 %v1004
    %v2180 = vunpack.c.h.b16 %v1004
    %v2181 = vunpack.c.l.b16 %v1005
    %v2182 = vunpack.c.l.b16 %v1006
    %v2183 = vunpack.c.h.b16 %v1006
    %v2184 = vunpack.c.l.b16 %v1007
    %v2185 = vunpack.c.h.b16 %v1007
    %v2186 = vunpack.c.l.b16 %v1008
    %v2187 = vunpack.c.h.b16 %v1008
    %v2188 = vunpack.c.l.b16 %v1009
    %v2189 = vunpack.c.l.b16 %v1010
    %v2190 = vunpack.c.h.b16 %v1010
    %v2191 = vunpack.c.l.b16 %v1011
    %v2192 = vunpack.c.h.b16 %v1011
    %v2193 = vunpack.c.l.b16 %v1012
    %v2194 = vunpack.c.h.b16 %v1012
    %v2195 = vunpack.c.l.b16 %v1013
    %v2196 = vunpack.c.l.b16 %v1014
    %v2197 = vunpack.c.h.b16 %v1014
    %v2198 = vunpack.c.l.b16 %v1015
    %v2199 = vunpack.c.h.b16 %v1015
    %v2200 = vunpack.c.l.b16 %v1016
    %v2201 = vunpack.c.h.b16 %v1016
    %v2202 = vunpack.c.l.b16 %v1017
    %v2203 = vunpack.c.l.b16 %v1018
    %v2204 = vunpack.c.h.b16 %v1018
    %v2205 = vunpack.c.l.b16 %v1019
    %v2206 = vunpack.c.h.b16 %v1019
    %v2207 = vunpack.c.l.b16 %v1020
    %v2208 = vunpack.c.h.b16 %v1020
    %v2209 = vunpack.c.l.b16 %v1021
    %v2210 = vunpack.c.l.b16 %v1022
    %v2211 = vunpack.c.h.b16 %v1022
    %v2212 = vunpack.c.l.b16 %v1023
    %v2213 = vunpack.c.h.b16 %v1023
    %v2214 = vunpack.c.l.b16 %v1024
    %v2215 = vunpack.c.h.b16 %v1024
    %v2216 = vunpack.c.l.b16 %v1025
    %v2217 = vunpack.c.l.b16 %v1026
    %v2218 = vunpack.c.h.b16 %v1026
    %v2219 = vunpack.c.l.b16 %v1027
    %v2220 = vunpack.c.h.b16 %v1027
    %v2221 = vunpack.c.l.b16 %v1028
    %v2222 = vunpack.c.h.b16 %v1028
    %v2223 = vunpack.c.l.b16 %v1029
    %v2224 = vunpack.c.l.b16 %v1030
    %v2225 = vunpack.c.h.b16 %v1030
    %v2226 = vunpack.c.l.b16 %v1031
    %v2227 = vunpack.c.h.b16 %v1031
    %v2228 = vunpack.c.l.b16 %v1032
    %v2229 = vunpack.c.h.b16 %v1032
    %v2230 = vunpack.c.l.b16 %v1033
    %v2231 = vunpack.c.l.b16 %v1034
    %v2232 = vunpack.c.h.b16 %v1034
    %v2233 = vunpack.c.l.b16 %v1035
    %v2234 = vunpack.c.h.b16 %v1035
    %v2235 = vunpack.c.l.b16 %v1036
    %v2236 = vunpack.c.h.b16 %v1036
    %v2237 = vunpack.c.l.b16 %v1037
    %v2238 = vunpack.c.l.b16 %v1038
    %v2239 = vunpack.c.h.b16 %v1038
    %v2240 = vunpack.c.l.b16 %v1039
    %v2241 = vunpack.c.h.b16 %v1039
    %v2242 = vunpack.c.l.b16 %v1040
    %v2243 = vunpack.c.h.b16 %v1040
    %v2244 = vunpack.c.l.b16 %v1041
    %v2245 = vunpack.c.l.b16 %v1042
    %v2246 = vunpack.c.h.b16 %v1042
    %v2247 = vunpack.c.l.b16 %v1043
    %v2248 = vunpack.c.h.b16 %v1043
    %v2249 = vunpack.c.l.b16 %v1044
    %v2250 = vunpack.c.h.b16 %v1044
    %v2251 = vunpack.c.l.b16 %v1045
    %v2252 = vunpack.c.l.b16 %v1046
    %v2253 = vunpack.c.h.b16 %v1046
    %v2254 = vunpack.c.l.b16 %v1047
    %v2255 = vunpack.c.h.b16 %v1047
    %v2256 = vunpack.c.l.b16 %v1048
    %v2257 = vunpack.c.h.b16 %v1048
    %v2258 = vunpack.c.l.b16 %v1049
    %v2259 = vunpack.c.l.b16 %v1050
    %v2260 = vunpack.c.h.b16 %v1050
    %v2261 = vunpack.c.l.b16 %v1051
    %v2262 = vunpack.c.h.b16 %v1051
    %v2263 = vunpack.c.l.b16 %v1052
    %v2264 = vunpack.c.h.b16 %v1052
    %v2265 = vunpack.c.l.b16 %v1053
    %v2266 = vunpack.c.l.b16 %v1054
    %v2267 = vunpack.c.h.b16 %v1054
    %v2268 = vunpack.c.l.b16 %v1055
    %v2269 = vunpack.c.h.b16 %v1055
    %v2270 = vunpack.c.l.b16 %v1056
    %v2271 = vunpack.c.h.b16 %v1056
    %v2272 = vunpack.c.l.b16 %v1057
    %v2273 = vunpack.c.l.b16 %v1058
    %v2274 = vunpack.c.h.b16 %v1058
    %v2275 = vunpack.c.l.b16 %v1059
    %v2276 = vunpack.c.h.b16 %v1059
    %v2277 = vunpack.c.l.b16 %v1060
    %v2278 = vunpack.c.h.b16 %v1060
    %v2279 = vunpack.c.l.b16 %v1061
    %v2280 = vunpack.c.l.b16 %v1062
    %v2281 = vunpack.c.h.b16 %v1062
    %v2282 = vunpack.c.l.b16 %v1063
    %v2283 = vunpack.c.h.b16 %v1063
    %v2284 = vunpack.c.l.b16 %v1064
    %v2285 = vunpack.c.h.b16 %v1064
    %v2286 = vunpack.c.l.b16 %v1065
    %v2287 = vunpack.c.l.b16 %v1066
    %v2288 = vunpack.c.h.b16 %v1066
    %v2289 = vunpack.c.l.b16 %v1067
    %v2290 = vunpack.c.h.b16 %v1067
    %v2291 = vunpack.c.l.b16 %v1068
    %v2292 = vunpack.c.h.b16 %v1068
    %v2293 = vunpack.c.l.b16 %v1069
    %v2294 = vunpack.c.l.b16 %v1070
    %v2295 = vunpack.c.h.b16 %v1070
    %v2296 = vunpack.c.l.b16 %v1071
    %v2297 = vunpack.c.h.b16 %v1071
    %v2298 = vunpack.c.l.b16 %v1072
    %v2299 = vunpack.c.h.b16 %v1072
    %v2300 = vunpack.c.l.b16 %v1073
    %v2301 = vunpack.c.l.b16 %v1074
    %v2302 = vunpack.c.h.b16 %v1074
    %v2303 = vunpack.c.l.b16 %v1075
    %v2304 = vunpack.c.h.b16 %v1075
    %v2305 = vunpack.c.l.b16 %v1076
    %v2306 = vunpack.c.h.b16 %v1076
    %v2307 = vunpack.c.l.b16 %v1077
    %v2308 = vunpack.c.l.b16 %v1078
    %v2309 = vunpack.c.h.b16 %v1078
    %v2310 = vunpack.c.l.b16 %v1079
    %v2311 = vunpack.c.h.b16 %v1079
    %v2312 = vunpack.c.l.b16 %v1080
    %v2313 = vunpack.c.h.b16 %v1080
    %v2314 = vunpack.c.l.b16 %v1081
    %v2315 = vunpack.c.l.b16 %v1082
    %v2316 = vunpack.c.h.b16 %v1082
    %v2317 = vunpack.c.l.b16 %v1083
    %v2318 = vunpack.c.h.b16 %v1083
    %v2319 = vunpack.c.l.b16 %v1084
    %v2320 = vunpack.c.h.b16 %v1084
    %v2321 = vunpack.c.l.b16 %v1085
    %v2322 = vunpack.c.l.b16 %v1086
    %v2323 = vunpack.c.h.b16 %v1086
    %v2324 = vunpack.c.l.b16 %v1087
    %v2325 = vunpack.c.h.b16 %v1087
    %v2326 = vunpack.c.l.b16 %v1088
    %v2327 = vunpack.c.h.b16 %v1088
    %v2328 = vunpack.c.l.b16 %v1089
    %v2329 = vunpack.c.l.b16 %v1090
    %v2330 = vunpack.c.h.b16 %v1090
    %v2331 = vunpack.c.l.b16 %v1091
    %v2332 = vunpack.c.h.b16 %v1091
    %v2333 = vunpack.c.l.b16 %v1092
    %v2334 = vunpack.c.h.b16 %v1092
    %v2335 = vunpack.c.l.b16 %v1093
    %v2336 = vunpack.c.l.b16 %v1094
    %v2337 = vunpack.c.h.b16 %v1094
    %v2338 = vunpack.c.l.b16 %v1095
    %v2339 = vunpack.c.h.b16 %v1095
    %v2340 = vunpack.c.l.b16 %v1096
    %v2341 = vunpack.c.h.b16 %v1096
    %v2342 = vunpack.c.l.b16 %v1097
    %v2343 = vunpack.c.l.b16 %v1098
    %v2344 = vunpack.c.h.b16 %v1098
    %v2345 = vunpack.c.l.b16 %v1099
    %v2346 = vunpack.c.h.b16 %v1099
    %v2347 = vunpack.c.l.b16 %v1100
    %v2348 = vunpack.c.h.b16 %v1100
    %v2349 = vunpack.c.l.b16 %v1101
    %v2350 = vunpack.c.l.b16 %v1102
    %v2351 = vunpack.c.h.b16 %v1102
    %v2352 = vunpack.c.l.b16 %v1103
    %v2353 = vunpack.c.h.b16 %v1103
    %v2354 = vunpack.c.l.b16 %v1104
    %v2355 = vunpack.c.h.b16 %v1104
    %v2356 = vunpack.c.l.b16 %v1105
    %v2357 = vunpack.c.l.b16 %v1106
    %v2358 = vunpack.c.h.b16 %v1106
    %v2359 = vunpack.c.l.b16 %v1107
    %v2360 = vunpack.c.h.b16 %v1107
    %v2361 = vunpack.c.l.b16 %v1108
    %v2362 = vunpack.c.h.b16 %v1108
    %v2363 = vunpack.c.l.b16 %v1109
    %v2364 = vunpack.c.l.b16 %v1110
    %v2365 = vunpack.c.h.b16 %v1110
    %v2366 = vunpack.c.l.b16 %v1111
    %v2367 = vunpack.c.h.b16 %v1111
    %v2368 = vunpack.c.l.b16 %v1112
    %v2369 = vunpack.c.h.b16 %v1112
    %v2370 = vunpack.c.l.b16 %v1113
    %v2371 = vunpack.c.l.b16 %v1114
    %v2372 = vunpack.c.h.b16 %v1114
    %v2373 = vunpack.c.l.b16 %v1115
    %v2374 = vunpack.c.h.b16 %v1115
    %v2375 = vunpack.c.l.b16 %v1116
    %v2376 = vunpack.c.h.b16 %v1116
    %v2377 = vunpack.c.l.b16 %v1117
    %v2378 = vunpack.c.l.b16 %v1118
    %v2379 = vunpack.c.h.b16 %v1118
    %v2380 = vunpack.c.l.b16 %v1119
    %v2381 = vunpack.c.h.b16 %v1119
    %v2382 = vunpack.c.l.b16 %v1120
    %v2383 = vunpack.c.h.b16 %v1120
    %v2384 = vunpack.c.l.b16 %v1121
    %v2385 = vunpack.c.l.b16 %v1122
    %v2386 = vunpack.c.h.b16 %v1122
    %v2387 = vunpack.c.l.b16 %v1123
    %v2388 = vunpack.c.h.b16 %v1123
    %v2389 = vunpack.c.l.b16 %v1124
    %v2390 = vunpack.c.h.b16 %v1124
    %v2391 = vunpack.c.l.b16 %v1125
    %v2392 = vunpack.c.l.b16 %v1126
    %v2393 = vunpack.c.h.b16 %v1126
    %v2394 = vunpack.c.l.b16 %v1127
    %v2395 = vunpack.c.h.b16 %v1127
    %v2396 = vunpack.c.l.b16 %v1128
    %v2397 = vunpack.c.h.b16 %v1128
    %v2398 = vunpack.c.l.b16 %v1129
    %v2399 = vpack.c.b16 %v1622, %v1615
    %v2400 = vpack.c.b16 %v1623, %v1616
    %v2401 = vpack.c.b16 %v1624, %v1617
    %v2402 = vpack.c.b16 %v1625, %v1618
    %v2403 = vpack.c.b16 %v1626, %v1619
    %v2404 = vpack.c.b16 %v1627, %v1620
    %v2405 = vpack.c.b16 %v1628, %v1621
    %v2406 = vpack.c.b16 %v1636, %v1629
    %v2407 = vpack.c.b16 %v1637, %v1630
    %v2408 = vpack.c.b16 %v1638, %v1631
    %v2409 = vpack.c.b16 %v1639, %v1632
    %v2410 = vpack.c.b16 %v1640, %v1633
    %v2411 = vpack.c.b16 %v1641, %v1634
    %v2412 = vpack.c.b16 %v1642, %v1635
    %v2413 = vpack.c.b16 %v1650, %v1643
    %v2414 = vpack.c.b16 %v1651, %v1644
    %v2415 = vpack.c.b16 %v1652, %v1645
    %v2416 = vpack.c.b16 %v1653, %v1646
    %v2417 = vpack.c.b16 %v1654, %v1647
    %v2418 = vpack.c.b16 %v1655, %v1648
    %v2419 = vpack.c.b16 %v1656, %v1649
    %v2420 = vpack.c.b16 %v1664, %v1657
    %v2421 = vpack.c.b16 %v1665, %v1658
    %v2422 = vpack.c.b16 %v1666, %v1659
    %v2423 = vpack.c.b16 %v1667, %v1660
    %v2424 = vpack.c.b16 %v1668, %v1661
    %v2425 = vpack.c.b16 %v1669, %v1662
    %v2426 = vpack.c.b16 %v1670, %v1663
    %v2427 = vpack.c.b16 %v1678, %v1671
    %v2428 = vpack.c.b16 %v1679, %v1672
    %v2429 = vpack.c.b16 %v1680, %v1673
    %v2430 = vpack.c.b16 %v1681, %v1674
    %v2431 = vpack.c.b16 %v1682, %v1675
    %v2432 = vpack.c.b16 %v1683, %v1676
    %v2433 = vpack.c.b16 %v1684, %v1677
    %v2434 = vpack.c.b16 %v1692, %v1685
    %v2435 = vpack.c.b16 %v1693, %v1686
    %v2436 = vpack.c.b16 %v1694, %v1687
    %v2437 = vpack.c.b16 %v1695, %v1688
    %v2438 = vpack.c.b16 %v1696, %v1689
    %v2439 = vpack.c.b16 %v1697, %v1690
    %v2440 = vpack.c.b16 %v1698, %v1691
    %v2441 = vpack.c.b16 %v1706, %v1699
    %v2442 = vpack.c.b16 %v1707, %v1700
    %v2443 = vpack.c.b16 %v1708, %v1701
    %v2444 = vpack.c.b16 %v1709, %v1702
    %v2445 = vpack.c.b16 %v1710, %v1703
    %v2446 = vpack.c.b16 %v1711, %v1704
    %v2447 = vpack.c.b16 %v1712, %v1705
    %v2448 = vpack.c.b16 %v1720, %v1713
    %v2449 = vpack.c.b16 %v1721, %v1714
    %v2450 = vpack.c.b16 %v1722, %v1715
    %v2451 = vpack.c.b16 %v1723, %v1716
    %v2452 = vpack.c.b16 %v1724, %v1717
    %v2453 = vpack.c.b16 %v1725, %v1718
    %v2454 = vpack.c.b16 %v1726, %v1719
    %v2455 = vpack.c.b16 %v1734, %v1727
    %v2456 = vpack.c.b16 %v1735, %v1728
    %v2457 = vpack.c.b16 %v1736, %v1729
    %v2458 = vpack.c.b16 %v1737, %v1730
    %v2459 = vpack.c.b16 %v1738, %v1731
    %v2460 = vpack.c.b16 %v1739, %v1732
    %v2461 = vpack.c.b16 %v1740, %v1733
    %v2462 = vpack.c.b16 %v1748, %v1741
    %v2463 = vpack.c.b16 %v1749, %v1742
    %v2464 = vpack.c.b16 %v1750, %v1743
    %v2465 = vpack.c.b16 %v1751, %v1744
    %v2466 = vpack.c.b16 %v1752, %v1745
    %v2467 = vpack.c.b16 %v1753, %v1746
    %v2468 = vpack.c.b16 %v1754, %v1747
    %v2469 = vpack.c.b16 %v1762, %v1755
    %v2470 = vpack.c.b16 %v1763, %v1756
    %v2471 = vpack.c.b16 %v1764, %v1757
    %v2472 = vpack.c.b16 %v1765, %v1758
    %v2473 = vpack.c.b16 %v1766, %v1759
    %v2474 = vpack.c.b16 %v1767, %v1760
    %v2475 = vpack.c.b16 %v1768, %v1761
    %v2476 = vpack.c.b16 %v1776, %v1769
    %v2477 = vpack.c.b16 %v1777, %v1770
    %v2478 = vpack.c.b16 %v1778, %v1771
    %v2479 = vpack.c.b16 %v1779, %v1772
    %v2480 = vpack.c.b16 %v1780, %v1773
    %v2481 = vpack.c.b16 %v1781, %v1774
    %v2482 = vpack.c.b16 %v1782, %v1775
    %v2483 = vpack.c.b16 %v1790, %v1783
    %v2484 = vpack.c.b16 %v1791, %v1784
    %v2485 = vpack.c.b16 %v1792, %v1785
    %v2486 = vpack.c.b16 %v1793, %v1786
    %v2487 = vpack.c.b16 %v1794, %v1787
    %v2488 = vpack.c.b16 %v1795, %v1788
    %v2489 = vpack.c.b16 %v1796, %v1789
    %v2490 = vpack.c.b16 %v1804, %v1797
    %v2491 = vpack.c.b16 %v1805, %v1798
    %v2492 = vpack.c.b16 %v1806, %v1799
    %v2493 = vpack.c.b16 %v1807, %v1800
    %v2494 = vpack.c.b16 %v1808, %v1801
    %v2495 = vpack.c.b16 %v1809, %v1802
    %v2496 = vpack.c.b16 %v1810, %v1803
    %v2497 = vpack.c.b16 %v1818, %v1811
    %v2498 = vpack.c.b16 %v1819, %v1812
    %v2499 = vpack.c.b16 %v1820, %v1813
    %v2500 = vpack.c.b16 %v1821, %v1814
    %v2501 = vpack.c.b16 %v1822, %v1815
    %v2502 = vpack.c.b16 %v1823, %v1816
    %v2503 = vpack.c.b16 %v1824, %v1817
    %v2504 = vpack.c.b16 %v1832, %v1825
    %v2505 = vpack.c.b16 %v1833, %v1826
    %v2506 = vpack.c.b16 %v1834, %v1827
    %v2507 = vpack.c.b16 %v1835, %v1828
    %v2508 = vpack.c.b16 %v1836, %v1829
    %v2509 = vpack.c.b16 %v1837, %v1830
    %v2510 = vpack.c.b16 %v1838, %v1831
    %v2511 = vpack.c.b16 %v1846, %v1839
    %v2512 = vpack.c.b16 %v1847, %v1840
    %v2513 = vpack.c.b16 %v1848, %v1841
    %v2514 = vpack.c.b16 %v1849, %v1842
    %v2515 = vpack.c.b16 %v1850, %v1843
    %v2516 = vpack.c.b16 %v1851, %v1844
    %v2517 = vpack.c.b16 %v1852, %v1845
    %v2518 = vpack.c.b16 %v1860, %v1853
    %v2519 = vpack.c.b16 %v1861, %v1854
    %v2520 = vpack.c.b16 %v1862, %v1855
    %v2521 = vpack.c.b16 %v1863, %v1856
    %v2522 = vpack.c.b16 %v1864, %v1857
    %v2523 = vpack.c.b16 %v1865, %v1858
    %v2524 = vpack.c.b16 %v1866, %v1859
    %v2525 = vpack.c.b16 %v1874, %v1867
    %v2526 = vpack.c.b16 %v1875, %v1868
    %v2527 = vpack.c.b16 %v1876, %v1869
    %v2528 = vpack.c.b16 %v1877, %v1870
    %v2529 = vpack.c.b16 %v1878, %v1871
    %v2530 = vpack.c.b16 %v1879, %v1872
    %v2531 = vpack.c.b16 %v1880, %v1873
    %v2532 = vpack.c.b16 %v1888, %v1881
    %v2533 = vpack.c.b16 %v1889, %v1882
    %v2534 = vpack.c.b16 %v1890, %v1883
    %v2535 = vpack.c.b16 %v1891, %v1884
    %v2536 = vpack.c.b16 %v1892, %v1885
    %v2537 = vpack.c.b16 %v1893, %v1886
    %v2538 = vpack.c.b16 %v1894, %v1887
    %v2539 = vpack.c.b16 %v1902, %v1895
    %v2540 = vpack.c.b16 %v1903, %v1896
    %v2541 = vpack.c.b16 %v1904, %v1897
    %v2542 = vpack.c.b16 %v1905, %v1898
    %v2543 = vpack.c.b16 %v1906, %v1899
    %v2544 = vpack.c.b16 %v1907, %v1900
    %v2545 = vpack.c.b16 %v1908, %v1901
    %v2546 = vpack.c.b16 %v1916, %v1909
    %v2547 = vpack.c.b16 %v1917, %v1910
    %v2548 = vpack.c.b16 %v1918, %v1911
    %v2549 = vpack.c.b16 %v1919, %v1912
    %v2550 = vpack.c.b16 %v1920, %v1913
    %v2551 = vpack.c.b16 %v1921, %v1914
    %v2552 = vpack.c.b16 %v1922, %v1915
    %v2553 = vpack.c.b16 %v1930, %v1923
    %v2554 = vpack.c.b16 %v1931, %v1924
    %v2555 = vpack.c.b16 %v1932, %v1925
    %v2556 = vpack.c.b16 %v1933, %v1926
    %v2557 = vpack.c.b16 %v1934, %v1927
    %v2558 = vpack.c.b16 %v1935, %v1928
    %v2559 = vpack.c.b16 %v1936, %v1929
    %v2560 = vpack.c.b16 %v1944, %v1937
    %v2561 = vpack.c.b16 %v1945, %v1938
    %v2562 = vpack.c.b16 %v1946, %v1939
    %v2563 = vpack.c.b16 %v1947, %v1940
    %v2564 = vpack.c.b16 %v1948, %v1941
    %v2565 = vpack.c.b16 %v1949, %v1942
    %v2566 = vpack.c.b16 %v1950, %v1943
    %v2567 = vpack.c.b16 %v1958, %v1951
    %v2568 = vpack.c.b16 %v1959, %v1952
    %v2569 = vpack.c.b16 %v1960, %v1953
    %v2570 = vpack.c.b16 %v1961, %v1954
    %v2571 = vpack.c.b16 %v1962, %v1955
    %v2572 = vpack.c.b16 %v1963, %v1956
    %v2573 = vpack.c.b16 %v1964, %v1957
    %v2574 = vpack.c.b16 %v1972, %v1965
    %v2575 = vpack.c.b16 %v1973, %v1966
    %v2576 = vpack.c.b16 %v1974, %v1967
    %v2577 = vpack.c.b16 %v1975, %v1968
    %v2578 = vpack.c.b16 %v1976, %v1969
    %v2579 = vpack.c.b16 %v1977, %v1970
    %v2580 = vpack.c.b16 %v1978, %v1971
    %v2581 = vpack.c.b16 %v1986, %v1979
    %v2582 = vpack.c.b16 %v1987, %v1980
    %v2583 = vpack.c.b16 %v1988, %v1981
    %v2584 = vpack.c.b16 %v1989, %v1982
    %v2585 = vpack.c.b16 %v1990, %v1983
    %v2586 = vpack.c.b16 %v1991, %v1984
    %v2587 = vpack.c.b16 %v1992, %v1985
    %v2588 = vpack.c.b16 %v2000, %v1993
    %v2589 = vpack.c.b16 %v2001, %v1994
    %v2590 = vpack.c.b16 %v2002, %v1995
    %v2591 = vpack.c.b16 %v2003, %v1996
    %v2592 = vpack.c.b16 %v2004, %v1997
    %v2593 = vpack.c.b16 %v2005, %v1998
    %v2594 = vpack.c.b16 %v2006, %v1999
    %v2595 = vpack.c.b16 %v2014, %v2007
    %v2596 = vpack.c.b16 %v2015, %v2008
    %v2597 = vpack.c.b16 %v2016, %v2009
    %v2598 = vpack.c.b16 %v2017, %v2010
    %v2599 = vpack.c.b16 %v2018, %v2011
    %v2600 = vpack.c.b16 %v2019, %v2012
    %v2601 = vpack.c.b16 %v2020, %v2013
    %v2602 = vpack.c.b16 %v2028, %v2021
    %v2603 = vpack.c.b16 %v2029, %v2022
    %v2604 = vpack.c.b16 %v2030, %v2023
    %v2605 = vpack.c.b16 %v2031, %v2024
    %v2606 = vpack.c.b16 %v2032, %v2025
    %v2607 = vpack.c.b16 %v2033, %v2026
    %v2608 = vpack.c.b16 %v2034, %v2027
    %v2609 = vpack.c.b16 %v2042, %v2035
    %v2610 = vpack.c.b16 %v2043, %v2036
    %v2611 = vpack.c.b16 %v2044, %v2037
    %v2612 = vpack.c.b16 %v2045, %v2038
    %v2613 = vpack.c.b16 %v2046, %v2039
    %v2614 = vpack.c.b16 %v2047, %v2040
    %v2615 = vpack.c.b16 %v2048, %v2041
    %v2616 = vpack.c.b16 %v2056, %v2049
    %v2617 = vpack.c.b16 %v2057, %v2050
    %v2618 = vpack.c.b16 %v2058, %v2051
    %v2619 = vpack.c.b16 %v2059, %v2052
    %v2620 = vpack.c.b16 %v2060, %v2053
    %v2621 = vpack.c.b16 %v2061, %v2054
    %v2622 = vpack.c.b16 %v2062, %v2055
    %v2623 = vpack.c.b16 %v2070, %v2063
    %v2624 = vpack.c.b16 %v2071, %v2064
    %v2625 = vpack.c.b16 %v2072, %v2065
    %v2626 = vpack.c.b16 %v2073, %v2066
    %v2627 = vpack.c.b16 %v2074, %v2067
    %v2628 = vpack.c.b16 %v2075, %v2068
    %v2629 = vpack.c.b16 %v2076, %v2069
    %v2630 = vpack.c.b16 %v2084, %v2077
    %v2631 = vpack.c.b16 %v2085, %v2078
    %v2632 = vpack.c.b16 %v2086, %v2079
    %v2633 = vpack.c.b16 %v2087, %v2080
    %v2634 = vpack.c.b16 %v2088, %v2081
    %v2635 = vpack.c.b16 %v2089, %v2082
    %v2636 = vpack.c.b16 %v2090, %v2083
    %v2637 = vpack.c.b16 %v2098, %v2091
    %v2638 = vpack.c.b16 %v2099, %v2092
    %v2639 = vpack.c.b16 %v2100, %v2093
    %v2640 = vpack.c.b16 %v2101, %v2094
    %v2641 = vpack.c.b16 %v2102, %v2095
    %v2642 = vpack.c.b16 %v2103, %v2096
    %v2643 = vpack.c.b16 %v2104, %v2097
    %v2644 = vpack.c.b16 %v2112, %v2105
    %v2645 = vpack.c.b16 %v2113, %v2106
    %v2646 = vpack.c.b16 %v2114, %v2107
    %v2647 = vpack.c.b16 %v2115, %v2108
    %v2648 = vpack.c.b16 %v2116, %v2109
    %v2649 = vpack.c.b16 %v2117, %v2110
    %v2650 = vpack.c.b16 %v2118, %v2111
    %v2651 = vpack.c.b16 %v2126, %v2119
    %v2652 = vpack.c.b16 %v2127, %v2120
    %v2653 = vpack.c.b16 %v2128, %v2121
    %v2654 = vpack.c.b16 %v2129, %v2122
    %v2655 = vpack.c.b16 %v2130, %v2123
    %v2656 = vpack.c.b16 %v2131, %v2124
    %v2657 = vpack.c.b16 %v2132, %v2125
    %v2658 = vpack.c.b16 %v2140, %v2133
    %v2659 = vpack.c.b16 %v2141, %v2134
    %v2660 = vpack.c.b16 %v2142, %v2135
    %v2661 = vpack.c.b16 %v2143, %v2136
    %v2662 = vpack.c.b16 %v2144, %v2137
    %v2663 = vpack.c.b16 %v2145, %v2138
    %v2664 = vpack.c.b16 %v2146, %v2139
    %v2665 = vpack.c.b16 %v2154, %v2147
    %v2666 = vpack.c.b16 %v2155, %v2148
    %v2667 = vpack.c.b16 %v2156, %v2149
    %v2668 = vpack.c.b16 %v2157, %v2150
    %v2669 = vpack.c.b16 %v2158, %v2151
    %v2670 = vpack.c.b16 %v2159, %v2152
    %v2671 = vpack.c.b16 %v2160, %v2153
    %v2672 = vpack.c.b16 %v2168, %v2161
    %v2673 = vpack.c.b16 %v2169, %v2162
    %v2674 = vpack.c.b16 %v2170, %v2163
    %v2675 = vpack.c.b16 %v2171, %v2164
    %v2676 = vpack.c.b16 %v2172, %v2165
    %v2677 = vpack.c.b16 %v2173, %v2166
    %v2678 = vpack.c.b16 %v2174, %v2167
    %v2679 = vpack.c.b16 %v2182, %v2175
    %v2680 = vpack.c.b16 %v2183, %v2176
    %v2681 = vpack.c.b16 %v2184, %v2177
    %v2682 = vpack.c.b16 %v2185, %v2178
    %v2683 = vpack.c.b16 %v2186, %v2179
    %v2684 = vpack.c.b16 %v2187, %v2180
    %v2685 = vpack.c.b16 %v2188, %v2181
    %v2686 = vpack.c.b16 %v2196, %v2189
    %v2687 = vpack.c.b16 %v2197, %v2190
    %v2688 = vpack.c.b16 %v2198, %v2191
    %v2689 = vpack.c.b16 %v2199, %v2192
    %v2690 = vpack.c.b16 %v2200, %v2193
    %v2691 = vpack.c.b16 %v2201, %v2194
    %v2692 = vpack.c.b16 %v2202, %v2195
    %v2693 = vpack.c.b16 %v2210, %v2203
    %v2694 = vpack.c.b16 %v2211, %v2204
    %v2695 = vpack.c.b16 %v2212, %v2205
    %v2696 = vpack.c.b16 %v2213, %v2206
    %v2697 = vpack.c.b16 %v2214, %v2207
    %v2698 = vpack.c.b16 %v2215, %v2208
    %v2699 = vpack.c.b16 %v2216, %v2209
    %v2700 = vpack.c.b16 %v2224, %v2217
    %v2701 = vpack.c.b16 %v2225, %v2218
    %v2702 = vpack.c.b16 %v2226, %v2219
    %v2703 = vpack.c.b16 %v2227, %v2220
    %v2704 = vpack.c.b16 %v2228, %v2221
    %v2705 = vpack.c.b16 %v2229, %v2222
    %v2706 = vpack.c.b16 %v2230, %v2223
    %v2707 = vpack.c.b16 %v2238, %v2231
    %v2708 = vpack.c.b16 %v2239, %v2232
    %v2709 = vpack.c.b16 %v2240, %v2233
    %v2710 = vpack.c.b16 %v2241, %v2234
    %v2711 = vpack.c.b16 %v2242, %v2235
    %v2712 = vpack.c.b16 %v2243, %v2236
    %v2713 = vpack.c.b16 %v2244, %v2237
    %v2714 = vpack.c.b16 %v2252, %v2245
    %v2715 = vpack.c.b16 %v2253, %v2246
    %v2716 = vpack.c.b16 %v2254, %v2247
    %v2717 = vpack.c.b16 %v2255, %v2248
    %v2718 = vpack.c.b16 %v2256, %v2249
    %v2719 = vpack.c.b16 %v2257, %v2250
    %v2720 = vpack.c.b16 %v2258, %v2251
    %v2721 = vpack.c.b16 %v2266, %v2259
    %v2722 = vpack.c.b16 %v2267, %v2260
    %v2723 = vpack.c.b16 %v2268, %v2261
    %v2724 = vpack.c.b16 %v2269, %v2262
    %v2725 = vpack.c.b16 %v2270, %v2263
    %v2726 = vpack.c.b16 %v2271, %v2264
    %v2727 = vpack.c.b16 %v2272, %v2265
    %v2728 = vpack.c.b16 %v2280, %v2273
    %v2729 = vpack.c.b16 %v2281, %v2274
    %v2730 = vpack.c.b16 %v2282, %v2275
    %v2731 = vpack.c.b16 %v2283, %v2276
    %v2732 = vpack.c.b16 %v2284, %v2277
    %v2733 = vpack.c.b16 %v2285, %v2278
    %v2734 = vpack.c.b16 %v2286, %v2279
    %v2735 = vpack.c.b16 %v2294, %v2287
    %v2736 = vpack.c.b16 %v2295, %v2288
    %v2737 = vpack.c.b16 %v2296, %v2289
    %v2738 = vpack.c.b16 %v2297, %v2290
    %v2739 = vpack.c.b16 %v2298, %v2291
    %v2740 = vpack.c.b16 %v2299, %v2292
    %v2741 = vpack.c.b16 %v2300, %v2293
    %v2742 = vpack.c.b16 %v2308, %v2301
    %v2743 = vpack.c.b16 %v2309, %v2302
    %v2744 = vpack.c.b16 %v2310, %v2303
    %v2745 = vpack.c.b16 %v2311, %v2304
    %v2746 = vpack.c.b16 %v2312, %v2305
    %v2747 = vpack.c.b16 %v2313, %v2306
    %v2748 = vpack.c.b16 %v2314, %v2307
    %v2749 = vpack.c.b16 %v2322, %v2315
    %v2750 = vpack.c.b16 %v2323, %v2316
    %v2751 = vpack.c.b16 %v2324, %v2317
    %v2752 = vpack.c.b16 %v2325, %v2318
    %v2753 = vpack.c.b16 %v2326, %v2319
    %v2754 = vpack.c.b16 %v2327, %v2320
    %v2755 = vpack.c.b16 %v2328, %v2321
    %v2756 = vpack.c.b16 %v2336, %v2329
    %v2757 = vpack.c.b16 %v2337, %v2330
    %v2758 = vpack.c.b16 %v2338, %v2331
    %v2759 = vpack.c.b16 %v2339, %v2332
    %v2760 = vpack.c.b16 %v2340, %v2333
    %v2761 = vpack.c.b16 %v2341, %v2334
    %v2762 = vpack.c.b16 %v2342, %v2335
    %v2763 = vpack.c.b16 %v2350, %v2343
    %v2764 = vpack.c.b16 %v2351, %v2344
    %v2765 = vpack.c.b16 %v2352, %v2345
    %v2766 = vpack.c.b16 %v2353, %v2346
    %v2767 = vpack.c.b16 %v2354, %v2347
    %v2768 = vpack.c.b16 %v2355, %v2348
    %v2769 = vpack.c.b16 %v2356, %v2349
    %v2770 = vpack.c.b16 %v2364, %v2357
    %v2771 = vpack.c.b16 %v2365, %v2358
    %v2772 = vpack.c.b16 %v2366, %v2359
    %v2773 = vpack.c.b16 %v2367, %v2360
    %v2774 = vpack.c.b16 %v2368, %v2361
    %v2775 = vpack.c.b16 %v2369, %v2362
    %v2776 = vpack.c.b16 %v2370, %v2363
    %v2777 = vpack.c.b16 %v2378, %v2371
    %v2778 = vpack.c.b16 %v2379, %v2372
    %v2779 = vpack.c.b16 %v2380, %v2373
    %v2780 = vpack.c.b16 %v2381, %v2374
    %v2781 = vpack.c.b16 %v2382, %v2375
    %v2782 = vpack.c.b16 %v2383, %v2376
    %v2783 = vpack.c.b16 %v2384, %v2377
    %v2784 = vpack.c.b16 %v2392, %v2385
    %v2785 = vpack.c.b16 %v2393, %v2386
    %v2786 = vpack.c.b16 %v2394, %v2387
    %v2787 = vpack.c.b16 %v2395, %v2388
    %v2788 = vpack.c.b16 %v2396, %v2389
    %v2789 = vpack.c.b16 %v2397, %v2390
    %v2790 = vpack.c.b16 %v2398, %v2391
    %3183 = vmatprep.subr.bf16.mxu0 %v2400
    %3184 = vmatpush1.bf16.msra.mxu0 %v2399
    %3185 = vmatprep.subr.bf16.mxu0 %v2407
    %3186 = vmatpush1.bf16.msra.mxu0 %v2406
    %3187 = vmatprep.subr.bf16.mxu0 %v2414
    %3188 = vmatpush1.bf16.msra.mxu0 %v2413
    %3189 = vmatprep.subr.bf16.mxu0 %v2421
    %3190 = vmatpush1.bf16.msra.mxu0 %v2420
    %3191 = vmatprep.subr.bf16.mxu0 %v2428
    %3192 = vmatpush1.bf16.msra.mxu0 %v2427
    %3193 = vmatprep.subr.bf16.mxu0 %v2435
    %3194 = vmatpush1.bf16.msra.mxu0 %v2434
    %3195 = vmatprep.subr.bf16.mxu0 %v2442
    %3196 = vmatpush1.bf16.msra.mxu0 %v2441
    %3197 = vmatprep.subr.bf16.mxu0 %v2449
    %3198 = vmatpush1.bf16.msra.mxu0 %v2448
    %3199 = vmatprep.subr.bf16.mxu0 %v2456
    %3200 = vmatpush1.bf16.msra.mxu0 %v2455
    %3201 = vmatprep.subr.bf16.mxu0 %v2463
    %3202 = vmatpush1.bf16.msra.mxu0 %v2462
    %3203 = vmatprep.subr.bf16.mxu0 %v2470
    %3204 = vmatpush1.bf16.msra.mxu0 %v2469
    %3205 = vmatprep.subr.bf16.mxu0 %v2477
    %3206 = vmatpush1.bf16.msra.mxu0 %v2476
    %3207 = vmatprep.subr.bf16.mxu0 %v2484
    %3208 = vmatpush1.bf16.msra.mxu0 %v2483
    %3209 = vmatprep.subr.bf16.mxu0 %v2491
    %3210 = vmatpush1.bf16.msra.mxu0 %v2490
    %3211 = vmatprep.subr.bf16.mxu0 %v2498
    %3212 = vmatpush1.bf16.msra.mxu0 %v2497
    %3213 = vmatprep.subr.bf16.mxu0 %v2505
    %3214 = vmatpush1.bf16.msra.mxu0 %v2504
    %3215 = vmatprep.mubr.bf16.mxu0 %v676
    %3216 = vmatmul.mubr.bf16.gmra.mrb[0].mxu0 %v675
    %v3217 = vpop.f32.mrb[0].mxu0
    %v3218 = vadd.f32 %v1135, %v3217
    %v3219 = vpop.f32.mrb[0].mxu0
    %v3220 = vadd.f32 %v1139, %v3219
    %v3221 = vpop.f32.mrb[0].mxu0
    %v3222 = vpop.f32.mrb[0].mxu0
    %3223 = vdwg.mxu0
    %3224 = vmatprep.subr.bf16.mxu0 %v2512
    %3225 = vmatpush1.bf16.msra.mxu0 %v2511
    %3226 = vmatprep.subr.bf16.mxu0 %v2519
    %3227 = vmatpush1.bf16.msra.mxu0 %v2518
    %3228 = vmatprep.subr.bf16.mxu0 %v2526
    %3229 = vmatpush1.bf16.msra.mxu0 %v2525
    %3230 = vmatprep.subr.bf16.mxu0 %v2533
    %3231 = vmatpush1.bf16.msra.mxu0 %v2532
    %3232 = vmatprep.subr.bf16.mxu0 %v2540
    %3233 = vmatpush1.bf16.msra.mxu0 %v2539
    %3234 = vmatprep.subr.bf16.mxu0 %v2547
    %3235 = vmatpush1.bf16.msra.mxu0 %v2546
    %3236 = vmatprep.subr.bf16.mxu0 %v2554
    %3237 = vmatpush1.bf16.msra.mxu0 %v2553
    %3238 = vmatprep.subr.bf16.mxu0 %v2561
    %3239 = vmatpush1.bf16.msra.mxu0 %v2560
    %3240 = vmatprep.subr.bf16.mxu0 %v2568
    %3241 = vmatpush1.bf16.msra.mxu0 %v2567
    %3242 = vmatprep.subr.bf16.mxu0 %v2575
    %3243 = vmatpush1.bf16.msra.mxu0 %v2574
    %3244 = vmatprep.subr.bf16.mxu0 %v2582
    %3245 = vmatpush1.bf16.msra.mxu0 %v2581
    %3246 = vmatprep.subr.bf16.mxu0 %v2589
    %3247 = vmatpush1.bf16.msra.mxu0 %v2588
    %3248 = vmatprep.subr.bf16.mxu0 %v2596
    %3249 = vmatpush1.bf16.msra.mxu0 %v2595
    %3250 = vmatprep.subr.bf16.mxu0 %v2603
    %3251 = vmatpush1.bf16.msra.mxu0 %v2602
    %3252 = vmatprep.subr.bf16.mxu0 %v2610
    %3253 = vmatpush1.bf16.msra.mxu0 %v2609
    %3254 = vmatprep.subr.bf16.mxu0 %v2617
    %3255 = vmatpush1.bf16.msra.mxu0 %v2616
    %3256 = vmatprep.mubr.bf16.mxu0 %v678
    %3257 = vmatmul.mubr.bf16.gmra.mrb[0].mxu0 %v677
    %v3258 = vpop.f32.mrb[0].mxu0
    %v3259 = vadd.f32 %v3218, %v3258
    %v3260 = vpop.f32.mrb[0].mxu0
    %v3261 = vadd.f32 %v3220, %v3260
    %v3262 = vpop.f32.mrb[0].mxu0
    %v3263 = vpop.f32.mrb[0].mxu0
    %3264 = vdwg.mxu0
    %3265 = vmatprep.subr.bf16.mxu0 %v2624
    %3266 = vmatpush1.bf16.msra.mxu0 %v2623
    %3267 = vmatprep.subr.bf16.mxu0 %v2631
    %3268 = vmatpush1.bf16.msra.mxu0 %v2630
    %3269 = vmatprep.subr.bf16.mxu0 %v2638
    %3270 = vmatpush1.bf16.msra.mxu0 %v2637
    %3271 = vmatprep.subr.bf16.mxu0 %v2645
    %3272 = vmatpush1.bf16.msra.mxu0 %v2644
    %3273 = vmatprep.subr.bf16.mxu0 %v2652
    %3274 = vmatpush1.bf16.msra.mxu0 %v2651
    %3275 = vmatprep.subr.bf16.mxu0 %v2659
    %3276 = vmatpush1.bf16.msra.mxu0 %v2658
    %3277 = vmatprep.subr.bf16.mxu0 %v2666
    %3278 = vmatpush1.bf16.msra.mxu0 %v2665
    %3279 = vmatprep.subr.bf16.mxu0 %v2673
    %3280 = vmatpush1.bf16.msra.mxu0 %v2672
    %3281 = vmatprep.subr.bf16.mxu0 %v2680
    %3282 = vmatpush1.bf16.msra.mxu0 %v2679
    %3283 = vmatprep.subr.bf16.mxu0 %v2687
    %3284 = vmatpush1.bf16.msra.mxu0 %v2686
    %3285 = vmatprep.subr.bf16.mxu0 %v2694
    %3286 = vmatpush1.bf16.msra.mxu0 %v2693
    %3287 = vmatprep.subr.bf16.mxu0 %v2701
    %3288 = vmatpush1.bf16.msra.mxu0 %v2700
    %3289 = vmatprep.subr.bf16.mxu0 %v2708
    %3290 = vmatpush1.bf16.msra.mxu0 %v2707
    %3291 = vmatprep.subr.bf16.mxu0 %v2715
    %3292 = vmatpush1.bf16.msra.mxu0 %v2714
    %3293 = vmatprep.subr.bf16.mxu0 %v2722
    %3294 = vmatpush1.bf16.msra.mxu0 %v2721
    %3295 = vmatprep.subr.bf16.mxu0 %v2729
    %3296 = vmatpush1.bf16.msra.mxu0 %v2728
    %3297 = vmatprep.mubr.bf16.mxu0 %v680
    %3298 = vmatmul.mubr.bf16.gmra.mrb[0].mxu0 %v679
    %v3299 = vpop.f32.mrb[0].mxu0
    %v3300 = vadd.f32 %v3259, %v3299
    %v3301 = vpop.f32.mrb[0].mxu0
    %v3302 = vadd.f32 %v3261, %v3301
    %v3303 = vpop.f32.mrb[0].mxu0
    %v3304 = vpop.f32.mrb[0].mxu0
    %3305 = vdwg.mxu0
    %3306 = vmatprep.subr.bf16.mxu0 %v2736
    %3307 = vmatpush1.bf16.msra.mxu0 %v2735
    %3308 = vmatprep.subr.bf16.mxu0 %v2743
    %3309 = vmatpush1.bf16.msra.mxu0 %v2742
    %3310 = vmatprep.subr.bf16.mxu0 %v2750
    %3311 = vmatpush1.bf16.msra.mxu0 %v2749
    %3312 = vmatprep.subr.bf16.mxu0 %v2757
    %3313 = vmatpush1.bf16.msra.mxu0 %v2756
    %3314 = vmatprep.subr.bf16.mxu0 %v2764
    %3315 = vmatpush1.bf16.msra.mxu0 %v2763
    %3316 = vmatprep.subr.bf16.mxu0 %v2771
    %3317 = vmatpush1.bf16.msra.mxu0 %v2770
    %3318 = vmatprep.subr.bf16.mxu0 %v2778
    %3319 = vmatpush1.bf16.msra.mxu0 %v2777
    %3320 = vmatprep.subr.bf16.mxu0 %v2785
    %3321 = vmatpush1.bf16.msra.mxu0 %v2784
    %3322 = vmatprep.subr.bf16.mxu0 0
    %3323 = vmatpush1.bf16.msra.mxu0 0
    %3324 = vmatprep.subr.bf16.mxu0 0
    %3325 = vmatpush1.bf16.msra.mxu0 0
    %3326 = vmatprep.subr.bf16.mxu0 0
    %3327 = vmatpush1.bf16.msra.mxu0 0
    %3328 = vmatprep.subr.bf16.mxu0 0
    %3329 = vmatpush1.bf16.msra.mxu0 0
    %3330 = vmatprep.subr.bf16.mxu0 0
    %3331 = vmatpush1.bf16.msra.mxu0 0
    %3332 = vmatprep.subr.bf16.mxu0 0
    %3333 = vmatpush1.bf16.msra.mxu0 0
    %3334 = vmatprep.subr.bf16.mxu0 0
    %3335 = vmatpush1.bf16.msra.mxu0 0
    %3336 = vmatprep.subr.bf16.mxu0 0
    %3337 = vmatpush1.bf16.msra.mxu0 0
    %3338 = vmatprep.mubr.bf16.mxu0 0
    %3339 = vmatmul.mubr.bf16.gmra.mrb[0].mxu0 %v681
    %v3340 = vpop.f32.mrb[0].mxu0
    %v3341 = vadd.f32 %v3300, %v3340
    %v3342 = vpop.f32.mrb[0].mxu0
    %v3343 = vadd.f32 %v3302, %v3342
    %v3344 = vpop.f32.mrb[0].mxu0
    %v3345 = vpop.f32.mrb[0].mxu0
    %3346 = vdwg.mxu0
    %3347 = vmatprep.subr.bf16.mxu0 %v2402
    %3348 = vmatpush1.bf16.msra.mxu0 %v2401
    %3349 = vmatprep.subr.bf16.mxu0 %v2409
    %3350 = vmatpush1.bf16.msra.mxu0 %v2408
    %3351 = vmatprep.subr.bf16.mxu0 %v2416
    %3352 = vmatpush1.bf16.msra.mxu0 %v2415
    %3353 = vmatprep.subr.bf16.mxu0 %v2423
    %3354 = vmatpush1.bf16.msra.mxu0 %v2422
    %3355 = vmatprep.subr.bf16.mxu0 %v2430
    %3356 = vmatpush1.bf16.msra.mxu0 %v2429
    %3357 = vmatprep.subr.bf16.mxu0 %v2437
    %3358 = vmatpush1.bf16.msra.mxu0 %v2436
    %3359 = vmatprep.subr.bf16.mxu0 %v2444
    %3360 = vmatpush1.bf16.msra.mxu0 %v2443
    %3361 = vmatprep.subr.bf16.mxu0 %v2451
    %3362 = vmatpush1.bf16.msra.mxu0 %v2450
    %3363 = vmatprep.subr.bf16.mxu0 %v2458
    %3364 = vmatpush1.bf16.msra.mxu0 %v2457
    %3365 = vmatprep.subr.bf16.mxu0 %v2465
    %3366 = vmatpush1.bf16.msra.mxu0 %v2464
    %3367 = vmatprep.subr.bf16.mxu0 %v2472
    %3368 = vmatpush1.bf16.msra.mxu0 %v2471
    %3369 = vmatprep.subr.bf16.mxu0 %v2479
    %3370 = vmatpush1.bf16.msra.mxu0 %v2478
    %3371 = vmatprep.subr.bf16.mxu0 %v2486
    %3372 = vmatpush1.bf16.msra.mxu0 %v2485
    %3373 = vmatprep.subr.bf16.mxu0 %v2493
    %3374 = vmatpush1.bf16.msra.mxu0 %v2492
    %3375 = vmatprep.subr.bf16.mxu0 %v2500
    %3376 = vmatpush1.bf16.msra.mxu0 %v2499
    %3377 = vmatprep.subr.bf16.mxu0 %v2507
    %3378 = vmatpush1.bf16.msra.mxu0 %v2506
    %3379 = vmatprep.mubr.bf16.mxu0 %v676
    %3380 = vmatmul.mubr.bf16.gmra.mrb[0].mxu0 %v675
    %v3381 = vpop.f32.mrb[0].mxu0
    %v3382 = vadd.f32 %v1143, %v3381
    %v3383 = vpop.f32.mrb[0].mxu0
    %v3384 = vadd.f32 %v1147, %v3383
    %v3385 = vpop.f32.mrb[0].mxu0
    %v3386 = vpop.f32.mrb[0].mxu0
    %3387 = vdwg.mxu0
    %3388 = vmatprep.subr.bf16.mxu0 %v2514
    %3389 = vmatpush1.bf16.msra.mxu0 %v2513
    %3390 = vmatprep.subr.bf16.mxu0 %v2521
    %3391 = vmatpush1.bf16.msra.mxu0 %v2520
    %3392 = vmatprep.subr.bf16.mxu0 %v2528
    %3393 = vmatpush1.bf16.msra.mxu0 %v2527
    %3394 = vmatprep.subr.bf16.mxu0 %v2535
    %3395 = vmatpush1.bf16.msra.mxu0 %v2534
    %3396 = vmatprep.subr.bf16.mxu0 %v2542
    %3397 = vmatpush1.bf16.msra.mxu0 %v2541
    %3398 = vmatprep.subr.bf16.mxu0 %v2549
    %3399 = vmatpush1.bf16.msra.mxu0 %v2548
    %3400 = vmatprep.subr.bf16.mxu0 %v2556
    %3401 = vmatpush1.bf16.msra.mxu0 %v2555
    %3402 = vmatprep.subr.bf16.mxu0 %v2563
    %3403 = vmatpush1.bf16.msra.mxu0 %v2562
    %3404 = vmatprep.subr.bf16.mxu0 %v2570
    %3405 = vmatpush1.bf16.msra.mxu0 %v2569
    %3406 = vmatprep.subr.bf16.mxu0 %v2577
    %3407 = vmatpush1.bf16.msra.mxu0 %v2576
    %3408 = vmatprep.subr.bf16.mxu0 %v2584
    %3409 = vmatpush1.bf16.msra.mxu0 %v2583
    %3410 = vmatprep.subr.bf16.mxu0 %v2591
    %3411 = vmatpush1.bf16.msra.mxu0 %v2590
    %3412 = vmatprep.subr.bf16.mxu0 %v2598
    %3413 = vmatpush1.bf16.msra.mxu0 %v2597
    %3414 = vmatprep.subr.bf16.mxu0 %v2605
    %3415 = vmatpush1.bf16.msra.mxu0 %v2604
    %3416 = vmatprep.subr.bf16.mxu0 %v2612
    %3417 = vmatpush1.bf16.msra.mxu0 %v2611
    %3418 = vmatprep.subr.bf16.mxu0 %v2619
    %3419 = vmatpush1.bf16.msra.mxu0 %v2618
    %3420 = vmatprep.mubr.bf16.mxu0 %v678
    %3421 = vmatmul.mubr.bf16.gmra.mrb[0].mxu0 %v677
    %v3422 = vpop.f32.mrb[0].mxu0
    %v3423 = vadd.f32 %v3382, %v3422
    %v3424 = vpop.f32.mrb[0].mxu0
    %v3425 = vadd.f32 %v3384, %v3424
    %v3426 = vpop.f32.mrb[0].mxu0
    %v3427 = vpop.f32.mrb[0].mxu0
    %3428 = vdwg.mxu0
    %3429 = vmatprep.subr.bf16.mxu0 %v2626
    %3430 = vmatpush1.bf16.msra.mxu0 %v2625
    %3431 = vmatprep.subr.bf16.mxu0 %v2633
    %3432 = vmatpush1.bf16.msra.mxu0 %v2632
    %3433 = vmatprep.subr.bf16.mxu0 %v2640
    %3434 = vmatpush1.bf16.msra.mxu0 %v2639
    %3435 = vmatprep.subr.bf16.mxu0 %v2647
    %3436 = vmatpush1.bf16.msra.mxu0 %v2646
    %3437 = vmatprep.subr.bf16.mxu0 %v2654
    %3438 = vmatpush1.bf16.msra.mxu0 %v2653
    %3439 = vmatprep.subr.bf16.mxu0 %v2661
    %3440 = vmatpush1.bf16.msra.mxu0 %v2660
    %3441 = vmatprep.subr.bf16.mxu0 %v2668
    %3442 = vmatpush1.bf16.msra.mxu0 %v2667
    %3443 = vmatprep.subr.bf16.mxu0 %v2675
    %3444 = vmatpush1.bf16.msra.mxu0 %v2674
    %3445 = vmatprep.subr.bf16.mxu0 %v2682
    %3446 = vmatpush1.bf16.msra.mxu0 %v2681
    %3447 = vmatprep.subr.bf16.mxu0 %v2689
    %3448 = vmatpush1.bf16.msra.mxu0 %v2688
    %3449 = vmatprep.subr.bf16.mxu0 %v2696
    %3450 = vmatpush1.bf16.msra.mxu0 %v2695
    %3451 = vmatprep.subr.bf16.mxu0 %v2703
    %3452 = vmatpush1.bf16.msra.mxu0 %v2702
    %3453 = vmatprep.subr.bf16.mxu0 %v2710
    %3454 = vmatpush1.bf16.msra.mxu0 %v2709
    %3455 = vmatprep.subr.bf16.mxu0 %v2717
    %3456 = vmatpush1.bf16.msra.mxu0 %v2716
    %3457 = vmatprep.subr.bf16.mxu0 %v2724
    %3458 = vmatpush1.bf16.msra.mxu0 %v2723
    %3459 = vmatprep.subr.bf16.mxu0 %v2731
    %3460 = vmatpush1.bf16.msra.mxu0 %v2730
    %3461 = vmatprep.mubr.bf16.mxu0 %v680
    %3462 = vmatmul.mubr.bf16.gmra.mrb[0].mxu0 %v679
    %v3463 = vpop.f32.mrb[0].mxu0
    %v3464 = vadd.f32 %v3423, %v3463
    %v3465 = vpop.f32.mrb[0].mxu0
    %v3466 = vadd.f32 %v3425, %v3465
    %v3467 = vpop.f32.mrb[0].mxu0
    %v3468 = vpop.f32.mrb[0].mxu0
    %3469 = vdwg.mxu0
    %3470 = vmatprep.subr.bf16.mxu0 %v2738
    %3471 = vmatpush1.bf16.msra.mxu0 %v2737
    %3472 = vmatprep.subr.bf16.mxu0 %v2745
    %3473 = vmatpush1.bf16.msra.mxu0 %v2744
    %3474 = vmatprep.subr.bf16.mxu0 %v2752
    %3475 = vmatpush1.bf16.msra.mxu0 %v2751
    %3476 = vmatprep.subr.bf16.mxu0 %v2759
    %3477 = vmatpush1.bf16.msra.mxu0 %v2758
    %3478 = vmatprep.subr.bf16.mxu0 %v2766
    %3479 = vmatpush1.bf16.msra.mxu0 %v2765
    %3480 = vmatprep.subr.bf16.mxu0 %v2773
    %3481 = vmatpush1.bf16.msra.mxu0 %v2772
    %3482 = vmatprep.subr.bf16.mxu0 %v2780
    %3483 = vmatpush1.bf16.msra.mxu0 %v2779
    %3484 = vmatprep.subr.bf16.mxu0 %v2787
    %3485 = vmatpush1.bf16.msra.mxu0 %v2786
    %3486 = vmatprep.subr.bf16.mxu0 0
    %3487 = vmatpush1.bf16.msra.mxu0 0
    %3488 = vmatprep.subr.bf16.mxu0 0
    %3489 = vmatpush1.bf16.msra.mxu0 0
    %3490 = vmatprep.subr.bf16.mxu0 0
    %3491 = vmatpush1.bf16.msra.mxu0 0
    %3492 = vmatprep.subr.bf16.mxu0 0
    %3493 = vmatpush1.bf16.msra.mxu0 0
    %3494 = vmatprep.subr.bf16.mxu0 0
    %3495 = vmatpush1.bf16.msra.mxu0 0
    %3496 = vmatprep.subr.bf16.mxu0 0
    %3497 = vmatpush1.bf16.msra.mxu0 0
    %3498 = vmatprep.subr.bf16.mxu0 0
    %3499 = vmatpush1.bf16.msra.mxu0 0
    %3500 = vmatprep.subr.bf16.mxu0 0
    %3501 = vmatpush1.bf16.msra.mxu0 0
    %3502 = vmatprep.mubr.bf16.mxu0 0
    %3503 = vmatmul.mubr.bf16.gmra.mrb[0].mxu0 %v681
    %v3504 = vpop.f32.mrb[0].mxu0
    %v3505 = vadd.f32 %v3464, %v3504
    %v3506 = vpop.f32.mrb[0].mxu0
    %v3507 = vadd.f32 %v3466, %v3506
    %v3508 = vpop.f32.mrb[0].mxu0
    %v3509 = vpop.f32.mrb[0].mxu0
    %3510 = vdwg.mxu0
    %3511 = vmatprep.subr.bf16.mxu0 %v2404
    %3512 = vmatpush1.bf16.msra.mxu0 %v2403
    %3513 = vmatprep.subr.bf16.mxu0 %v2411
    %3514 = vmatpush1.bf16.msra.mxu0 %v2410
    %3515 = vmatprep.subr.bf16.mxu0 %v2418
    %3516 = vmatpush1.bf16.msra.mxu0 %v2417
    %3517 = vmatprep.subr.bf16.mxu0 %v2425
    %3518 = vmatpush1.bf16.msra.mxu0 %v2424
    %3519 = vmatprep.subr.bf16.mxu0 %v2432
    %3520 = vmatpush1.bf16.msra.mxu0 %v2431
    %3521 = vmatprep.subr.bf16.mxu0 %v2439
    %3522 = vmatpush1.bf16.msra.mxu0 %v2438
    %3523 = vmatprep.subr.bf16.mxu0 %v2446
    %3524 = vmatpush1.bf16.msra.mxu0 %v2445
    %3525 = vmatprep.subr.bf16.mxu0 %v2453
    %3526 = vmatpush1.bf16.msra.mxu0 %v2452
    %3527 = vmatprep.subr.bf16.mxu0 %v2460
    %3528 = vmatpush1.bf16.msra.mxu0 %v2459
    %3529 = vmatprep.subr.bf16.mxu0 %v2467
    %3530 = vmatpush1.bf16.msra.mxu0 %v2466
    %3531 = vmatprep.subr.bf16.mxu0 %v2474
    %3532 = vmatpush1.bf16.msra.mxu0 %v2473
    %3533 = vmatprep.subr.bf16.mxu0 %v2481
    %3534 = vmatpush1.bf16.msra.mxu0 %v2480
    %3535 = vmatprep.subr.bf16.mxu0 %v2488
    %3536 = vmatpush1.bf16.msra.mxu0 %v2487
    %3537 = vmatprep.subr.bf16.mxu0 %v2495
    %3538 = vmatpush1.bf16.msra.mxu0 %v2494
    %3539 = vmatprep.subr.bf16.mxu0 %v2502
    %3540 = vmatpush1.bf16.msra.mxu0 %v2501
    %3541 = vmatprep.subr.bf16.mxu0 %v2509
    %3542 = vmatpush1.bf16.msra.mxu0 %v2508
    %3543 = vmatprep.mubr.bf16.mxu0 %v676
    %3544 = vmatmul.mubr.bf16.gmra.mrb[0].mxu0 %v675
    %v3545 = vpop.f32.mrb[0].mxu0
    %v3546 = vadd.f32 %v1151, %v3545
    %v3547 = vpop.f32.mrb[0].mxu0
    %v3548 = vadd.f32 %v1155, %v3547
    %v3549 = vpop.f32.mrb[0].mxu0
    %v3550 = vpop.f32.mrb[0].mxu0
    %3551 = vdwg.mxu0
    %3552 = vmatprep.subr.bf16.mxu0 %v2516
    %3553 = vmatpush1.bf16.msra.mxu0 %v2515
    %3554 = vmatprep.subr.bf16.mxu0 %v2523
    %3555 = vmatpush1.bf16.msra.mxu0 %v2522
    %3556 = vmatprep.subr.bf16.mxu0 %v2530
    %3557 = vmatpush1.bf16.msra.mxu0 %v2529
    %3558 = vmatprep.subr.bf16.mxu0 %v2537
    %3559 = vmatpush1.bf16.msra.mxu0 %v2536
    %3560 = vmatprep.subr.bf16.mxu0 %v2544
    %3561 = vmatpush1.bf16.msra.mxu0 %v2543
    %3562 = vmatprep.subr.bf16.mxu0 %v2551
    %3563 = vmatpush1.bf16.msra.mxu0 %v2550
    %3564 = vmatprep.subr.bf16.mxu0 %v2558
    %3565 = vmatpush1.bf16.msra.mxu0 %v2557
    %3566 = vmatprep.subr.bf16.mxu0 %v2565
    %3567 = vmatpush1.bf16.msra.mxu0 %v2564
    %3568 = vmatprep.subr.bf16.mxu0 %v2572
    %3569 = vmatpush1.bf16.msra.mxu0 %v2571
    %3570 = vmatprep.subr.bf16.mxu0 %v2579
    %3571 = vmatpush1.bf16.msra.mxu0 %v2578
    %3572 = vmatprep.subr.bf16.mxu0 %v2586
    %3573 = vmatpush1.bf16.msra.mxu0 %v2585
    %3574 = vmatprep.subr.bf16.mxu0 %v2593
    %3575 = vmatpush1.bf16.msra.mxu0 %v2592
    %3576 = vmatprep.subr.bf16.mxu0 %v2600
    %3577 = vmatpush1.bf16.msra.mxu0 %v2599
    %3578 = vmatprep.subr.bf16.mxu0 %v2607
    %3579 = vmatpush1.bf16.msra.mxu0 %v2606
    %3580 = vmatprep.subr.bf16.mxu0 %v2614
    %3581 = vmatpush1.bf16.msra.mxu0 %v2613
    %3582 = vmatprep.subr.bf16.mxu0 %v2621
    %3583 = vmatpush1.bf16.msra.mxu0 %v2620
    %3584 = vmatprep.mubr.bf16.mxu0 %v678
    %3585 = vmatmul.mubr.bf16.gmra.mrb[0].mxu0 %v677
    %v3586 = vpop.f32.mrb[0].mxu0
    %v3587 = vadd.f32 %v3546, %v3586
    %v3588 = vpop.f32.mrb[0].mxu0
    %v3589 = vadd.f32 %v3548, %v3588
    %v3590 = vpop.f32.mrb[0].mxu0
    %v3591 = vpop.f32.mrb[0].mxu0
    %3592 = vdwg.mxu0
    %3593 = vmatprep.subr.bf16.mxu0 %v2628
    %3594 = vmatpush1.bf16.msra.mxu0 %v2627
    %3595 = vmatprep.subr.bf16.mxu0 %v2635
    %3596 = vmatpush1.bf16.msra.mxu0 %v2634
    %3597 = vmatprep.subr.bf16.mxu0 %v2642
    %3598 = vmatpush1.bf16.msra.mxu0 %v2641
    %3599 = vmatprep.subr.bf16.mxu0 %v2649
    %3600 = vmatpush1.bf16.msra.mxu0 %v2648
    %3601 = vmatprep.subr.bf16.mxu0 %v2656
    %3602 = vmatpush1.bf16.msra.mxu0 %v2655
    %3603 = vmatprep.subr.bf16.mxu0 %v2663
    %3604 = vmatpush1.bf16.msra.mxu0 %v2662
    %3605 = vmatprep.subr.bf16.mxu0 %v2670
    %3606 = vmatpush1.bf16.msra.mxu0 %v2669
    %3607 = vmatprep.subr.bf16.mxu0 %v2677
    %3608 = vmatpush1.bf16.msra.mxu0 %v2676
    %3609 = vmatprep.subr.bf16.mxu0 %v2684
    %3610 = vmatpush1.bf16.msra.mxu0 %v2683
    %3611 = vmatprep.subr.bf16.mxu0 %v2691
    %3612 = vmatpush1.bf16.msra.mxu0 %v2690
    %3613 = vmatprep.subr.bf16.mxu0 %v2698
    %3614 = vmatpush1.bf16.msra.mxu0 %v2697
    %3615 = vmatprep.subr.bf16.mxu0 %v2705
    %3616 = vmatpush1.bf16.msra.mxu0 %v2704
    %3617 = vmatprep.subr.bf16.mxu0 %v2712
    %3618 = vmatpush1.bf16.msra.mxu0 %v2711
    %3619 = vmatprep.subr.bf16.mxu0 %v2719
    %3620 = vmatpush1.bf16.msra.mxu0 %v2718
    %3621 = vmatprep.subr.bf16.mxu0 %v2726
    %3622 = vmatpush1.bf16.msra.mxu0 %v2725
    %3623 = vmatprep.subr.bf16.mxu0 %v2733
    %3624 = vmatpush1.bf16.msra.mxu0 %v2732
    %3625 = vmatprep.mubr.bf16.mxu0 %v680
    %3626 = vmatmul.mubr.bf16.gmra.mrb[0].mxu0 %v679
    %v3627 = vpop.f32.mrb[0].mxu0
    %v3628 = vadd.f32 %v3587, %v3627
    %v3629 = vpop.f32.mrb[0].mxu0
    %v3630 = vadd.f32 %v3589, %v3629
    %v3631 = vpop.f32.mrb[0].mxu0
    %v3632 = vpop.f32.mrb[0].mxu0
    %3633 = vdwg.mxu0
    %3634 = vmatprep.subr.bf16.mxu0 %v2740
    %3635 = vmatpush1.bf16.msra.mxu0 %v2739
    %3636 = vmatprep.subr.bf16.mxu0 %v2747
    %3637 = vmatpush1.bf16.msra.mxu0 %v2746
    %3638 = vmatprep.subr.bf16.mxu0 %v2754
    %3639 = vmatpush1.bf16.msra.mxu0 %v2753
    %3640 = vmatprep.subr.bf16.mxu0 %v2761
    %3641 = vmatpush1.bf16.msra.mxu0 %v2760
    %3642 = vmatprep.subr.bf16.mxu0 %v2768
    %3643 = vmatpush1.bf16.msra.mxu0 %v2767
    %3644 = vmatprep.subr.bf16.mxu0 %v2775
    %3645 = vmatpush1.bf16.msra.mxu0 %v2774
    %3646 = vmatprep.subr.bf16.mxu0 %v2782
    %3647 = vmatpush1.bf16.msra.mxu0 %v2781
    %3648 = vmatprep.subr.bf16.mxu0 %v2789
    %3649 = vmatpush1.bf16.msra.mxu0 %v2788
    %3650 = vmatprep.subr.bf16.mxu0 0
    %3651 = vmatpush1.bf16.msra.mxu0 0
    %3652 = vmatprep.subr.bf16.mxu0 0
    %3653 = vmatpush1.bf16.msra.mxu0 0
    %3654 = vmatprep.subr.bf16.mxu0 0
    %3655 = vmatpush1.bf16.msra.mxu0 0
    %3656 = vmatprep.subr.bf16.mxu0 0
    %3657 = vmatpush1.bf16.msra.mxu0 0
    %3658 = vmatprep.subr.bf16.mxu0 0
    %3659 = vmatpush1.bf16.msra.mxu0 0
    %3660 = vmatprep.subr.bf16.mxu0 0
    %3661 = vmatpush1.bf16.msra.mxu0 0
    %3662 = vmatprep.subr.bf16.mxu0 0
    %3663 = vmatpush1.bf16.msra.mxu0 0
    %3664 = vmatprep.subr.bf16.mxu0 0
    %3665 = vmatpush1.bf16.msra.mxu0 0
    %3666 = vmatprep.mubr.bf16.mxu0 0
    %3667 = vmatmul.mubr.bf16.gmra.mrb[0].mxu0 %v681
    %v3668 = vpop.f32.mrb[0].mxu0
    %v3669 = vadd.f32 %v3628, %v3668
    %v3670 = vpop.f32.mrb[0].mxu0
    %v3671 = vadd.f32 %v3630, %v3670
    %v3672 = vpop.f32.mrb[0].mxu0
    %v3673 = vpop.f32.mrb[0].mxu0
    %3674 = vdwg.mxu0
    %3675 = vmatprep.subr.bf16.mxu0 0
    %3676 = vmatpush1.bf16.msra.mxu0 %v2405
    %3677 = vmatprep.subr.bf16.mxu0 0
    %3678 = vmatpush1.bf16.msra.mxu0 %v2412
    %3679 = vmatprep.subr.bf16.mxu0 0
    %3680 = vmatpush1.bf16.msra.mxu0 %v2419
    %3681 = vmatprep.subr.bf16.mxu0 0
    %3682 = vmatpush1.bf16.msra.mxu0 %v2426
    %3683 = vmatprep.subr.bf16.mxu0 0
    %3684 = vmatpush1.bf16.msra.mxu0 %v2433
    %3685 = vmatprep.subr.bf16.mxu0 0
    %3686 = vmatpush1.bf16.msra.mxu0 %v2440
    %3687 = vmatprep.subr.bf16.mxu0 0
    %3688 = vmatpush1.bf16.msra.mxu0 %v2447
    %3689 = vmatprep.subr.bf16.mxu0 0
    %3690 = vmatpush1.bf16.msra.mxu0 %v2454
    %3691 = vmatprep.subr.bf16.mxu0 0
    %3692 = vmatpush1.bf16.msra.mxu0 %v2461
    %3693 = vmatprep.subr.bf16.mxu0 0
    %3694 = vmatpush1.bf16.msra.mxu0 %v2468
    %3695 = vmatprep.subr.bf16.mxu0 0
    %3696 = vmatpush1.bf16.msra.mxu0 %v2475
    %3697 = vmatprep.subr.bf16.mxu0 0
    %3698 = vmatpush1.bf16.msra.mxu0 %v2482
    %3699 = vmatprep.subr.bf16.mxu0 0
    %3700 = vmatpush1.bf16.msra.mxu0 %v2489
    %3701 = vmatprep.subr.bf16.mxu0 0
    %3702 = vmatpush1.bf16.msra.mxu0 %v2496
    %3703 = vmatprep.subr.bf16.mxu0 0
    %3704 = vmatpush1.bf16.msra.mxu0 %v2503
    %3705 = vmatprep.subr.bf16.mxu0 0
    %3706 = vmatpush1.bf16.msra.mxu0 %v2510
    %3707 = vmatprep.mubr.bf16.mxu0 %v676
    %3708 = vmatmul.mubr.bf16.gmra.mrb[0].mxu0 %v675
    %v3709 = vpop.f32.mrb[0].mxu0
    %v3710 = vadd.f32 %v1159, %v3709
    %v3711 = vpop.f32.mrb[0].mxu0
    %v3712 = vpop.f32.mrb[0].mxu0
    %v3713 = vpop.f32.mrb[0].mxu0
    %3714 = vdwg.mxu0
    %3715 = vmatprep.subr.bf16.mxu0 0
    %3716 = vmatpush1.bf16.msra.mxu0 %v2517
    %3717 = vmatprep.subr.bf16.mxu0 0
    %3718 = vmatpush1.bf16.msra.mxu0 %v2524
    %3719 = vmatprep.subr.bf16.mxu0 0
    %3720 = vmatpush1.bf16.msra.mxu0 %v2531
    %3721 = vmatprep.subr.bf16.mxu0 0
    %3722 = vmatpush1.bf16.msra.mxu0 %v2538
    %3723 = vmatprep.subr.bf16.mxu0 0
    %3724 = vmatpush1.bf16.msra.mxu0 %v2545
    %3725 = vmatprep.subr.bf16.mxu0 0
    %3726 = vmatpush1.bf16.msra.mxu0 %v2552
    %3727 = vmatprep.subr.bf16.mxu0 0
    %3728 = vmatpush1.bf16.msra.mxu0 %v2559
    %3729 = vmatprep.subr.bf16.mxu0 0
    %3730 = vmatpush1.bf16.msra.mxu0 %v2566
    %3731 = vmatprep.subr.bf16.mxu0 0
    %3732 = vmatpush1.bf16.msra.mxu0 %v2573
    %3733 = vmatprep.subr.bf16.mxu0 0
    %3734 = vmatpush1.bf16.msra.mxu0 %v2580
    %3735 = vmatprep.subr.bf16.mxu0 0
    %3736 = vmatpush1.bf16.msra.mxu0 %v2587
    %3737 = vmatprep.subr.bf16.mxu0 0
    %3738 = vmatpush1.bf16.msra.mxu0 %v2594
    %3739 = vmatprep.subr.bf16.mxu0 0
    %3740 = vmatpush1.bf16.msra.mxu0 %v2601
    %3741 = vmatprep.subr.bf16.mxu0 0
    %3742 = vmatpush1.bf16.msra.mxu0 %v2608
    %3743 = vmatprep.subr.bf16.mxu0 0
    %3744 = vmatpush1.bf16.msra.mxu0 %v2615
    %3745 = vmatprep.subr.bf16.mxu0 0
    %3746 = vmatpush1.bf16.msra.mxu0 %v2622
    %3747 = vmatprep.mubr.bf16.mxu0 %v678
    %3748 = vmatmul.mubr.bf16.gmra.mrb[0].mxu0 %v677
    %v3749 = vpop.f32.mrb[0].mxu0
    %v3750 = vadd.f32 %v3710, %v3749
    %v3751 = vpop.f32.mrb[0].mxu0
    %v3752 = vpop.f32.mrb[0].mxu0
    %v3753 = vpop.f32.mrb[0].mxu0
    %3754 = vdwg.mxu0
    %3755 = vmatprep.subr.bf16.mxu0 0
    %3756 = vmatpush1.bf16.msra.mxu0 %v2629
    %3757 = vmatprep.subr.bf16.mxu0 0
    %3758 = vmatpush1.bf16.msra.mxu0 %v2636
    %3759 = vmatprep.subr.bf16.mxu0 0
    %3760 = vmatpush1.bf16.msra.mxu0 %v2643
    %3761 = vmatprep.subr.bf16.mxu0 0
    %3762 = vmatpush1.bf16.msra.mxu0 %v2650
    %3763 = vmatprep.subr.bf16.mxu0 0
    %3764 = vmatpush1.bf16.msra.mxu0 %v2657
    %3765 = vmatprep.subr.bf16.mxu0 0
    %3766 = vmatpush1.bf16.msra.mxu0 %v2664
    %3767 = vmatprep.subr.bf16.mxu0 0
    %3768 = vmatpush1.bf16.msra.mxu0 %v2671
    %3769 = vmatprep.subr.bf16.mxu0 0
    %3770 = vmatpush1.bf16.msra.mxu0 %v2678
    %3771 = vmatprep.subr.bf16.mxu0 0
    %3772 = vmatpush1.bf16.msra.mxu0 %v2685
    %3773 = vmatprep.subr.bf16.mxu0 0
    %3774 = vmatpush1.bf16.msra.mxu0 %v2692
    %3775 = vmatprep.subr.bf16.mxu0 0
    %3776 = vmatpush1.bf16.msra.mxu0 %v2699
    %3777 = vmatprep.subr.bf16.mxu0 0
    %3778 = vmatpush1.bf16.msra.mxu0 %v2706
    %3779 = vmatprep.subr.bf16.mxu0 0
    %3780 = vmatpush1.bf16.msra.mxu0 %v2713
    %3781 = vmatprep.subr.bf16.mxu0 0
    %3782 = vmatpush1.bf16.msra.mxu0 %v2720
    %3783 = vmatprep.subr.bf16.mxu0 0
    %3784 = vmatpush1.bf16.msra.mxu0 %v2727
    %3785 = vmatprep.subr.bf16.mxu0 0
    %3786 = vmatpush1.bf16.msra.mxu0 %v2734
    %3787 = vmatprep.mubr.bf16.mxu0 %v680
    %3788 = vmatmul.mubr.bf16.gmra.mrb[0].mxu0 %v679
    %v3789 = vpop.f32.mrb[0].mxu0
    %v3790 = vadd.f32 %v3750, %v3789
    %v3791 = vpop.f32.mrb[0].mxu0
    %v3792 = vpop.f32.mrb[0].mxu0
    %v3793 = vpop.f32.mrb[0].mxu0
    %3794 = vdwg.mxu0
    %3795 = vmatprep.subr.bf16.mxu0 0
    %3796 = vmatpush1.bf16.msra.mxu0 %v2741
    %3797 = vmatprep.subr.bf16.mxu0 0
    %3798 = vmatpush1.bf16.msra.mxu0 %v2748
    %3799 = vmatprep.subr.bf16.mxu0 0
    %3800 = vmatpush1.bf16.msra.mxu0 %v2755
    %3801 = vmatprep.subr.bf16.mxu0 0
    %3802 = vmatpush1.bf16.msra.mxu0 %v2762
    %3803 = vmatprep.subr.bf16.mxu0 0
    %3804 = vmatpush1.bf16.msra.mxu0 %v2769
    %3805 = vmatprep.subr.bf16.mxu0 0
    %3806 = vmatpush1.bf16.msra.mxu0 %v2776
    %3807 = vmatprep.subr.bf16.mxu0 0
    %3808 = vmatpush1.bf16.msra.mxu0 %v2783
    %3809 = vmatprep.subr.bf16.mxu0 0
    %3810 = vmatpush1.bf16.msra.mxu0 %v2790
    %3811 = vmatprep.subr.bf16.mxu0 0
    %3812 = vmatpush1.bf16.msra.mxu0 0
    %3813 = vmatprep.subr.bf16.mxu0 0
    %3814 = vmatpush1.bf16.msra.mxu0 0
    %3815 = vmatprep.subr.bf16.mxu0 0
    %3816 = vmatpush1.bf16.msra.mxu0 0
    %3817 = vmatprep.subr.bf16.mxu0 0
    %3818 = vmatpush1.bf16.msra.mxu0 0
    %3819 = vmatprep.subr.bf16.mxu0 0
    %3820 = vmatpush1.bf16.msra.mxu0 0
    %3821 = vmatprep.subr.bf16.mxu0 0
    %3822 = vmatpush1.bf16.msra.mxu0 0
    %3823 = vmatprep.subr.bf16.mxu0 0
    %3824 = vmatpush1.bf16.msra.mxu0 0
    %3825 = vmatprep.subr.bf16.mxu0 0
    %3826 = vmatpush1.bf16.msra.mxu0 0
    %3827 = vmatprep.mubr.bf16.mxu0 0
    %3828 = vmatmul.mubr.bf16.gmra.mrb[0].mxu0 %v681
    %v3829 = vpop.f32.mrb[0].mxu0
    %v3830 = vadd.f32 %v3790, %v3829
    %v3831 = vpop.f32.mrb[0].mxu0
    %v3832 = vpop.f32.mrb[0].mxu0
    %v3833 = vpop.f32.mrb[0].mxu0
    %3834 = vdwg.mxu0
    %v3835 = vmax.f32 %v3341, 0.0
    %v3836 = vmax.f32 %v3343, 0.0
    %v3837 = vmax.f32 %v3505, 0.0
    %v3838 = vmax.f32 %v3507, 0.0
    %v3839 = vmax.f32 %v3669, 0.0
    %v3840 = vmax.f32 %v3671, 0.0
    %v3841 = vmax.f32 %v3830, 0.0
    %v3842 = vpack.c.bf16 %v3835, %v3835
    %v3843 = vpack.c.bf16 %v3836, %v3836
    %v3844 = vpack.c.bf16 %v3837, %v3837
    %v3845 = vpack.c.bf16 %v3838, %v3838
    %v3846 = vpack.c.bf16 %v3839, %v3839
    %v3847 = vpack.c.bf16 %v3840, %v3840
    %v3848 = vpack.c.bf16 %v3841, %v3841
    %v3849 = vld [vmem:[#allocation11] sm:$0xf]
    %v3850 = vld [vmem:[#allocation11 + $0x4] sm:$0xf]
    %v3851 = vld [vmem:[#allocation11 + $0x8] sm:$0xf]
    %v3852 = vld [vmem:[#allocation11 + $0xc] sm:$0xf]
    %v3853 = vld [vmem:[#allocation11 + $0x10] sm:$0xf]
    %v3854 = vld [vmem:[#allocation11 + $0x14] sm:$0xf]
    %v3855 = vld [vmem:[#allocation11 + $0x18] sm:$0xf]
    %v3856 = vld [vmem:[#allocation11 + $0x1c] sm:$0xf]
    %v3857 = vld [vmem:[#allocation11 + $0x20] sm:$0xf]
    %v3858 = vld [vmem:[#allocation11 + $0x24] sm:$0xf]
    %v3859 = vld [vmem:[#allocation11 + $0x28] sm:$0xf]
    %v3860 = vld [vmem:[#allocation11 + $0x2c] sm:$0xf]
    %v3861 = vld [vmem:[#allocation11 + $0x30] sm:$0xf]
    %v3862 = vld [vmem:[#allocation11 + $0x34] sm:$0xf]
    %v3863 = vld [vmem:[#allocation11 + $0x38] sm:$0xf]
    %v3864 = vld [vmem:[#allocation11 + $0x3c] sm:$0xf]
    %v3865 = vld [vmem:[#allocation11 + $0x40] sm:$0xf]
    %v3866 = vld [vmem:[#allocation11 + $0x44] sm:$0xf]
    %v3867 = vld [vmem:[#allocation11 + $0x48] sm:$0xf]
    %v3868 = vld [vmem:[#allocation11 + $0x4c] sm:$0xf]
    %v3869 = vld [vmem:[#allocation11 + $0x50] sm:$0xf]
    %v3870 = vld [vmem:[#allocation11 + $0x54] sm:$0xf]
    %v3871 = vld [vmem:[#allocation11 + $0x58] sm:$0xf]
    %v3872 = vld [vmem:[#allocation11 + $0x5c] sm:$0xf]
    %v3873 = vld [vmem:[#allocation11 + $0x60] sm:$0xf]
    %v3874 = vld [vmem:[#allocation11 + $0x64] sm:$0xf]
    %v3875 = vld [vmem:[#allocation11 + $0x68] sm:$0xf]
    %v3876 = vld [vmem:[#allocation11 + $0x6c] sm:$0xf]
    %v3877 = vld [vmem:[#allocation11 + $0x70] sm:$0xf]
    %v3878 = vld [vmem:[#allocation11 + $0x74] sm:$0xf]
    %v3879 = vld [vmem:[#allocation11 + $0x78] sm:$0xf]
    %v3880 = vld [vmem:[#allocation11 + $0x7c] sm:$0xf]
    %v3881 = vld [vmem:[#allocation11 + $0x80] sm:$0xf]
    %v3882 = vld [vmem:[#allocation11 + $0x84] sm:$0xf]
    %v3883 = vld [vmem:[#allocation11 + $0x88] sm:$0xf]
    %v3884 = vld [vmem:[#allocation11 + $0x8c] sm:$0xf]
    %v3885 = vld [vmem:[#allocation11 + $0x90] sm:$0xf]
    %v3886 = vld [vmem:[#allocation11 + $0x94] sm:$0xf]
    %v3887 = vld [vmem:[#allocation11 + $0x98] sm:$0xf]
    %v3888 = vld [vmem:[#allocation11 + $0x9c] sm:$0xf]
    %v3889 = vld [vmem:[#allocation11 + $0xa0] sm:$0xf]
    %v3890 = vld [vmem:[#allocation11 + $0xa4] sm:$0xf]
    %v3891 = vld [vmem:[#allocation11 + $0xa8] sm:$0xf]
    %v3892 = vld [vmem:[#allocation11 + $0xac] sm:$0xf]
    %v3893 = vld [vmem:[#allocation11 + $0xb0] sm:$0xf]
    %v3894 = vld [vmem:[#allocation11 + $0xb4] sm:$0xf]
    %v3895 = vld [vmem:[#allocation11 + $0xb8] sm:$0xf]
    %v3896 = vld [vmem:[#allocation11 + $0xbc] sm:$0xf]
    %v3897 = vld [vmem:[#allocation11 + $0xc0] sm:$0xf]
    %v3898 = vld [vmem:[#allocation11 + $0xc4] sm:$0xf]
    %v3899 = vld [vmem:[#allocation11 + $0xc8] sm:$0xf]
    %v3900 = vld [vmem:[#allocation11 + $0xcc] sm:$0xf]
    %v3901 = vld [vmem:[#allocation11 + $0xd0] sm:$0xf]
    %v3902 = vld [vmem:[#allocation11 + $0xd4] sm:$0xf]
    %v3903 = vld [vmem:[#allocation11 + $0xd8] sm:$0xf]
    %v3904 = vld [vmem:[#allocation11 + $0xdc] sm:$0xf]
    %v3905 = vld [vmem:[#allocation11 + $0xe0] sm:$0xf]
    %v3906 = vld [vmem:[#allocation11 + $0xe4] sm:$0xf]
    %v3907 = vld [vmem:[#allocation11 + $0xe8] sm:$0xf]
    %v3908 = vld [vmem:[#allocation11 + $0xec] sm:$0xf]
    %v3909 = vld [vmem:[#allocation11 + $0xf0] sm:$0xf]
    %v3910 = vld [vmem:[#allocation11 + $0xf4] sm:$0xf]
    %v3911 = vld [vmem:[#allocation11 + $0xf8] sm:$0xf]
    %v3912 = vld [vmem:[#allocation11 + $0xfc] sm:$0xf]
    %v3913 = vld [vmem:[#allocation11 + $0x100] sm:$0xf]
    %v3914 = vld [vmem:[#allocation11 + $0x104] sm:$0xf]
    %v3915 = vld [vmem:[#allocation11 + $0x108] sm:$0xf]
    %v3916 = vld [vmem:[#allocation11 + $0x10c] sm:$0xf]
    %v3917 = vld [vmem:[#allocation11 + $0x110] sm:$0xf]
    %v3918 = vld [vmem:[#allocation11 + $0x114] sm:$0xf]
    %v3919 = vld [vmem:[#allocation11 + $0x118] sm:$0xf]
    %v3920 = vld [vmem:[#allocation11 + $0x11c] sm:$0xf]
    %v3921 = vld [vmem:[#allocation11 + $0x120] sm:$0xf]
    %v3922 = vld [vmem:[#allocation11 + $0x124] sm:$0xf]
    %v3923 = vld [vmem:[#allocation11 + $0x128] sm:$0xf]
    %v3924 = vld [vmem:[#allocation11 + $0x12c] sm:$0xf]
    %v3925 = vld [vmem:[#allocation11 + $0x130] sm:$0xf]
    %v3926 = vld [vmem:[#allocation11 + $0x134] sm:$0xf]
    %v3927 = vld [vmem:[#allocation11 + $0x138] sm:$0xf]
    %v3928 = vld [vmem:[#allocation11 + $0x13c] sm:$0xf]
    %v3929 = vld [vmem:[#allocation11 + $0x140] sm:$0xf]
    %v3930 = vld [vmem:[#allocation11 + $0x144] sm:$0xf]
    %v3931 = vld [vmem:[#allocation11 + $0x148] sm:$0xf]
    %v3932 = vld [vmem:[#allocation11 + $0x14c] sm:$0xf]
    %v3933 = vld [vmem:[#allocation11 + $0x150] sm:$0xf]
    %v3934 = vld [vmem:[#allocation11 + $0x154] sm:$0xf]
    %v3935 = vld [vmem:[#allocation11 + $0x158] sm:$0xf]
    %v3936 = vld [vmem:[#allocation11 + $0x15c] sm:$0xf]
    %v3937 = vld [vmem:[#allocation11 + $0x160] sm:$0xf]
    %v3938 = vld [vmem:[#allocation11 + $0x164] sm:$0xf]
    %v3939 = vld [vmem:[#allocation11 + $0x168] sm:$0xf]
    %v3940 = vld [vmem:[#allocation11 + $0x16c] sm:$0xf]
    %v3941 = vld [vmem:[#allocation11 + $0x170] sm:$0xf]
    %v3942 = vld [vmem:[#allocation11 + $0x174] sm:$0xf]
    %v3943 = vld [vmem:[#allocation11 + $0x178] sm:$0xf]
    %v3944 = vld [vmem:[#allocation11 + $0x17c] sm:$0xf]
    %v3945 = vld [vmem:[#allocation11 + $0x180] sm:$0xf]
    %v3946 = vld [vmem:[#allocation11 + $0x184] sm:$0xf]
    %v3947 = vld [vmem:[#allocation11 + $0x188] sm:$0xf]
    %v3948 = vld [vmem:[#allocation11 + $0x18c] sm:$0xf]
    %v3949 = vld [vmem:[#allocation11 + $0x190] sm:$0xf]
    %v3950 = vld [vmem:[#allocation11 + $0x194] sm:$0xf]
    %v3951 = vld [vmem:[#allocation11 + $0x198] sm:$0xf]
    %v3952 = vld [vmem:[#allocation11 + $0x19c] sm:$0xf]
    %v3953 = vld [vmem:[#allocation11 + $0x1a0] sm:$0xf]
    %v3954 = vld [vmem:[#allocation11 + $0x1a4] sm:$0xf]
    %v3955 = vld [vmem:[#allocation11 + $0x1a8] sm:$0xf]
    %v3956 = vld [vmem:[#allocation11 + $0x1ac] sm:$0xf]
    %v3957 = vld [vmem:[#allocation11 + $0x1b0] sm:$0xf]
    %v3958 = vld [vmem:[#allocation11 + $0x1b4] sm:$0xf]
    %v3959 = vld [vmem:[#allocation11 + $0x1b8] sm:$0xf]
    %v3960 = vld [vmem:[#allocation11 + $0x1bc] sm:$0xf]
    %v3961 = vld [vmem:[#allocation13] sm:$0x1]
    %v3963 = vlaneseq
    %v3964 = vshrl.u32 %v3963, 7
    %v3965 = vsub.s32 0, %v3964
    %v3966 = vrot.slane %v3961, %v3965
    %v4080 = vunpack.c.l.b16 %v3849
    %v4081 = vunpack.c.l.b16 %v3850
    %v4082 = vunpack.c.l.b16 %v3851
    %v4083 = vunpack.c.l.b16 %v3852
    %v4084 = vunpack.c.l.b16 %v3853
    %v4085 = vunpack.c.l.b16 %v3854
    %v4086 = vunpack.c.l.b16 %v3855
    %v4087 = vunpack.c.l.b16 %v3856
    %v4088 = vunpack.c.l.b16 %v3857
    %v4089 = vunpack.c.l.b16 %v3858
    %v4090 = vunpack.c.l.b16 %v3859
    %v4091 = vunpack.c.l.b16 %v3860
    %v4092 = vunpack.c.l.b16 %v3861
    %v4093 = vunpack.c.l.b16 %v3862
    %v4094 = vunpack.c.l.b16 %v3863
    %v4095 = vunpack.c.l.b16 %v3864
    %v4096 = vunpack.c.l.b16 %v3865
    %v4097 = vunpack.c.l.b16 %v3866
    %v4098 = vunpack.c.l.b16 %v3867
    %v4099 = vunpack.c.l.b16 %v3868
    %v4100 = vunpack.c.l.b16 %v3869
    %v4101 = vunpack.c.l.b16 %v3870
    %v4102 = vunpack.c.l.b16 %v3871
    %v4103 = vunpack.c.l.b16 %v3872
    %v4104 = vunpack.c.l.b16 %v3873
    %v4105 = vunpack.c.l.b16 %v3874
    %v4106 = vunpack.c.l.b16 %v3875
    %v4107 = vunpack.c.l.b16 %v3876
    %v4108 = vunpack.c.l.b16 %v3877
    %v4109 = vunpack.c.l.b16 %v3878
    %v4110 = vunpack.c.l.b16 %v3879
    %v4111 = vunpack.c.l.b16 %v3880
    %v4112 = vunpack.c.l.b16 %v3881
    %v4113 = vunpack.c.l.b16 %v3882
    %v4114 = vunpack.c.l.b16 %v3883
    %v4115 = vunpack.c.l.b16 %v3884
    %v4116 = vunpack.c.l.b16 %v3885
    %v4117 = vunpack.c.l.b16 %v3886
    %v4118 = vunpack.c.l.b16 %v3887
    %v4119 = vunpack.c.l.b16 %v3888
    %v4120 = vunpack.c.l.b16 %v3889
    %v4121 = vunpack.c.l.b16 %v3890
    %v4122 = vunpack.c.l.b16 %v3891
    %v4123 = vunpack.c.l.b16 %v3892
    %v4124 = vunpack.c.l.b16 %v3893
    %v4125 = vunpack.c.l.b16 %v3894
    %v4126 = vunpack.c.l.b16 %v3895
    %v4127 = vunpack.c.l.b16 %v3896
    %v4128 = vunpack.c.l.b16 %v3897
    %v4129 = vunpack.c.l.b16 %v3898
    %v4130 = vunpack.c.l.b16 %v3899
    %v4131 = vunpack.c.l.b16 %v3900
    %v4132 = vunpack.c.l.b16 %v3901
    %v4133 = vunpack.c.l.b16 %v3902
    %v4134 = vunpack.c.l.b16 %v3903
    %v4135 = vunpack.c.l.b16 %v3904
    %v4136 = vunpack.c.l.b16 %v3905
    %v4137 = vunpack.c.l.b16 %v3906
    %v4138 = vunpack.c.l.b16 %v3907
    %v4139 = vunpack.c.l.b16 %v3908
    %v4140 = vunpack.c.l.b16 %v3909
    %v4141 = vunpack.c.l.b16 %v3910
    %v4142 = vunpack.c.l.b16 %v3911
    %v4143 = vunpack.c.l.b16 %v3912
    %v4144 = vunpack.c.l.b16 %v3913
    %v4145 = vunpack.c.l.b16 %v3914
    %v4146 = vunpack.c.l.b16 %v3915
    %v4147 = vunpack.c.l.b16 %v3916
    %v4148 = vunpack.c.l.b16 %v3917
    %v4149 = vunpack.c.l.b16 %v3918
    %v4150 = vunpack.c.l.b16 %v3919
    %v4151 = vunpack.c.l.b16 %v3920
    %v4152 = vunpack.c.l.b16 %v3921
    %v4153 = vunpack.c.l.b16 %v3922
    %v4154 = vunpack.c.l.b16 %v3923
    %v4155 = vunpack.c.l.b16 %v3924
    %v4156 = vunpack.c.l.b16 %v3925
    %v4157 = vunpack.c.l.b16 %v3926
    %v4158 = vunpack.c.l.b16 %v3927
    %v4159 = vunpack.c.l.b16 %v3928
    %v4160 = vunpack.c.l.b16 %v3929
    %v4161 = vunpack.c.l.b16 %v3930
    %v4162 = vunpack.c.l.b16 %v3931
    %v4163 = vunpack.c.l.b16 %v3932
    %v4164 = vunpack.c.l.b16 %v3933
    %v4165 = vunpack.c.l.b16 %v3934
    %v4166 = vunpack.c.l.b16 %v3935
    %v4167 = vunpack.c.l.b16 %v3936
    %v4168 = vunpack.c.l.b16 %v3937
    %v4169 = vunpack.c.l.b16 %v3938
    %v4170 = vunpack.c.l.b16 %v3939
    %v4171 = vunpack.c.l.b16 %v3940
    %v4172 = vunpack.c.l.b16 %v3941
    %v4173 = vunpack.c.l.b16 %v3942
    %v4174 = vunpack.c.l.b16 %v3943
    %v4175 = vunpack.c.l.b16 %v3944
    %v4176 = vunpack.c.l.b16 %v3945
    %v4177 = vunpack.c.l.b16 %v3946
    %v4178 = vunpack.c.l.b16 %v3947
    %v4179 = vunpack.c.l.b16 %v3948
    %v4180 = vunpack.c.l.b16 %v3949
    %v4181 = vunpack.c.l.b16 %v3950
    %v4182 = vunpack.c.l.b16 %v3951
    %v4183 = vunpack.c.l.b16 %v3952
    %v4184 = vunpack.c.l.b16 %v3953
    %v4185 = vunpack.c.l.b16 %v3954
    %v4186 = vunpack.c.l.b16 %v3955
    %v4187 = vunpack.c.l.b16 %v3956
    %v4188 = vunpack.c.l.b16 %v3957
    %v4189 = vunpack.c.l.b16 %v3958
    %v4190 = vunpack.c.l.b16 %v3959
    %v4191 = vunpack.c.l.b16 %v3960
    %v4192 = vpack.c.b16 %v4081, %v4080
    %v4193 = vpack.c.b16 %v4083, %v4082
    %v4194 = vpack.c.b16 %v4085, %v4084
    %v4195 = vpack.c.b16 %v4087, %v4086
    %v4196 = vpack.c.b16 %v4089, %v4088
    %v4197 = vpack.c.b16 %v4091, %v4090
    %v4198 = vpack.c.b16 %v4093, %v4092
    %v4199 = vpack.c.b16 %v4095, %v4094
    %v4200 = vpack.c.b16 %v4097, %v4096
    %v4201 = vpack.c.b16 %v4099, %v4098
    %v4202 = vpack.c.b16 %v4101, %v4100
    %v4203 = vpack.c.b16 %v4103, %v4102
    %v4204 = vpack.c.b16 %v4105, %v4104
    %v4205 = vpack.c.b16 %v4107, %v4106
    %v4206 = vpack.c.b16 %v4109, %v4108
    %v4207 = vpack.c.b16 %v4111, %v4110
    %v4208 = vpack.c.b16 %v4113, %v4112
    %v4209 = vpack.c.b16 %v4115, %v4114
    %v4210 = vpack.c.b16 %v4117, %v4116
    %v4211 = vpack.c.b16 %v4119, %v4118
    %v4212 = vpack.c.b16 %v4121, %v4120
    %v4213 = vpack.c.b16 %v4123, %v4122
    %v4214 = vpack.c.b16 %v4125, %v4124
    %v4215 = vpack.c.b16 %v4127, %v4126
    %v4216 = vpack.c.b16 %v4129, %v4128
    %v4217 = vpack.c.b16 %v4131, %v4130
    %v4218 = vpack.c.b16 %v4133, %v4132
    %v4219 = vpack.c.b16 %v4135, %v4134
    %v4220 = vpack.c.b16 %v4137, %v4136
    %v4221 = vpack.c.b16 %v4139, %v4138
    %v4222 = vpack.c.b16 %v4141, %v4140
    %v4223 = vpack.c.b16 %v4143, %v4142
    %v4224 = vpack.c.b16 %v4145, %v4144
    %v4225 = vpack.c.b16 %v4147, %v4146
    %v4226 = vpack.c.b16 %v4149, %v4148
    %v4227 = vpack.c.b16 %v4151, %v4150
    %v4228 = vpack.c.b16 %v4153, %v4152
    %v4229 = vpack.c.b16 %v4155, %v4154
    %v4230 = vpack.c.b16 %v4157, %v4156
    %v4231 = vpack.c.b16 %v4159, %v4158
    %v4232 = vpack.c.b16 %v4161, %v4160
    %v4233 = vpack.c.b16 %v4163, %v4162
    %v4234 = vpack.c.b16 %v4165, %v4164
    %v4235 = vpack.c.b16 %v4167, %v4166
    %v4236 = vpack.c.b16 %v4169, %v4168
    %v4237 = vpack.c.b16 %v4171, %v4170
    %v4238 = vpack.c.b16 %v4173, %v4172
    %v4239 = vpack.c.b16 %v4175, %v4174
    %v4240 = vpack.c.b16 %v4177, %v4176
    %v4241 = vpack.c.b16 %v4179, %v4178
    %v4242 = vpack.c.b16 %v4181, %v4180
    %v4243 = vpack.c.b16 %v4183, %v4182
    %v4244 = vpack.c.b16 %v4185, %v4184
    %v4245 = vpack.c.b16 %v4187, %v4186
    %v4246 = vpack.c.b16 %v4189, %v4188
    %v4247 = vpack.c.b16 %v4191, %v4190
    %4304 = vmatprep.subr.bf16.mxu0 0
    %4305 = vmatpush1.bf16.msra.mxu0 %v4192
    %4306 = vmatprep.subr.bf16.mxu0 0
    %4307 = vmatpush1.bf16.msra.mxu0 %v4193
    %4308 = vmatprep.subr.bf16.mxu0 0
    %4309 = vmatpush1.bf16.msra.mxu0 %v4194
    %4310 = vmatprep.subr.bf16.mxu0 0
    %4311 = vmatpush1.bf16.msra.mxu0 %v4195
    %4312 = vmatprep.subr.bf16.mxu0 0
    %4313 = vmatpush1.bf16.msra.mxu0 %v4196
    %4314 = vmatprep.subr.bf16.mxu0 0
    %4315 = vmatpush1.bf16.msra.mxu0 %v4197
    %4316 = vmatprep.subr.bf16.mxu0 0
    %4317 = vmatpush1.bf16.msra.mxu0 %v4198
    %4318 = vmatprep.subr.bf16.mxu0 0
    %4319 = vmatpush1.bf16.msra.mxu0 %v4199
    %4320 = vmatprep.subr.bf16.mxu0 0
    %4321 = vmatpush1.bf16.msra.mxu0 %v4200
    %4322 = vmatprep.subr.bf16.mxu0 0
    %4323 = vmatpush1.bf16.msra.mxu0 %v4201
    %4324 = vmatprep.subr.bf16.mxu0 0
    %4325 = vmatpush1.bf16.msra.mxu0 %v4202
    %4326 = vmatprep.subr.bf16.mxu0 0
    %4327 = vmatpush1.bf16.msra.mxu0 %v4203
    %4328 = vmatprep.subr.bf16.mxu0 0
    %4329 = vmatpush1.bf16.msra.mxu0 %v4204
    %4330 = vmatprep.subr.bf16.mxu0 0
    %4331 = vmatpush1.bf16.msra.mxu0 %v4205
    %4332 = vmatprep.subr.bf16.mxu0 0
    %4333 = vmatpush1.bf16.msra.mxu0 %v4206
    %4334 = vmatprep.subr.bf16.mxu0 0
    %4335 = vmatpush1.bf16.msra.mxu0 %v4207
    %4336 = vmatprep.mubr.bf16.mxu0 %v3843
    %4337 = vmatmul.mubr.bf16.gmra.mrb[0].mxu0 %v3842
    %v4338 = vpop.f32.mrb[0].mxu0
    %v4339 = vadd.f32 %v3966, %v4338
    %v4340 = vpop.f32.mrb[0].mxu0
    %v4341 = vpop.f32.mrb[0].mxu0
    %v4342 = vpop.f32.mrb[0].mxu0
    %4343 = vdwg.mxu0
    %4344 = vmatprep.subr.bf16.mxu0 0
    %4345 = vmatpush1.bf16.msra.mxu0 %v4208
    %4346 = vmatprep.subr.bf16.mxu0 0
    %4347 = vmatpush1.bf16.msra.mxu0 %v4209
    %4348 = vmatprep.subr.bf16.mxu0 0
    %4349 = vmatpush1.bf16.msra.mxu0 %v4210
    %4350 = vmatprep.subr.bf16.mxu0 0
    %4351 = vmatpush1.bf16.msra.mxu0 %v4211
    %4352 = vmatprep.subr.bf16.mxu0 0
    %4353 = vmatpush1.bf16.msra.mxu0 %v4212
    %4354 = vmatprep.subr.bf16.mxu0 0
    %4355 = vmatpush1.bf16.msra.mxu0 %v4213
    %4356 = vmatprep.subr.bf16.mxu0 0
    %4357 = vmatpush1.bf16.msra.mxu0 %v4214
    %4358 = vmatprep.subr.bf16.mxu0 0
    %4359 = vmatpush1.bf16.msra.mxu0 %v4215
    %4360 = vmatprep.subr.bf16.mxu0 0
    %4361 = vmatpush1.bf16.msra.mxu0 %v4216
    %4362 = vmatprep.subr.bf16.mxu0 0
    %4363 = vmatpush1.bf16.msra.mxu0 %v4217
    %4364 = vmatprep.subr.bf16.mxu0 0
    %4365 = vmatpush1.bf16.msra.mxu0 %v4218
    %4366 = vmatprep.subr.bf16.mxu0 0
    %4367 = vmatpush1.bf16.msra.mxu0 %v4219
    %4368 = vmatprep.subr.bf16.mxu0 0
    %4369 = vmatpush1.bf16.msra.mxu0 %v4220
    %4370 = vmatprep.subr.bf16.mxu0 0
    %4371 = vmatpush1.bf16.msra.mxu0 %v4221
    %4372 = vmatprep.subr.bf16.mxu0 0
    %4373 = vmatpush1.bf16.msra.mxu0 %v4222
    %4374 = vmatprep.subr.bf16.mxu0 0
    %4375 = vmatpush1.bf16.msra.mxu0 %v4223
    %4376 = vmatprep.mubr.bf16.mxu0 %v3845
    %4377 = vmatmul.mubr.bf16.gmra.mrb[0].mxu0 %v3844
    %v4378 = vpop.f32.mrb[0].mxu0
    %v4379 = vadd.f32 %v4339, %v4378
    %v4380 = vpop.f32.mrb[0].mxu0
    %v4381 = vpop.f32.mrb[0].mxu0
    %v4382 = vpop.f32.mrb[0].mxu0
    %4383 = vdwg.mxu0
    %4384 = vmatprep.subr.bf16.mxu0 0
    %4385 = vmatpush1.bf16.msra.mxu0 %v4224
    %4386 = vmatprep.subr.bf16.mxu0 0
    %4387 = vmatpush1.bf16.msra.mxu0 %v4225
    %4388 = vmatprep.subr.bf16.mxu0 0
    %4389 = vmatpush1.bf16.msra.mxu0 %v4226
    %4390 = vmatprep.subr.bf16.mxu0 0
    %4391 = vmatpush1.bf16.msra.mxu0 %v4227
    %4392 = vmatprep.subr.bf16.mxu0 0
    %4393 = vmatpush1.bf16.msra.mxu0 %v4228
    %4394 = vmatprep.subr.bf16.mxu0 0
    %4395 = vmatpush1.bf16.msra.mxu0 %v4229
    %4396 = vmatprep.subr.bf16.mxu0 0
    %4397 = vmatpush1.bf16.msra.mxu0 %v4230
    %4398 = vmatprep.subr.bf16.mxu0 0
    %4399 = vmatpush1.bf16.msra.mxu0 %v4231
    %4400 = vmatprep.subr.bf16.mxu0 0
    %4401 = vmatpush1.bf16.msra.mxu0 %v4232
    %4402 = vmatprep.subr.bf16.mxu0 0
    %4403 = vmatpush1.bf16.msra.mxu0 %v4233
    %4404 = vmatprep.subr.bf16.mxu0 0
    %4405 = vmatpush1.bf16.msra.mxu0 %v4234
    %4406 = vmatprep.subr.bf16.mxu0 0
    %4407 = vmatpush1.bf16.msra.mxu0 %v4235
    %4408 = vmatprep.subr.bf16.mxu0 0
    %4409 = vmatpush1.bf16.msra.mxu0 %v4236
    %4410 = vmatprep.subr.bf16.mxu0 0
    %4411 = vmatpush1.bf16.msra.mxu0 %v4237
    %4412 = vmatprep.subr.bf16.mxu0 0
    %4413 = vmatpush1.bf16.msra.mxu0 %v4238
    %4414 = vmatprep.subr.bf16.mxu0 0
    %4415 = vmatpush1.bf16.msra.mxu0 %v4239
    %4416 = vmatprep.mubr.bf16.mxu0 %v3847
    %4417 = vmatmul.mubr.bf16.gmra.mrb[0].mxu0 %v3846
    %v4418 = vpop.f32.mrb[0].mxu0
    %v4419 = vadd.f32 %v4379, %v4418
    %v4420 = vpop.f32.mrb[0].mxu0
    %v4421 = vpop.f32.mrb[0].mxu0
    %v4422 = vpop.f32.mrb[0].mxu0
    %4423 = vdwg.mxu0
    %4424 = vmatprep.subr.bf16.mxu0 0
    %4425 = vmatpush1.bf16.msra.mxu0 %v4240
    %4426 = vmatprep.subr.bf16.mxu0 0
    %4427 = vmatpush1.bf16.msra.mxu0 %v4241
    %4428 = vmatprep.subr.bf16.mxu0 0
    %4429 = vmatpush1.bf16.msra.mxu0 %v4242
    %4430 = vmatprep.subr.bf16.mxu0 0
    %4431 = vmatpush1.bf16.msra.mxu0 %v4243
    %4432 = vmatprep.subr.bf16.mxu0 0
    %4433 = vmatpush1.bf16.msra.mxu0 %v4244
    %4434 = vmatprep.subr.bf16.mxu0 0
    %4435 = vmatpush1.bf16.msra.mxu0 %v4245
    %4436 = vmatprep.subr.bf16.mxu0 0
    %4437 = vmatpush1.bf16.msra.mxu0 %v4246
    %4438 = vmatprep.subr.bf16.mxu0 0
    %4439 = vmatpush1.bf16.msra.mxu0 %v4247
    %4440 = vmatprep.subr.bf16.mxu0 0
    %4441 = vmatpush1.bf16.msra.mxu0 0
    %4442 = vmatprep.subr.bf16.mxu0 0
    %4443 = vmatpush1.bf16.msra.mxu0 0
    %4444 = vmatprep.subr.bf16.mxu0 0
    %4445 = vmatpush1.bf16.msra.mxu0 0
    %4446 = vmatprep.subr.bf16.mxu0 0
    %4447 = vmatpush1.bf16.msra.mxu0 0
    %4448 = vmatprep.subr.bf16.mxu0 0
    %4449 = vmatpush1.bf16.msra.mxu0 0
    %4450 = vmatprep.subr.bf16.mxu0 0
    %4451 = vmatpush1.bf16.msra.mxu0 0
    %4452 = vmatprep.subr.bf16.mxu0 0
    %4453 = vmatpush1.bf16.msra.mxu0 0
    %4454 = vmatprep.subr.bf16.mxu0 0
    %4455 = vmatpush1.bf16.msra.mxu0 0
    %4456 = vmatprep.mubr.bf16.mxu0 0
    %4457 = vmatmul.mubr.bf16.gmra.mrb[0].mxu0 %v3848
    %v4458 = vpop.f32.mrb[0].mxu0
    %v4459 = vadd.f32 %v4419, %v4458
    %v4460 = vpop.f32.mrb[0].mxu0
    %v4461 = vpop.f32.mrb[0].mxu0
    %v4462 = vpop.f32.mrb[0].mxu0
    %4463 = vdwg.mxu0
    %4464 = vst [vmem:[#allocation14] sm:$0xff] %v4459
    // Predicated region
    $region58: #{tpu_custom_call.1} parent=1 // pred_check
      _
    $region59: #{tpu_custom_call.1} parent=1 // pred_check_branch
      %4466 = sbr.rel (0) target = $region61
    $region60: #{tpu_custom_call.1} parent=1 // pred_region
      %s4468 = ssub.s32 128, 128
      %4469 = vsyncadd [#allocation4], %s4468
      %s4471 = sshll.u32 [#allocation14], 4
      %s4472 = int_to_ptr.vmem [resolvable:$true] %s4471
      %4474 = dma.vmem_to_hbm [thread:$0]  %s4472, 128, %s7, [#allocation4]
    $region61: #{tpu_custom_call.1} parent=1 // pred_fallthru
      _
    // Predicated region
    $region62: #{tpu_custom_call.1} parent=1 // pred_check
      _
    $region63: #{tpu_custom_call.1} parent=1 // pred_check_branch
      %4476 = sbr.rel (0) target = $region65
    $region64: #{tpu_custom_call.1} parent=1 // pred_region
      %4477 = dma.done [#allocation4], 128
    $region65: #{tpu_custom_call.1} parent=1 // pred_fallthru
      _
    %4478 = vsyncpa [#allocation3], 1
    %4479 = vsyncpa [#allocation6], 1
    %4480 = vsyncpa [#allocation9], 1
    %4481 = vsyncpa [#allocation12], 1
    %4482 = vsyncpa [#allocation4], 1

</llo_original>
